<compile_context>
chip_gen: v7x
topology: tpu7x:2x2x1
jax: 0.10.0
libtpu: 0.0.40
codegen_flags: <defaults>
</compile_context>

<pallas_src>
import jax
import jax.numpy as jnp
import numpy as np
from jax.experimental import pallas as pl
from jax.experimental.pallas import tpu as pltpu

BN_EPS = 1e-3


# ------------------------------------------------------------------- kernel

def _fused_mixed7c_head_kernel(
    x_ref,                             # (Nb, H, W, Cin)
    w_stem, b_stem,                    # merged 1x1 stems:   (Cin, Cstem), (1, Cstem)
    w_mid, b_mid,                      # merged 3x3 stage:   (9*Cbig, Cmid), (1, Cmid)
    w_dbl, b_dbl,                      # merged dbl tail:    (9*Cd2, Cdt), (1, Cdt)
    wfc_stem, wfc_mid, wfc_dbl, bfc,   # per-stage fc blocks
    o_ref,                             # (Nb, num_classes)
    pbuf,                              # VMEM (Nb, H+2, W+2, Cbig) zero-padded [x | stem]
    pd2,                               # VMEM (Nb, H+2, W+2, Cd2)  zero-padded dbl_2 out
):
    Nb, H, W, Cin = x_ref.shape
    Cbig = pbuf.shape[-1]
    Cstem = Cbig - Cin
    Cd2 = pd2.shape[-1]
    HW = H * W
    M = Nb * HW
    inv_hw = 1.0 / HW

    def mm_relu(a, w_ref, b_ref):
        y = jnp.dot(a, w_ref[...], preferred_element_type=jnp.float32)
        return jnp.maximum(y + b_ref[...], 0.0)

    def gap(t):
        # per-image spatial mean: (M, c) -> (Nb, c)
        c = t.shape[-1]
        return jnp.sum(t.reshape(Nb, HW, c), axis=1) * inv_hw

    def im2col_3x3(buf, c):
        # 3x3 taps over a zero-padded scratch buffer -> (M, 9*c)
        return jnp.concatenate(
            [buf[:, i:i + H, j:j + W, :] for i in range(3) for j in range(3)],
            axis=-1).reshape(M, 9 * c)

    x = x_ref[...].astype(jnp.float32)                     # (Nb, H, W, Cin)
    xm = x.reshape(M, Cin)

    # ---- stage 1: merged 1x1 stems  [branch1x1 | branch3x3_1 | branch3x3dbl_1]
    t_stem = mm_relu(xm, w_stem, b_stem)                   # (M, Cstem)
    gap_stem = gap(t_stem)                                 # (Nb, Cstem); only branch1x1
                                                           # cols reach fc (zero fc rows)

    # ---- zero-pad [x | stem] into the shared scratch (zeroed once per invocation;
    #      grid has at most 2 steps, so this is at most 2 fills total)
    pbuf[...] = jnp.zeros(pbuf.shape, jnp.float32)
    pbuf[:, 1:H + 1, 1:W + 1, :] = jnp.concatenate(
        [x, t_stem.reshape(Nb, H, W, Cstem)], axis=-1)

    # ---- stage 2: ONE matmul for [dbl_2 (3x3) | avg-pool+1x1 (as 3x3) | 1x3 | 3x1]
    t_mid = mm_relu(im2col_3x3(pbuf, Cbig), w_mid, b_mid)  # (M, Cmid)
    gap_mid = gap(t_mid)                                   # dbl_2 cols masked by zero fc rows

    # ---- stage 3: merged dbl tail [1x3 | 3x1] on padded dbl_2 output
    pd2[...] = jnp.zeros(pd2.shape, jnp.float32)
    pd2[:, 1:H + 1, 1:W + 1, :] = t_mid[:, :Cd2].reshape(Nb, H, W, Cd2)
    t_dbl = mm_relu(im2col_3x3(pd2, Cd2), w_dbl, b_dbl)    # (M, Cdt)
    gap_dbl = gap(t_dbl)

    # ---- GAP-per-branch then per-block fc (exact: fc is linear).
    # TODO(synk): F.dropout in training mode not implemented; inference (identity) only.
    out = (jnp.dot(gap_stem, wfc_stem[...], preferred_element_type=jnp.float32)
           + jnp.dot(gap_mid, wfc_mid[...], preferred_element_type=jnp.float32)
           + jnp.dot(gap_dbl, wfc_dbl[...], preferred_element_type=jnp.float32)
           + bfc[...])
    o_ref[...] = out.astype(o_ref.dtype)


# ----------------------------------------------------------- host-side glue

def _num_batch_blocks(n):
    """One batch block per TensorCore: 2 on multi-TC parts (v7x / megacore), else 1
    (single block => whole batch folded into the matmul M dim, best for v5e/v6e)."""
    try:
        kind = jax.devices()[0].device_kind.lower()
    except Exception:
        kind = ""
    multi_tc = any(t in kind for t in ("v7", "7x", "v4", "v5p", "v5 p"))
    if multi_tc and n >= 2 and n % 2 == 0:
        return 2
    return 1


def _pack_weights(params):
    """Fold BN into conv weights and pack the whole Mixed_7c block into 3 merged
    matmul weights + per-stage fc blocks (numpy host-side, returned as jnp f32)."""
    p = params["Mixed_7c"]

    def fold(name):
        c = p[name]
        w = np.asarray(c["w"], np.float32) * np.asarray(c["scale"], np.float32)
        return w, np.asarray(c["bias"], np.float32)

    w1, b1 = fold("branch1x1")          # (1,1,Cin,16)
    w31, b31 = fold("branch3x3_1")      # (1,1,Cin,16)
    w32a, b32a = fold("branch3x3_2a")   # (1,3,16,16)  pad (0,1)
    w32b, b32b = fold("branch3x3_2b")   # (3,1,16,16)  pad (1,0)
    wd1, bd1 = fold("branch3x3dbl_1")   # (1,1,Cin,24)
    wd2, bd2 = fold("branch3x3dbl_2")   # (3,3,24,16)  pad (1,1)
    wd3a, bd3a = fold("branch3x3dbl_3a")  # (1,3,16,16)
    wd3b, bd3b = fold("branch3x3dbl_3b")  # (3,1,16,16)
    wpl, bpl = fold("branch_pool")      # (1,1,Cin,8)  after 3x3 avg pool

    Cin = w1.shape[2]
    c1, c31, cd1 = w1.shape[3], w31.shape[3], wd1.shape[3]
    c2a, c2b = w32a.shape[3], w32b.shape[3]
    cd2 = wd2.shape[3]
    c3a, c3b = wd3a.shape[3], wd3b.shape[3]
    cpl = wpl.shape[3]

    # --- stage 1: merged 1x1 stems  [branch1x1 | branch3x3_1 | branch3x3dbl_1]
    Cstem = c1 + c31 + cd1
    W_stem = np.concatenate([w1[0, 0], w31[0, 0], wd1[0, 0]], axis=1)
    b_stem = np.concatenate([b1, b31, bd1]).reshape(1, Cstem)

    # --- stage 2: merged 3x3 conv over the padded [x | stem] buffer.
    #     buffer channels: [x 0:Cin | y1 | t3 | td1]
    #     output columns : [dbl_2 (3x3) | pool (avg3x3+1x1) | 3x3_2a (1x3) | 3x3_2b (3x1)]
    Cbig = Cin + Cstem
    o_t3 = Cin + c1
    o_td1 = o_t3 + c31
    Cmid = cd2 + cpl + c2a + c2b
    W_mid = np.zeros((9 * Cbig, Cmid), np.float32)
    for i in range(3):
        for j in range(3):
            r = (i * 3 + j) * Cbig
            W_mid[r + o_td1:r + o_td1 + cd1, 0:cd2] = wd2[i, j]          # 3x3, pad (1,1)
            W_mid[r:r + Cin, cd2:cd2 + cpl] = wpl[0, 0] / 9.0            # avg-pool folded
            if i == 1:                                                   # 1x3, pad (0,1)
                W_mid[r + o_t3:r + o_t3 + c31,
                      cd2 + cpl:cd2 + cpl + c2a] = w32a[0, j]
            if j == 1:                                                   # 3x1, pad (1,0)
                W_mid[r + o_t3:r + o_t3 + c31,
                      cd2 + cpl + c2a:Cmid] = w32b[i, 0]
    b_mid = np.concatenate([bd2, bpl, b32a, b32b]).reshape(1, Cmid)

    # --- stage 3: merged {1x3, 3x1} heads on the padded dbl_2 output
    Cdt = c3a + c3b
    W_dbl = np.zeros((9 * cd2, Cdt), np.float32)
    for i in range(3):
        for j in range(3):
            r = (i * 3 + j) * cd2
            if i == 1:
                W_dbl[r:r + cd2, 0:c3a] = wd3a[0, j]
            if j == 1:
                W_dbl[r:r + cd2, c3a:] = wd3b[i, 0]
    b_dbl = np.concatenate([bd3a, bd3b]).reshape(1, Cdt)

    # --- fc split into per-stage blocks (PyTorch cat order: y1,3a,3b,da,db,pool)
    wfc = np.asarray(params["fc"]["w"], np.float32)
    bfc = np.asarray(params["fc"]["b"], np.float32).reshape(1, -1)
    ncls = wfc.shape[1]
    o3a, o3b = c1, c1 + c2a
    oda, odb = o3b + c2b, o3b + c2b + c3a
    opl = odb + c3b
    Wfc_stem = np.zeros((Cstem, ncls), np.float32)
    Wfc_stem[:c1] = wfc[:c1]
    Wfc_mid = np.zeros((Cmid, ncls), np.float32)
    Wfc_mid[cd2:cd2 + cpl] = wfc[opl:opl + cpl]
    Wfc_mid[cd2 + cpl:cd2 + cpl + c2a] = wfc[o3a:o3a + c2a]
    Wfc_mid[cd2 + cpl + c2a:Cmid] = wfc[o3b:o3b + c2b]
    Wfc_dbl = np.concatenate([wfc[oda:oda + c3a], wfc[odb:odb + c3b]], axis=0)

    weights = [W_stem, b_stem, W_mid, b_mid, W_dbl, b_dbl,
               Wfc_stem, Wfc_mid, Wfc_dbl, bfc]
    return [jnp.asarray(w) for w in weights], Cbig, cd2, ncls


def inception_v3_cutted_forward(params, x_nchw):
    x = jnp.transpose(x_nchw, (0, 2, 3, 1)).astype(jnp.float32)   # NCHW -> NHWC (glue)
    N, H, W, Cin = x.shape
    weights, Cbig, cd2, ncls = _pack_weights(params)

    num_blocks = _num_batch_blocks(N)
    Nb = N // num_blocks

    in_specs = [pl.BlockSpec((Nb, H, W, Cin), lambda n: (n, 0, 0, 0))]
    in_specs += [pl.BlockSpec(w.shape, lambda n: (0, 0)) for w in weights]

    return pl.pallas_call(
        _fused_mixed7c_head_kernel,
        out_shape=jax.ShapeDtypeStruct((N, ncls), jnp.float32),
        grid=(num_blocks,),
        in_specs=in_specs,
        out_specs=pl.BlockSpec((Nb, ncls), lambda n: (n, 0)),
        scratch_shapes=[
            pltpu.VMEM((Nb, H + 2, W + 2, Cbig), jnp.float32),  # padded [x | stem]
            pltpu.VMEM((Nb, H + 2, W + 2, cd2), jnp.float32),   # padded dbl_2 output
        ],
        compiler_params=pltpu.CompilerParams(dimension_semantics=("parallel",)),
    )(x, *weights)


# ---------------------------------------------------------------- reference

def _ref_conv_bn_relu(x, w, scale, bias, padding):
    y = jax.lax.conv_general_dilated(
        x, w, window_strides=(1, 1),
        padding=((padding[0], padding[0]), (padding[1], padding[1])),
        dimension_numbers=("NHWC", "HWIO", "NHWC"))
    return jnp.maximum(y * scale + bias, 0.0)


def _ref_avg_pool(x):
    xp = jnp.pad(x, ((0, 0), (1, 1), (1, 1), (0, 0)))
    H, W = x.shape[1], x.shape[2]
    acc = sum(xp[:, i:i + H, j:j + W, :] for i in range(3) for j in range(3))
    return acc / 9.0


def _ref_forward(params, x_nchw):
    x = jnp.transpose(x_nchw, (0, 2, 3, 1))
    p = params["Mixed_7c"]
    b1 = _ref_conv_bn_relu(x, **p["branch1x1"], padding=(0, 0))
    b3 = _ref_conv_bn_relu(x, **p["branch3x3_1"], padding=(0, 0))
    b3 = jnp.concatenate([_ref_conv_bn_relu(b3, **p["branch3x3_2a"], padding=(0, 1)),
                          _ref_conv_bn_relu(b3, **p["branch3x3_2b"], padding=(1, 0))], -1)
    bd = _ref_conv_bn_relu(x, **p["branch3x3dbl_1"], padding=(0, 0))
    bd = _ref_conv_bn_relu(bd, **p["branch3x3dbl_2"], padding=(1, 1))
    bd = jnp.concatenate([_ref_conv_bn_relu(bd, **p["branch3x3dbl_3a"], padding=(0, 1)),
                          _ref_conv_bn_relu(bd, **p["branch3x3dbl_3b"], padding=(1, 0))], -1)
    bp = _ref_conv_bn_relu(_ref_avg_pool(x), **p["branch_pool"], padding=(0, 0))
    y = jnp.concatenate([b1, b3, bd, bp], axis=-1)
    pooled = jnp.mean(y, axis=(1, 2))
    return pooled @ params["fc"]["w"] + params["fc"]["b"]


# ------------------------------------------------------------------- params

def _basic_conv_params(key, cin, cout, kh, kw):
    k1, k2, k3, k4, k5 = jax.random.split(key, 5)
    w = 0.1 * jax.random.normal(k1, (kh, kw, cin, cout), jnp.float32)
    gamma = jax.random.uniform(k2, (cout,), jnp.float32, 0.5, 1.5)
    beta = 0.1 * jax.random.normal(k3, (cout,), jnp.float32)
    mean = 0.1 * jax.random.normal(k4, (cout,), jnp.float32)
    var = jax.random.uniform(k5, (cout,), jnp.float32, 0.5, 1.5)
    scale = gamma / jnp.sqrt(var + BN_EPS)
    return {"w": w, "scale": scale, "bias": beta - mean * scale}


def make_params(key, in_c=32, num_classes=10):
    ks = jax.random.split(key, 11)
    mixed = {
        "branch1x1":       _basic_conv_params(ks[0], in_c, 16, 1, 1),
        "branch3x3_1":     _basic_conv_params(ks[1], in_c, 16, 1, 1),
        "branch3x3_2a":    _basic_conv_params(ks[2], 16, 16, 1, 3),
        "branch3x3_2b":    _basic_conv_params(ks[3], 16, 16, 3, 1),
        "branch3x3dbl_1":  _basic_conv_params(ks[4], in_c, 24, 1, 1),
        "branch3x3dbl_2":  _basic_conv_params(ks[5], 24, 16, 3, 3),
        "branch3x3dbl_3a": _basic_conv_params(ks[6], 16, 16, 1, 3),
        "branch3x3dbl_3b": _basic_conv_params(ks[7], 16, 16, 3, 1),
        "branch_pool":     _basic_conv_params(ks[8], in_c, 8, 1, 1),
    }
    out_c = 16 + 32 + 32 + 8  # 88
    fc = {"w": 0.1 * jax.random.normal(ks[9], (out_c, num_classes), jnp.float32),
          "b": 0.1 * jax.random.normal(ks[10], (num_classes,), jnp.float32)}
    return {"Mixed_7c": mixed, "fc": fc}


if __name__ == "__main__":
    key = jax.random.PRNGKey(0)
    kp, kx = jax.random.split(key)
    params = make_params(kp)
    x = jax.random.normal(kx, (2, 32, 8, 8), jnp.float32)   # NCHW, like PyTorch input

    out = jax.block_until_ready(inception_v3_cutted_forward(params, x))
    ref = jax.block_until_ready(_ref_forward(params, x))

    assert out.shape == (2, 10), out.shape
    np.testing.assert_allclose(np.asarray(out), np.asarray(ref), rtol=1e-3, atol=1e-3)
    print("KERNEL_OK")
</pallas_src>

<mosaic_0001>
module attributes {stable_mosaic.version = 11 : i64} {
  func.func @_fused_mixed7c_head_kernel(%arg0: i32, %arg1: memref<2x8x8x32xf32, #tpu.memory_space<vmem>>, %arg2: memref<32x56xf32, #tpu.memory_space<vmem>>, %arg3: memref<1x56xf32, #tpu.memory_space<vmem>>, %arg4: memref<792x56xf32, #tpu.memory_space<vmem>>, %arg5: memref<1x56xf32, #tpu.memory_space<vmem>>, %arg6: memref<144x32xf32, #tpu.memory_space<vmem>>, %arg7: memref<1x32xf32, #tpu.memory_space<vmem>>, %arg8: memref<56x10xf32, #tpu.memory_space<vmem>>, %arg9: memref<56x10xf32, #tpu.memory_space<vmem>>, %arg10: memref<32x10xf32, #tpu.memory_space<vmem>>, %arg11: memref<1x10xf32, #tpu.memory_space<vmem>>, %arg12: memref<2x10xf32, #tpu.memory_space<vmem>>, %arg13: memref<2x10x10x88xf32, #tpu.memory_space<vmem>>, %arg14: memref<2x10x10x16xf32, #tpu.memory_space<vmem>>) attributes {dimension_semantics = [#tpu.dimension_semantics<parallel>], iteration_bounds = array<i64: 1>, scalar_prefetch = 0 : i64, scratch_operands = 2 : i64, tpu.core_type = #tpu.core_type<tc>, window_params = [{transform_indices = @transform_0, window_bounds = array<i64: 2, 8, 8, 32>}, {pipeline_mode = #tpu.pipeline_mode<synchronous>, transform_indices = @transform_1, window_bounds = array<i64: 32, 56>}, {pipeline_mode = #tpu.pipeline_mode<synchronous>, transform_indices = @transform_2, window_bounds = array<i64: 1, 56>}, {pipeline_mode = #tpu.pipeline_mode<synchronous>, transform_indices = @transform_3, window_bounds = array<i64: 792, 56>}, {pipeline_mode = #tpu.pipeline_mode<synchronous>, transform_indices = @transform_4, window_bounds = array<i64: 1, 56>}, {pipeline_mode = #tpu.pipeline_mode<synchronous>, transform_indices = @transform_5, window_bounds = array<i64: 144, 32>}, {pipeline_mode = #tpu.pipeline_mode<synchronous>, transform_indices = @transform_6, window_bounds = array<i64: 1, 32>}, {pipeline_mode = #tpu.pipeline_mode<synchronous>, transform_indices = @transform_7, window_bounds = array<i64: 56, 10>}, {pipeline_mode = #tpu.pipeline_mode<synchronous>, transform_indices = @transform_8, window_bounds = array<i64: 56, 10>}, {pipeline_mode = #tpu.pipeline_mode<synchronous>, transform_indices = @transform_9, window_bounds = array<i64: 32, 10>}, {pipeline_mode = #tpu.pipeline_mode<synchronous>, transform_indices = @transform_10, window_bounds = array<i64: 1, 10>}, {transform_indices = @transform_11, window_bounds = array<i64: 2, 10>}]} {
    %c0 = arith.constant 0 : index
    %c0_0 = arith.constant 0 : index
    %c0_1 = arith.constant 0 : index
    %c0_2 = arith.constant 0 : index
    %0 = vector.load %arg1[%c0, %c0_0, %c0_1, %c0_2] : memref<2x8x8x32xf32, #tpu.memory_space<vmem>>, vector<2x8x8x32xf32>
    %1 = vector.shape_cast %0 : vector<2x8x8x32xf32> to vector<128x32xf32>
    %c0_3 = arith.constant 0 : index
    %c0_4 = arith.constant 0 : index
    %2 = vector.load %arg2[%c0_3, %c0_4] : memref<32x56xf32, #tpu.memory_space<vmem>>, vector<32x56xf32>
    %cst = arith.constant dense<0.000000e+00> : vector<128x56xf32>
    %3 = tpu.matmul %1, %2, %cst {dimension_numbers = #tpu.dot_dimension_numbers<[1], [0], [0], [1], [0, 0, 1, 1], [], []>} : vector<128x32xf32>, vector<32x56xf32>, vector<128x56xf32> -> vector<128x56xf32>
    %c0_5 = arith.constant 0 : index
    %c0_6 = arith.constant 0 : index
    %4 = vector.load %arg3[%c0_5, %c0_6] : memref<1x56xf32, #tpu.memory_space<vmem>>, vector<1x56xf32>
    %5 = vector.broadcast %4 : vector<1x56xf32> to vector<128x56xf32>
    %6 = arith.addf %3, %5 : vector<128x56xf32>
    %cst_7 = arith.constant 0.000000e+00 : f32
    %7 = vector.broadcast %cst_7 : f32 to vector<128x56xf32>
    %8 = arith.maximumf %6, %7 : vector<128x56xf32>
    %9 = vector.shape_cast %8 : vector<128x56xf32> to vector<2x64x56xf32>
    %cst_8 = arith.constant dense<0.000000e+00> : vector<2x56xf32>
    %10 = vector.multi_reduction <add>, %9, %cst_8 [1] : vector<2x64x56xf32> to vector<2x56xf32>
    %cst_9 = arith.constant 1.562500e-02 : f32
    %11 = vector.broadcast %cst_9 : f32 to vector<2x56xf32>
    %12 = arith.mulf %10, %11 : vector<2x56xf32>
    %cst_10 = arith.constant 0.000000e+00 : f32
    %13 = vector.broadcast %cst_10 : f32 to vector<2x10x10x88xf32>
    %c0_11 = arith.constant 0 : index
    %c0_12 = arith.constant 0 : index
    %c0_13 = arith.constant 0 : index
    %c0_14 = arith.constant 0 : index
    %14 = vector.load %arg13[%c0_11, %c0_12, %c0_13, %c0_14] : memref<2x10x10x88xf32, #tpu.memory_space<vmem>>, vector<2x10x10x88xf32>
    tpu.vector_store %arg13[%c0_11, %c0_12, %c0_13, %c0_14], %13 {strides = array<i32>} : memref<2x10x10x88xf32, #tpu.memory_space<vmem>>, vector<2x10x10x88xf32>,
    %15 = vector.shape_cast %8 : vector<128x56xf32> to vector<2x8x8x56xf32>
    %16 = tpu.concatenate %0, %15 in 3 : vector<2x8x8x32xf32>, vector<2x8x8x56xf32> -> vector<2x8x8x88xf32>
    %c0_15 = arith.constant 0 : index
    %c1 = arith.constant 1 : index
    %c1_16 = arith.constant 1 : index
    %c0_17 = arith.constant 0 : index
    %17 = vector.load %arg13[%c0_15, %c1, %c1_16, %c0_17] : memref<2x10x10x88xf32, #tpu.memory_space<vmem>>, vector<2x8x8x88xf32>
    tpu.vector_store %arg13[%c0_15, %c1, %c1_16, %c0_17], %16 {strides = array<i32>} : memref<2x10x10x88xf32, #tpu.memory_space<vmem>>, vector<2x8x8x88xf32>,
    %c0_18 = arith.constant 0 : index
    %c0_19 = arith.constant 0 : index
    %c0_20 = arith.constant 0 : index
    %c0_21 = arith.constant 0 : index
    %18 = vector.load %arg13[%c0_18, %c0_19, %c0_20, %c0_21] : memref<2x10x10x88xf32, #tpu.memory_space<vmem>>, vector<2x8x8x88xf32>
    %c0_22 = arith.constant 0 : index
    %c0_23 = arith.constant 0 : index
    %c1_24 = arith.constant 1 : index
    %c0_25 = arith.constant 0 : index
    %19 = vector.load %arg13[%c0_22, %c0_23, %c1_24, %c0_25] : memref<2x10x10x88xf32, #tpu.memory_space<vmem>>, vector<2x8x8x88xf32>
    %c0_26 = arith.constant 0 : index
    %c0_27 = arith.constant 0 : index
    %c2 = arith.constant 2 : index
    %c0_28 = arith.constant 0 : index
    %20 = vector.load %arg13[%c0_26, %c0_27, %c2, %c0_28] : memref<2x10x10x88xf32, #tpu.memory_space<vmem>>, vector<2x8x8x88xf32>
    %c0_29 = arith.constant 0 : index
    %c1_30 = arith.constant 1 : index
    %c0_31 = arith.constant 0 : index
    %c0_32 = arith.constant 0 : index
    %21 = vector.load %arg13[%c0_29, %c1_30, %c0_31, %c0_32] : memref<2x10x10x88xf32, #tpu.memory_space<vmem>>, vector<2x8x8x88xf32>
    %c0_33 = arith.constant 0 : index
    %c1_34 = arith.constant 1 : index
    %c1_35 = arith.constant 1 : index
    %c0_36 = arith.constant 0 : index
    %22 = vector.load %arg13[%c0_33, %c1_34, %c1_35, %c0_36] : memref<2x10x10x88xf32, #tpu.memory_space<vmem>>, vector<2x8x8x88xf32>
    %c0_37 = arith.constant 0 : index
    %c1_38 = arith.constant 1 : index
    %c2_39 = arith.constant 2 : index
    %c0_40 = arith.constant 0 : index
    %23 = vector.load %arg13[%c0_37, %c1_38, %c2_39, %c0_40] : memref<2x10x10x88xf32, #tpu.memory_space<vmem>>, vector<2x8x8x88xf32>
    %c0_41 = arith.constant 0 : index
    %c2_42 = arith.constant 2 : index
    %c0_43 = arith.constant 0 : index
    %c0_44 = arith.constant 0 : index
    %24 = vector.load %arg13[%c0_41, %c2_42, %c0_43, %c0_44] : memref<2x10x10x88xf32, #tpu.memory_space<vmem>>, vector<2x8x8x88xf32>
    %c0_45 = arith.constant 0 : index
    %c2_46 = arith.constant 2 : index
    %c1_47 = arith.constant 1 : index
    %c0_48 = arith.constant 0 : index
    %25 = vector.load %arg13[%c0_45, %c2_46, %c1_47, %c0_48] : memref<2x10x10x88xf32, #tpu.memory_space<vmem>>, vector<2x8x8x88xf32>
    %c0_49 = arith.constant 0 : index
    %c2_50 = arith.constant 2 : index
    %c2_51 = arith.constant 2 : index
    %c0_52 = arith.constant 0 : index
    %26 = vector.load %arg13[%c0_49, %c2_50, %c2_51, %c0_52] : memref<2x10x10x88xf32, #tpu.memory_space<vmem>>, vector<2x8x8x88xf32>
    %27 = tpu.concatenate %18, %19, %20, %21, %22, %23, %24, %25, %26 in 3 : vector<2x8x8x88xf32>, vector<2x8x8x88xf32>, vector<2x8x8x88xf32>, vector<2x8x8x88xf32>, vector<2x8x8x88xf32>, vector<2x8x8x88xf32>, vector<2x8x8x88xf32>, vector<2x8x8x88xf32>, vector<2x8x8x88xf32> -> vector<2x8x8x792xf32>
    %28 = vector.shape_cast %27 : vector<2x8x8x792xf32> to vector<128x792xf32>
    %c0_53 = arith.constant 0 : index
    %c0_54 = arith.constant 0 : index
    %29 = vector.load %arg4[%c0_53, %c0_54] : memref<792x56xf32, #tpu.memory_space<vmem>>, vector<792x56xf32>
    %cst_55 = arith.constant dense<0.000000e+00> : vector<128x56xf32>
    %30 = tpu.matmul %28, %29, %cst_55 {dimension_numbers = #tpu.dot_dimension_numbers<[1], [0], [0], [1], [0, 0, 1, 1], [], []>} : vector<128x792xf32>, vector<792x56xf32>, vector<128x56xf32> -> vector<128x56xf32>
    %c0_56 = arith.constant 0 : index
    %c0_57 = arith.constant 0 : index
    %31 = vector.load %arg5[%c0_56, %c0_57] : memref<1x56xf32, #tpu.memory_space<vmem>>, vector<1x56xf32>
    %32 = vector.broadcast %31 : vector<1x56xf32> to vector<128x56xf32>
    %33 = arith.addf %30, %32 : vector<128x56xf32>
    %cst_58 = arith.constant 0.000000e+00 : f32
    %34 = vector.broadcast %cst_58 : f32 to vector<128x56xf32>
    %35 = arith.maximumf %33, %34 : vector<128x56xf32>
    %36 = vector.shape_cast %35 : vector<128x56xf32> to vector<2x64x56xf32>
    %cst_59 = arith.constant dense<0.000000e+00> : vector<2x56xf32>
    %37 = vector.multi_reduction <add>, %36, %cst_59 [1] : vector<2x64x56xf32> to vector<2x56xf32>
    %cst_60 = arith.constant 1.562500e-02 : f32
    %38 = vector.broadcast %cst_60 : f32 to vector<2x56xf32>
    %39 = arith.mulf %37, %38 : vector<2x56xf32>
    %cst_61 = arith.constant 0.000000e+00 : f32
    %40 = vector.broadcast %cst_61 : f32 to vector<2x10x10x16xf32>
    %c0_62 = arith.constant 0 : index
    %c0_63 = arith.constant 0 : index
    %c0_64 = arith.constant 0 : index
    %c0_65 = arith.constant 0 : index
    %41 = vector.load %arg14[%c0_62, %c0_63, %c0_64, %c0_65] : memref<2x10x10x16xf32, #tpu.memory_space<vmem>>, vector<2x10x10x16xf32>
    tpu.vector_store %arg14[%c0_62, %c0_63, %c0_64, %c0_65], %40 {strides = array<i32>} : memref<2x10x10x16xf32, #tpu.memory_space<vmem>>, vector<2x10x10x16xf32>,
    %42 = vector.extract_strided_slice %35 {offsets = [0, 0], sizes = [128, 16], strides = [1, 1]} : vector<128x56xf32> to vector<128x16xf32>
    %43 = vector.shape_cast %42 : vector<128x16xf32> to vector<2x8x8x16xf32>
    %c0_66 = arith.constant 0 : index
    %c1_67 = arith.constant 1 : index
    %c1_68 = arith.constant 1 : index
    %c0_69 = arith.constant 0 : index
    %44 = vector.load %arg14[%c0_66, %c1_67, %c1_68, %c0_69] : memref<2x10x10x16xf32, #tpu.memory_space<vmem>>, vector<2x8x8x16xf32>
    tpu.vector_store %arg14[%c0_66, %c1_67, %c1_68, %c0_69], %43 {strides = array<i32>} : memref<2x10x10x16xf32, #tpu.memory_space<vmem>>, vector<2x8x8x16xf32>,
    %c0_70 = arith.constant 0 : index
    %c0_71 = arith.constant 0 : index
    %c0_72 = arith.constant 0 : index
    %c0_73 = arith.constant 0 : index
    %45 = vector.load %arg14[%c0_70, %c0_71, %c0_72, %c0_73] : memref<2x10x10x16xf32, #tpu.memory_space<vmem>>, vector<2x8x8x16xf32>
    %c0_74 = arith.constant 0 : index
    %c0_75 = arith.constant 0 : index
    %c1_76 = arith.constant 1 : index
    %c0_77 = arith.constant 0 : index
    %46 = vector.load %arg14[%c0_74, %c0_75, %c1_76, %c0_77] : memref<2x10x10x16xf32, #tpu.memory_space<vmem>>, vector<2x8x8x16xf32>
    %c0_78 = arith.constant 0 : index
    %c0_79 = arith.constant 0 : index
    %c2_80 = arith.constant 2 : index
    %c0_81 = arith.constant 0 : index
    %47 = vector.load %arg14[%c0_78, %c0_79, %c2_80, %c0_81] : memref<2x10x10x16xf32, #tpu.memory_space<vmem>>, vector<2x8x8x16xf32>
    %c0_82 = arith.constant 0 : index
    %c1_83 = arith.constant 1 : index
    %c0_84 = arith.constant 0 : index
    %c0_85 = arith.constant 0 : index
    %48 = vector.load %arg14[%c0_82, %c1_83, %c0_84, %c0_85] : memref<2x10x10x16xf32, #tpu.memory_space<vmem>>, vector<2x8x8x16xf32>
    %c0_86 = arith.constant 0 : index
    %c1_87 = arith.constant 1 : index
    %c1_88 = arith.constant 1 : index
    %c0_89 = arith.constant 0 : index
    %49 = vector.load %arg14[%c0_86, %c1_87, %c1_88, %c0_89] : memref<2x10x10x16xf32, #tpu.memory_space<vmem>>, vector<2x8x8x16xf32>
    %c0_90 = arith.constant 0 : index
    %c1_91 = arith.constant 1 : index
    %c2_92 = arith.constant 2 : index
    %c0_93 = arith.constant 0 : index
    %50 = vector.load %arg14[%c0_90, %c1_91, %c2_92, %c0_93] : memref<2x10x10x16xf32, #tpu.memory_space<vmem>>, vector<2x8x8x16xf32>
    %c0_94 = arith.constant 0 : index
    %c2_95 = arith.constant 2 : index
    %c0_96 = arith.constant 0 : index
    %c0_97 = arith.constant 0 : index
    %51 = vector.load %arg14[%c0_94, %c2_95, %c0_96, %c0_97] : memref<2x10x10x16xf32, #tpu.memory_space<vmem>>, vector<2x8x8x16xf32>
    %c0_98 = arith.constant 0 : index
    %c2_99 = arith.constant 2 : index
    %c1_100 = arith.constant 1 : index
    %c0_101 = arith.constant 0 : index
    %52 = vector.load %arg14[%c0_98, %c2_99, %c1_100, %c0_101] : memref<2x10x10x16xf32, #tpu.memory_space<vmem>>, vector<2x8x8x16xf32>
    %c0_102 = arith.constant 0 : index
    %c2_103 = arith.constant 2 : index
    %c2_104 = arith.constant 2 : index
    %c0_105 = arith.constant 0 : index
    %53 = vector.load %arg14[%c0_102, %c2_103, %c2_104, %c0_105] : memref<2x10x10x16xf32, #tpu.memory_space<vmem>>, vector<2x8x8x16xf32>
    %54 = tpu.concatenate %45, %46, %47, %48, %49, %50, %51, %52, %53 in 3 : vector<2x8x8x16xf32>, vector<2x8x8x16xf32>, vector<2x8x8x16xf32>, vector<2x8x8x16xf32>, vector<2x8x8x16xf32>, vector<2x8x8x16xf32>, vector<2x8x8x16xf32>, vector<2x8x8x16xf32>, vector<2x8x8x16xf32> -> vector<2x8x8x144xf32>
    %55 = vector.shape_cast %54 : vector<2x8x8x144xf32> to vector<128x144xf32>
    %c0_106 = arith.constant 0 : index
    %c0_107 = arith.constant 0 : index
    %56 = vector.load %arg6[%c0_106, %c0_107] : memref<144x32xf32, #tpu.memory_space<vmem>>, vector<144x32xf32>
    %cst_108 = arith.constant dense<0.000000e+00> : vector<128x32xf32>
    %57 = tpu.matmul %55, %56, %cst_108 {dimension_numbers = #tpu.dot_dimension_numbers<[1], [0], [0], [1], [0, 0, 1, 1], [], []>} : vector<128x144xf32>, vector<144x32xf32>, vector<128x32xf32> -> vector<128x32xf32>
    %c0_109 = arith.constant 0 : index
    %c0_110 = arith.constant 0 : index
    %58 = vector.load %arg7[%c0_109, %c0_110] : memref<1x32xf32, #tpu.memory_space<vmem>>, vector<1x32xf32>
    %59 = vector.broadcast %58 : vector<1x32xf32> to vector<128x32xf32>
    %60 = arith.addf %57, %59 : vector<128x32xf32>
    %cst_111 = arith.constant 0.000000e+00 : f32
    %61 = vector.broadcast %cst_111 : f32 to vector<128x32xf32>
    %62 = arith.maximumf %60, %61 : vector<128x32xf32>
    %63 = vector.shape_cast %62 : vector<128x32xf32> to vector<2x64x32xf32>
    %cst_112 = arith.constant dense<0.000000e+00> : vector<2x32xf32>
    %64 = vector.multi_reduction <add>, %63, %cst_112 [1] : vector<2x64x32xf32> to vector<2x32xf32>
    %cst_113 = arith.constant 1.562500e-02 : f32
    %65 = vector.broadcast %cst_113 : f32 to vector<2x32xf32>
    %66 = arith.mulf %64, %65 : vector<2x32xf32>
    %c0_114 = arith.constant 0 : index
    %c0_115 = arith.constant 0 : index
    %67 = vector.load %arg8[%c0_114, %c0_115] : memref<56x10xf32, #tpu.memory_space<vmem>>, vector<56x10xf32>
    %cst_116 = arith.constant dense<0.000000e+00> : vector<2x10xf32>
    %68 = tpu.matmul %12, %67, %cst_116 {dimension_numbers = #tpu.dot_dimension_numbers<[1], [0], [0], [1], [0, 0, 1, 1], [], []>} : vector<2x56xf32>, vector<56x10xf32>, vector<2x10xf32> -> vector<2x10xf32>
    %c0_117 = arith.constant 0 : index
    %c0_118 = arith.constant 0 : index
    %69 = vector.load %arg9[%c0_117, %c0_118] : memref<56x10xf32, #tpu.memory_space<vmem>>, vector<56x10xf32>
    %cst_119 = arith.constant dense<0.000000e+00> : vector<2x10xf32>
    %70 = tpu.matmul %39, %69, %cst_119 {dimension_numbers = #tpu.dot_dimension_numbers<[1], [0], [0], [1], [0, 0, 1, 1], [], []>} : vector<2x56xf32>, vector<56x10xf32>, vector<2x10xf32> -> vector<2x10xf32>
    %71 = arith.addf %68, %70 : vector<2x10xf32>
    %c0_120 = arith.constant 0 : index
    %c0_121 = arith.constant 0 : index
    %72 = vector.load %arg10[%c0_120, %c0_121] : memref<32x10xf32, #tpu.memory_space<vmem>>, vector<32x10xf32>
    %cst_122 = arith.constant dense<0.000000e+00> : vector<2x10xf32>
    %73 = tpu.matmul %66, %72, %cst_122 {dimension_numbers = #tpu.dot_dimension_numbers<[1], [0], [0], [1], [0, 0, 1, 1], [], []>} : vector<2x32xf32>, vector<32x10xf32>, vector<2x10xf32> -> vector<2x10xf32>
    %74 = arith.addf %71, %73 : vector<2x10xf32>
    %c0_123 = arith.constant 0 : index
    %c0_124 = arith.constant 0 : index
    %75 = vector.load %arg11[%c0_123, %c0_124] : memref<1x10xf32, #tpu.memory_space<vmem>>, vector<1x10xf32>
    %76 = vector.broadcast %75 : vector<1x10xf32> to vector<2x10xf32>
    %77 = arith.addf %74, %76 : vector<2x10xf32>
    %c0_125 = arith.constant 0 : index
    %c0_126 = arith.constant 0 : index
    %78 = vector.load %arg12[%c0_125, %c0_126] : memref<2x10xf32, #tpu.memory_space<vmem>>, vector<2x10xf32>
    tpu.vector_store %arg12[%c0_125, %c0_126], %77 {strides = array<i32>} : memref<2x10xf32, #tpu.memory_space<vmem>>, vector<2x10xf32>,
    return
  }
  func.func @transform_0(%arg0: i32) -> (i32, i32, i32, i32) {
    %c0_i32 = arith.constant 0 : i32
    %c0_i32_0 = arith.constant 0 : i32
    %c0_i32_1 = arith.constant 0 : i32
    %c0_i32_2 = arith.constant 0 : i32
    return %arg0, %c0_i32, %c0_i32_0, %c0_i32_1 : i32, i32, i32, i32
  }
  func.func @transform_1(%arg0: i32) -> (i32, i32) {
    %c0_i32 = arith.constant 0 : i32
    %c0_i32_0 = arith.constant 0 : i32
    %c0_i32_1 = arith.constant 0 : i32
    return %c0_i32, %c0_i32_0 : i32, i32
  }
  func.func @transform_2(%arg0: i32) -> (i32, i32) {
    %c0_i32 = arith.constant 0 : i32
    %c0_i32_0 = arith.constant 0 : i32
    %c0_i32_1 = arith.constant 0 : i32
    return %c0_i32, %c0_i32_0 : i32, i32
  }
  func.func @transform_3(%arg0: i32) -> (i32, i32) {
    %c0_i32 = arith.constant 0 : i32
    %c0_i32_0 = arith.constant 0 : i32
    %c0_i32_1 = arith.constant 0 : i32
    return %c0_i32, %c0_i32_0 : i32, i32
  }
  func.func @transform_4(%arg0: i32) -> (i32, i32) {
    %c0_i32 = arith.constant 0 : i32
    %c0_i32_0 = arith.constant 0 : i32
    %c0_i32_1 = arith.constant 0 : i32
    return %c0_i32, %c0_i32_0 : i32, i32
  }
  func.func @transform_5(%arg0: i32) -> (i32, i32) {
    %c0_i32 = arith.constant 0 : i32
    %c0_i32_0 = arith.constant 0 : i32
    %c0_i32_1 = arith.constant 0 : i32
    return %c0_i32, %c0_i32_0 : i32, i32
  }
  func.func @transform_6(%arg0: i32) -> (i32, i32) {
    %c0_i32 = arith.constant 0 : i32
    %c0_i32_0 = arith.constant 0 : i32
    %c0_i32_1 = arith.constant 0 : i32
    return %c0_i32, %c0_i32_0 : i32, i32
  }
  func.func @transform_7(%arg0: i32) -> (i32, i32) {
    %c0_i32 = arith.constant 0 : i32
    %c0_i32_0 = arith.constant 0 : i32
    %c0_i32_1 = arith.constant 0 : i32
    return %c0_i32, %c0_i32_0 : i32, i32
  }
  func.func @transform_8(%arg0: i32) -> (i32, i32) {
    %c0_i32 = arith.constant 0 : i32
    %c0_i32_0 = arith.constant 0 : i32
    %c0_i32_1 = arith.constant 0 : i32
    return %c0_i32, %c0_i32_0 : i32, i32
  }
  func.func @transform_9(%arg0: i32) -> (i32, i32) {
    %c0_i32 = arith.constant 0 : i32
    %c0_i32_0 = arith.constant 0 : i32
    %c0_i32_1 = arith.constant 0 : i32
    return %c0_i32, %c0_i32_0 : i32, i32
  }
  func.func @transform_10(%arg0: i32) -> (i32, i32) {
    %c0_i32 = arith.constant 0 : i32
    %c0_i32_0 = arith.constant 0 : i32
    %c0_i32_1 = arith.constant 0 : i32
    return %c0_i32, %c0_i32_0 : i32, i32
  }
  func.func @transform_11(%arg0: i32) -> (i32, i32) {
    %c0_i32 = arith.constant 0 : i32
    %c0_i32_0 = arith.constant 0 : i32
    return %arg0, %c0_i32 : i32, i32
  }
}

</mosaic_0001>

<llo_original>
// kernel: tpu_custom_call.1
$region0: #{tpu_custom_call.1}
  #allocation0 [shape = 'u32[]', space=smem, size = 0x4, offset = 0x4, fixed_abs, tag = 'smem constant byte address 0x4 - core index']
  #allocation1 [shape = 'u32[144,128]{1,0:T(1,128)}', space=vmem, size = 0x12000, scoped, tag = 'internal scratch']
  #allocation2 [shape = 'f32[2,10,10,88]{3,2,1,0:T(8,128)}', space=vmem, size = 0x28000, scoped, tag = 'scratch operand']
  #allocation3 [shape = 'f32[2,10,10,16]{3,2,1,0:T(8,128)}', space=vmem, size = 0x28000, scoped, tag = 'scratch operand']
  %s0 = inlined_call_operand.vmem [shape: f32[2,8,8,32], index: 0, kind: input, shape index: {}]
  %s1 = inlined_call_operand.vmem [shape: f32[32,56], index: 1, kind: input, shape index: {}]
  %s2 = inlined_call_operand.vmem [shape: f32[1,56], index: 2, kind: input, shape index: {}]
  %s3 = inlined_call_operand.vmem [shape: f32[792,56], index: 3, kind: input, shape index: {}]
  %s4 = inlined_call_operand.vmem [shape: f32[1,56], index: 4, kind: input, shape index: {}]
  %s5 = inlined_call_operand.vmem [shape: f32[144,32], index: 5, kind: input, shape index: {}]
  %s6 = inlined_call_operand.vmem [shape: f32[1,32], index: 6, kind: input, shape index: {}]
  %s7 = inlined_call_operand.vmem [shape: f32[56,10], index: 7, kind: input, shape index: {}]
  %s8 = inlined_call_operand.vmem [shape: f32[56,10], index: 8, kind: input, shape index: {}]
  %s9 = inlined_call_operand.vmem [shape: f32[32,10], index: 9, kind: input, shape index: {}]
  %s10 = inlined_call_operand.vmem [shape: f32[1,10], index: 10, kind: input, shape index: {}]
  %s11 = inlined_call_operand.hbm [shape: f32[2,10], index: 11, kind: output, shape index: {}]
  %s12 = sld [smem:[#allocation0]]
  $region54: #{tpu_custom_call.1} parent=0
    _
  %s14 = ssub.s32 1, %s12
  %s15 = scalar_select 0, %s14, %s12
  $region1: #{tpu_custom_call.1} parent=0
    #allocation4 [shape = 'u8[1024]{0}', space=vmem, size = 0x400, scoped, tag = 'output window, operand 0, single buffered']
    #allocation5 [shape = 's32[1]{0}', space=sflag, size = 0x4, scoped, tag = 'scoped memory for tpu_custom_call.1']
    %16 = vsyncpa [#allocation5], 0
    // Predicated region
    $region2: #{tpu_custom_call.1} parent=1 // pred_check
      _
    $region3: #{tpu_custom_call.1} parent=1 // pred_check_branch
      %18 = sbr.rel (0) target = $region5
    $region4: #{tpu_custom_call.1} parent=1 // pred_region
      _
    $region5: #{tpu_custom_call.1} parent=1 // pred_fallthru
      _
    // Predicated region
    $region6: #{tpu_custom_call.1} parent=1 // pred_check
      _
    $region7: #{tpu_custom_call.1} parent=1 // pred_check_branch
      %20 = sbr.rel (0) target = $region9
    $region8: #{tpu_custom_call.1} parent=1 // pred_region
      _
    $region9: #{tpu_custom_call.1} parent=1 // pred_fallthru
      _
    // Predicated region
    $region10: #{tpu_custom_call.1} parent=1 // pred_check
      _
    $region11: #{tpu_custom_call.1} parent=1 // pred_check_branch
      %22 = sbr.rel (0) target = $region13
    $region12: #{tpu_custom_call.1} parent=1 // pred_region
      _
    $region13: #{tpu_custom_call.1} parent=1 // pred_fallthru
      _
    // Predicated region
    $region14: #{tpu_custom_call.1} parent=1 // pred_check
      _
    $region15: #{tpu_custom_call.1} parent=1 // pred_check_branch
      %24 = sbr.rel (0) target = $region17
    $region16: #{tpu_custom_call.1} parent=1 // pred_region
      _
    $region17: #{tpu_custom_call.1} parent=1 // pred_fallthru
      _
    // Predicated region
    $region18: #{tpu_custom_call.1} parent=1 // pred_check
      _
    $region19: #{tpu_custom_call.1} parent=1 // pred_check_branch
      %26 = sbr.rel (0) target = $region21
    $region20: #{tpu_custom_call.1} parent=1 // pred_region
      _
    $region21: #{tpu_custom_call.1} parent=1 // pred_fallthru
      _
    // Predicated region
    $region22: #{tpu_custom_call.1} parent=1 // pred_check
      _
    $region23: #{tpu_custom_call.1} parent=1 // pred_check_branch
      %28 = sbr.rel (0) target = $region25
    $region24: #{tpu_custom_call.1} parent=1 // pred_region
      _
    $region25: #{tpu_custom_call.1} parent=1 // pred_fallthru
      _
    // Predicated region
    $region26: #{tpu_custom_call.1} parent=1 // pred_check
      _
    $region27: #{tpu_custom_call.1} parent=1 // pred_check_branch
      %30 = sbr.rel (0) target = $region29
    $region28: #{tpu_custom_call.1} parent=1 // pred_region
      _
    $region29: #{tpu_custom_call.1} parent=1 // pred_fallthru
      _
    // Predicated region
    $region30: #{tpu_custom_call.1} parent=1 // pred_check
      _
    $region31: #{tpu_custom_call.1} parent=1 // pred_check_branch
      %32 = sbr.rel (0) target = $region33
    $region32: #{tpu_custom_call.1} parent=1 // pred_region
      _
    $region33: #{tpu_custom_call.1} parent=1 // pred_fallthru
      _
    // Predicated region
    $region34: #{tpu_custom_call.1} parent=1 // pred_check
      _
    $region35: #{tpu_custom_call.1} parent=1 // pred_check_branch
      %34 = sbr.rel (0) target = $region37
    $region36: #{tpu_custom_call.1} parent=1 // pred_region
      _
    $region37: #{tpu_custom_call.1} parent=1 // pred_fallthru
      _
    // Predicated region
    $region38: #{tpu_custom_call.1} parent=1 // pred_check
      _
    $region39: #{tpu_custom_call.1} parent=1 // pred_check_branch
      %36 = sbr.rel (0) target = $region41
    $region40: #{tpu_custom_call.1} parent=1 // pred_region
      _
    $region41: #{tpu_custom_call.1} parent=1 // pred_fallthru
      _
    // Predicated region
    $region42: #{tpu_custom_call.1} parent=1 // pred_check
      _
    $region43: #{tpu_custom_call.1} parent=1 // pred_check_branch
      %38 = sbr.rel (0) target = $region45
    $region44: #{tpu_custom_call.1} parent=1 // pred_region
      _
    $region45: #{tpu_custom_call.1} parent=1 // pred_fallthru
      _
    %v39 = vld [vmem:[%s0] sm:$0xff]
    %v40 = vld [vmem:[%s0 + $0x8] sm:$0xff]
    %v41 = vld [vmem:[%s0 + $0x10] sm:$0xff]
    %v42 = vld [vmem:[%s0 + $0x18] sm:$0xff]
    %v43 = vld [vmem:[%s0 + $0x20] sm:$0xff]
    %v44 = vld [vmem:[%s0 + $0x28] sm:$0xff]
    %v45 = vld [vmem:[%s0 + $0x30] sm:$0xff]
    %v46 = vld [vmem:[%s0 + $0x38] sm:$0xff]
    %v47 = vld [vmem:[%s0 + $0x40] sm:$0xff]
    %v48 = vld [vmem:[%s0 + $0x48] sm:$0xff]
    %v49 = vld [vmem:[%s0 + $0x50] sm:$0xff]
    %v50 = vld [vmem:[%s0 + $0x58] sm:$0xff]
    %v51 = vld [vmem:[%s0 + $0x60] sm:$0xff]
    %v52 = vld [vmem:[%s0 + $0x68] sm:$0xff]
    %v53 = vld [vmem:[%s0 + $0x70] sm:$0xff]
    %v54 = vld [vmem:[%s0 + $0x78] sm:$0xff]
    %v55 = vld [vmem:[%s1] sm:$0xff]
    %v56 = vld [vmem:[%s1 + $0x8] sm:$0xff]
    %v57 = vld [vmem:[%s1 + $0x10] sm:$0xff]
    %v58 = vld [vmem:[%s1 + $0x18] sm:$0xff]
    %v59 = vld [vmem:[%s2] sm:$0x1]
    %v61 = vlaneseq
    %v62 = vshrl.u32 %v61, 7
    %v63 = vsub.s32 0, %v62
    %v64 = vrot.slane %v59, %v63
    %vm66 = vcmask 261120
    %v68 = vsel %vm66, %v39, 0
    %v71 = vsel %vm66, %v40, 0
    %v74 = vsel %vm66, %v41, 0
    %v77 = vsel %vm66, %v42, 0
    %v80 = vsel %vm66, %v43, 0
    %v83 = vsel %vm66, %v44, 0
    %v86 = vsel %vm66, %v45, 0
    %v89 = vsel %vm66, %v46, 0
    %v92 = vsel %vm66, %v47, 0
    %v95 = vsel %vm66, %v48, 0
    %v98 = vsel %vm66, %v49, 0
    %v101 = vsel %vm66, %v50, 0
    %v104 = vsel %vm66, %v51, 0
    %v107 = vsel %vm66, %v52, 0
    %v110 = vsel %vm66, %v53, 0
    %v113 = vsel %vm66, %v54, 0
    %115 = vmatprep.subr.mxu0 0.0
    %116 = vmatpush1.msra.mxu0 %v55
    %117 = vmatprep.subr.mxu0 0.0
    %118 = vmatpush1.msra.mxu0 %v56
    %119 = vmatprep.subr.mxu0 0.0
    %120 = vmatpush1.msra.mxu0 %v57
    %121 = vmatprep.subr.mxu0 0.0
    %122 = vmatpush1.msra.mxu0 %v58
    %123 = vmatprep.subr.mxu0 0.0
    %124 = vmatpush1.msra.mxu0 0.0
    %125 = vmatprep.subr.mxu0 0.0
    %126 = vmatpush1.msra.mxu0 0.0
    %127 = vmatprep.subr.mxu0 0.0
    %128 = vmatpush1.msra.mxu0 0.0
    %129 = vmatprep.subr.mxu0 0.0
    %130 = vmatpush1.msra.mxu0 0.0
    %131 = vmatprep.subr.mxu0 0.0
    %132 = vmatpush1.msra.mxu0 0.0
    %133 = vmatprep.subr.mxu0 0.0
    %134 = vmatpush1.msra.mxu0 0.0
    %135 = vmatprep.subr.mxu0 0.0
    %136 = vmatpush1.msra.mxu0 0.0
    %137 = vmatprep.subr.mxu0 0.0
    %138 = vmatpush1.msra.mxu0 0.0
    %139 = vmatprep.subr.mxu0 0.0
    %140 = vmatpush1.msra.mxu0 0.0
    %141 = vmatprep.subr.mxu0 0.0
    %142 = vmatpush1.msra.mxu0 0.0
    %143 = vmatprep.subr.mxu0 0.0
    %144 = vmatpush1.msra.mxu0 0.0
    %145 = vmatprep.subr.mxu0 0.0
    %146 = vmatpush1.msra.mxu0 0.0
    %147 = vmatprep.subr.mxu0 0.0
    %148 = vmatpush1.msra.mxu0 0.0
    %149 = vmatprep.subr.mxu0 0.0
    %150 = vmatpush1.msra.mxu0 0.0
    %151 = vmatprep.subr.mxu0 0.0
    %152 = vmatpush1.msra.mxu0 0.0
    %153 = vmatprep.subr.mxu0 0.0
    %154 = vmatpush1.msra.mxu0 0.0
    %155 = vmatprep.subr.mxu0 0.0
    %156 = vmatpush1.msra.mxu0 0.0
    %157 = vmatprep.subr.mxu0 0.0
    %158 = vmatpush1.msra.mxu0 0.0
    %159 = vmatprep.subr.mxu0 0.0
    %160 = vmatpush1.msra.mxu0 0.0
    %161 = vmatprep.subr.mxu0 0.0
    %162 = vmatpush1.msra.mxu0 0.0
    %163 = vmatprep.subr.mxu0 0.0
    %164 = vmatpush1.msra.mxu0 0.0
    %165 = vmatprep.subr.mxu0 0.0
    %166 = vmatpush1.msra.mxu0 0.0
    %167 = vmatprep.subr.mxu0 0.0
    %168 = vmatpush1.msra.mxu0 0.0
    %169 = vmatprep.subr.mxu0 0.0
    %170 = vmatpush1.msra.mxu0 0.0
    %171 = vmatprep.subr.mxu0 0.0
    %172 = vmatpush1.msra.mxu0 0.0
    %173 = vmatprep.subr.mxu0 0.0
    %174 = vmatpush1.msra.mxu0 0.0
    %175 = vmatprep.subr.mxu0 0.0
    %176 = vmatpush1.msra.mxu0 0.0
    %177 = vmatprep.subr.mxu0 0.0
    %178 = vmatpush1.msra.mxu0 0.0
    %179 = vmatprep.mubr.f32.mxu0 0.0
    %180 = vmatmul.mubr.f32.gmra.mrb[0].mxu0 %v68
    %v181 = vpop.f32.mrb[0].mxu0
    %v182 = vadd.f32 %v64, %v181
    %v183 = vpop.f32.mrb[0].mxu0
    %184 = vmatprep.mubr.f32.mxu0 0.0
    %185 = vmatmul.mubr.f32.gmra.mrb[0].mxu0 %v71
    %v186 = vpop.f32.mrb[0].mxu0
    %v187 = vadd.f32 %v64, %v186
    %v188 = vpop.f32.mrb[0].mxu0
    %189 = vmatprep.mubr.f32.mxu0 0.0
    %190 = vmatmul.mubr.f32.gmra.mrb[0].mxu0 %v74
    %v191 = vpop.f32.mrb[0].mxu0
    %v192 = vadd.f32 %v64, %v191
    %v193 = vpop.f32.mrb[0].mxu0
    %194 = vmatprep.mubr.f32.mxu0 0.0
    %195 = vmatmul.mubr.f32.gmra.mrb[0].mxu0 %v77
    %v196 = vpop.f32.mrb[0].mxu0
    %v197 = vadd.f32 %v64, %v196
    %v198 = vpop.f32.mrb[0].mxu0
    %199 = vmatprep.mubr.f32.mxu0 0.0
    %200 = vmatmul.mubr.f32.gmra.mrb[0].mxu0 %v80
    %v201 = vpop.f32.mrb[0].mxu0
    %v202 = vadd.f32 %v64, %v201
    %v203 = vpop.f32.mrb[0].mxu0
    %204 = vmatprep.mubr.f32.mxu0 0.0
    %205 = vmatmul.mubr.f32.gmra.mrb[0].mxu0 %v83
    %v206 = vpop.f32.mrb[0].mxu0
    %v207 = vadd.f32 %v64, %v206
    %v208 = vpop.f32.mrb[0].mxu0
    %209 = vmatprep.mubr.f32.mxu0 0.0
    %210 = vmatmul.mubr.f32.gmra.mrb[0].mxu0 %v86
    %v211 = vpop.f32.mrb[0].mxu0
    %v212 = vadd.f32 %v64, %v211
    %v213 = vpop.f32.mrb[0].mxu0
    %214 = vmatprep.mubr.f32.mxu0 0.0
    %215 = vmatmul.mubr.f32.gmra.mrb[0].mxu0 %v89
    %v216 = vpop.f32.mrb[0].mxu0
    %v217 = vadd.f32 %v64, %v216
    %v218 = vpop.f32.mrb[0].mxu0
    %219 = vmatprep.mubr.f32.mxu0 0.0
    %220 = vmatmul.mubr.f32.gmra.mrb[0].mxu0 %v92
    %v221 = vpop.f32.mrb[0].mxu0
    %v222 = vadd.f32 %v64, %v221
    %v223 = vpop.f32.mrb[0].mxu0
    %224 = vmatprep.mubr.f32.mxu0 0.0
    %225 = vmatmul.mubr.f32.gmra.mrb[0].mxu0 %v95
    %v226 = vpop.f32.mrb[0].mxu0
    %v227 = vadd.f32 %v64, %v226
    %v228 = vpop.f32.mrb[0].mxu0
    %229 = vmatprep.mubr.f32.mxu0 0.0
    %230 = vmatmul.mubr.f32.gmra.mrb[0].mxu0 %v98
    %v231 = vpop.f32.mrb[0].mxu0
    %v232 = vadd.f32 %v64, %v231
    %v233 = vpop.f32.mrb[0].mxu0
    %234 = vmatprep.mubr.f32.mxu0 0.0
    %235 = vmatmul.mubr.f32.gmra.mrb[0].mxu0 %v101
    %v236 = vpop.f32.mrb[0].mxu0
    %v237 = vadd.f32 %v64, %v236
    %v238 = vpop.f32.mrb[0].mxu0
    %239 = vmatprep.mubr.f32.mxu0 0.0
    %240 = vmatmul.mubr.f32.gmra.mrb[0].mxu0 %v104
    %v241 = vpop.f32.mrb[0].mxu0
    %v242 = vadd.f32 %v64, %v241
    %v243 = vpop.f32.mrb[0].mxu0
    %244 = vmatprep.mubr.f32.mxu0 0.0
    %245 = vmatmul.mubr.f32.gmra.mrb[0].mxu0 %v107
    %v246 = vpop.f32.mrb[0].mxu0
    %v247 = vadd.f32 %v64, %v246
    %v248 = vpop.f32.mrb[0].mxu0
    %249 = vmatprep.mubr.f32.mxu0 0.0
    %250 = vmatmul.mubr.f32.gmra.mrb[0].mxu0 %v110
    %v251 = vpop.f32.mrb[0].mxu0
    %v252 = vadd.f32 %v64, %v251
    %v253 = vpop.f32.mrb[0].mxu0
    %254 = vmatprep.mubr.f32.mxu0 0.0
    %255 = vmatmul.mubr.f32.gmra.mrb[0].mxu0 %v113
    %v256 = vpop.f32.mrb[0].mxu0
    %v257 = vadd.f32 %v64, %v256
    %v258 = vpop.f32.mrb[0].mxu0
    %259 = vdwg.mxu0
    %v260 = vmax.f32 %v182, 0.0
    %v261 = vmax.f32 %v187, 0.0
    %v262 = vmax.f32 %v192, 0.0
    %v263 = vmax.f32 %v197, 0.0
    %v264 = vmax.f32 %v202, 0.0
    %v265 = vmax.f32 %v207, 0.0
    %v266 = vmax.f32 %v212, 0.0
    %v267 = vmax.f32 %v217, 0.0
    %v268 = vmax.f32 %v222, 0.0
    %v269 = vmax.f32 %v227, 0.0
    %v270 = vmax.f32 %v232, 0.0
    %v271 = vmax.f32 %v237, 0.0
    %v272 = vmax.f32 %v242, 0.0
    %v273 = vmax.f32 %v247, 0.0
    %v274 = vmax.f32 %v252, 0.0
    %v275 = vmax.f32 %v257, 0.0
    %vm276 = vcmask 457728
    %v277 = vsel %vm276, %v260, 0.0
    %v278 = vsel %vm276, %v261, 0.0
    %v279 = vadd.f32 %v277, %v278
    %v280 = vsel %vm276, %v262, 0.0
    %v281 = vadd.f32 %v279, %v280
    %v282 = vsel %vm276, %v263, 0.0
    %v283 = vadd.f32 %v281, %v282
    %v284 = vsel %vm276, %v264, 0.0
    %v285 = vadd.f32 %v283, %v284
    %v286 = vsel %vm276, %v265, 0.0
    %v287 = vadd.f32 %v285, %v286
    %v288 = vsel %vm276, %v266, 0.0
    %v289 = vadd.f32 %v287, %v288
    %v290 = vsel %vm276, %v267, 0.0
    %v291 = vadd.f32 %v289, %v290
    %v292 = vrot.slane %v291, 4
    %v293 = vadd.f32 %v291, %v292
    %v294 = vrot.slane %v293, 2
    %v295 = vadd.f32 %v293, %v294
    %v296 = vrot.slane %v295, 1
    %v297 = vadd.f32 %v295, %v296
    %v298 = vsel %vm276, %v268, 0.0
    %v299 = vsel %vm276, %v269, 0.0
    %v300 = vadd.f32 %v298, %v299
    %v301 = vsel %vm276, %v270, 0.0
    %v302 = vadd.f32 %v300, %v301
    %v303 = vsel %vm276, %v271, 0.0
    %v304 = vadd.f32 %v302, %v303
    %v305 = vsel %vm276, %v272, 0.0
    %v306 = vadd.f32 %v304, %v305
    %v307 = vsel %vm276, %v273, 0.0
    %v308 = vadd.f32 %v306, %v307
    %v309 = vsel %vm276, %v274, 0.0
    %v310 = vadd.f32 %v308, %v309
    %v311 = vsel %vm276, %v275, 0.0
    %v312 = vadd.f32 %v310, %v311
    %v313 = vrot.slane %v312, 4
    %v314 = vadd.f32 %v312, %v313
    %v315 = vrot.slane %v314, 2
    %v316 = vadd.f32 %v314, %v315
    %v317 = vrot.slane %v316, 1
    %v318 = vadd.f32 %v316, %v317
    %v319 = vmul.f32 %v297, 0.015625
    %v320 = vmul.f32 %v318, 0.015625
    %vm321 = vcmask 719872
    %322 = vst.msk [vmem:[#allocation2] sm:$0xff] %vm321, 0.0
    %vm323 = vcmask 713728
    %324 = vst.msk [vmem:[#allocation2 + $0x8] sm:$0x3] %vm323, 0.0
    %325 = vst.msk [vmem:[#allocation2 + $0x10] sm:$0xff] %vm321, 0.0
    %326 = vst.msk [vmem:[#allocation2 + $0x18] sm:$0x3] %vm323, 0.0
    %327 = vst.msk [vmem:[#allocation2 + $0x20] sm:$0xff] %vm321, 0.0
    %328 = vst.msk [vmem:[#allocation2 + $0x28] sm:$0x3] %vm323, 0.0
    %329 = vst.msk [vmem:[#allocation2 + $0x30] sm:$0xff] %vm321, 0.0
    %330 = vst.msk [vmem:[#allocation2 + $0x38] sm:$0x3] %vm323, 0.0
    %331 = vst.msk [vmem:[#allocation2 + $0x40] sm:$0xff] %vm321, 0.0
    %332 = vst.msk [vmem:[#allocation2 + $0x48] sm:$0x3] %vm323, 0.0
    %333 = vst.msk [vmem:[#allocation2 + $0x50] sm:$0xff] %vm321, 0.0
    %334 = vst.msk [vmem:[#allocation2 + $0x58] sm:$0x3] %vm323, 0.0
    %335 = vst.msk [vmem:[#allocation2 + $0x60] sm:$0xff] %vm321, 0.0
    %336 = vst.msk [vmem:[#allocation2 + $0x68] sm:$0x3] %vm323, 0.0
    %337 = vst.msk [vmem:[#allocation2 + $0x70] sm:$0xff] %vm321, 0.0
    %338 = vst.msk [vmem:[#allocation2 + $0x78] sm:$0x3] %vm323, 0.0
    %339 = vst.msk [vmem:[#allocation2 + $0x80] sm:$0xff] %vm321, 0.0
    %340 = vst.msk [vmem:[#allocation2 + $0x88] sm:$0x3] %vm323, 0.0
    %341 = vst.msk [vmem:[#allocation2 + $0x90] sm:$0xff] %vm321, 0.0
    %342 = vst.msk [vmem:[#allocation2 + $0x98] sm:$0x3] %vm323, 0.0
    %343 = vst.msk [vmem:[#allocation2 + $0xa0] sm:$0xff] %vm321, 0.0
    %344 = vst.msk [vmem:[#allocation2 + $0xa8] sm:$0x3] %vm323, 0.0
    %345 = vst.msk [vmem:[#allocation2 + $0xb0] sm:$0xff] %vm321, 0.0
    %346 = vst.msk [vmem:[#allocation2 + $0xb8] sm:$0x3] %vm323, 0.0
    %347 = vst.msk [vmem:[#allocation2 + $0xc0] sm:$0xff] %vm321, 0.0
    %348 = vst.msk [vmem:[#allocation2 + $0xc8] sm:$0x3] %vm323, 0.0
    %349 = vst.msk [vmem:[#allocation2 + $0xd0] sm:$0xff] %vm321, 0.0
    %350 = vst.msk [vmem:[#allocation2 + $0xd8] sm:$0x3] %vm323, 0.0
    %351 = vst.msk [vmem:[#allocation2 + $0xe0] sm:$0xff] %vm321, 0.0
    %352 = vst.msk [vmem:[#allocation2 + $0xe8] sm:$0x3] %vm323, 0.0
    %353 = vst.msk [vmem:[#allocation2 + $0xf0] sm:$0xff] %vm321, 0.0
    %354 = vst.msk [vmem:[#allocation2 + $0xf8] sm:$0x3] %vm323, 0.0
    %355 = vst.msk [vmem:[#allocation2 + $0x100] sm:$0xff] %vm321, 0.0
    %356 = vst.msk [vmem:[#allocation2 + $0x108] sm:$0x3] %vm323, 0.0
    %357 = vst.msk [vmem:[#allocation2 + $0x110] sm:$0xff] %vm321, 0.0
    %358 = vst.msk [vmem:[#allocation2 + $0x118] sm:$0x3] %vm323, 0.0
    %359 = vst.msk [vmem:[#allocation2 + $0x120] sm:$0xff] %vm321, 0.0
    %360 = vst.msk [vmem:[#allocation2 + $0x128] sm:$0x3] %vm323, 0.0
    %361 = vst.msk [vmem:[#allocation2 + $0x130] sm:$0xff] %vm321, 0.0
    %362 = vst.msk [vmem:[#allocation2 + $0x138] sm:$0x3] %vm323, 0.0
    %379 = vrot.lane.b32.xlu0 %v260, 32
    %v380 = vpop.permute.xlu0 %379
    %381 = vrot.lane.b32.xlu0 %v261, 32
    %v382 = vpop.permute.xlu0 %381
    %383 = vrot.lane.b32.xlu0 %v262, 32
    %v384 = vpop.permute.xlu0 %383
    %385 = vrot.lane.b32.xlu0 %v263, 32
    %v386 = vpop.permute.xlu0 %385
    %387 = vrot.lane.b32.xlu0 %v264, 32
    %v388 = vpop.permute.xlu0 %387
    %389 = vrot.lane.b32.xlu0 %v265, 32
    %v390 = vpop.permute.xlu0 %389
    %391 = vrot.lane.b32.xlu0 %v266, 32
    %v392 = vpop.permute.xlu0 %391
    %393 = vrot.lane.b32.xlu0 %v267, 32
    %v394 = vpop.permute.xlu0 %393
    %395 = vrot.lane.b32.xlu0 %v268, 32
    %v396 = vpop.permute.xlu0 %395
    %397 = vrot.lane.b32.xlu0 %v269, 32
    %v398 = vpop.permute.xlu0 %397
    %399 = vrot.lane.b32.xlu0 %v270, 32
    %v400 = vpop.permute.xlu0 %399
    %401 = vrot.lane.b32.xlu0 %v271, 32
    %v402 = vpop.permute.xlu0 %401
    %403 = vrot.lane.b32.xlu0 %v272, 32
    %v404 = vpop.permute.xlu0 %403
    %405 = vrot.lane.b32.xlu0 %v273, 32
    %v406 = vpop.permute.xlu0 %405
    %407 = vrot.lane.b32.xlu0 %v274, 32
    %v408 = vpop.permute.xlu0 %407
    %409 = vrot.lane.b32.xlu0 %v275, 32
    %v410 = vpop.permute.xlu0 %409
    %v427 = vsel %vm66, %v39, %v380
    %v428 = vsel %vm66, %v40, %v382
    %v429 = vsel %vm66, %v41, %v384
    %v430 = vsel %vm66, %v42, %v386
    %v431 = vsel %vm66, %v43, %v388
    %v432 = vsel %vm66, %v44, %v390
    %v433 = vsel %vm66, %v45, %v392
    %v434 = vsel %vm66, %v46, %v394
    %v435 = vsel %vm66, %v47, %v396
    %v436 = vsel %vm66, %v48, %v398
    %v437 = vsel %vm66, %v49, %v400
    %v438 = vsel %vm66, %v50, %v402
    %v439 = vsel %vm66, %v51, %v404
    %v440 = vsel %vm66, %v52, %v406
    %v441 = vsel %vm66, %v53, %v408
    %v442 = vsel %vm66, %v54, %v410
    %s443 = scalar_lea.vmem [#allocation2], 16
    %444 = vst.msk [vmem:[%s443 + $0x1] sm:$0xff] %vm321, %v427
    %445 = vst.msk [vmem:[%s443 + $0x11] sm:$0xff] %vm321, %v428
    %446 = vst.msk [vmem:[%s443 + $0x21] sm:$0xff] %vm321, %v429
    %447 = vst.msk [vmem:[%s443 + $0x31] sm:$0xff] %vm321, %v430
    %448 = vst.msk [vmem:[%s443 + $0x41] sm:$0xff] %vm321, %v431
    %449 = vst.msk [vmem:[%s443 + $0x51] sm:$0xff] %vm321, %v432
    %450 = vst.msk [vmem:[%s443 + $0x61] sm:$0xff] %vm321, %v433
    %451 = vst.msk [vmem:[%s443 + $0x71] sm:$0xff] %vm321, %v434
    %452 = vst.msk [vmem:[%s443 + $0xa1] sm:$0xff] %vm321, %v435
    %453 = vst.msk [vmem:[%s443 + $0xb1] sm:$0xff] %vm321, %v436
    %454 = vst.msk [vmem:[%s443 + $0xc1] sm:$0xff] %vm321, %v437
    %455 = vst.msk [vmem:[%s443 + $0xd1] sm:$0xff] %vm321, %v438
    %456 = vst.msk [vmem:[%s443 + $0xe1] sm:$0xff] %vm321, %v439
    %457 = vst.msk [vmem:[%s443 + $0xf1] sm:$0xff] %vm321, %v440
    %458 = vst.msk [vmem:[%s443 + $0x101] sm:$0xff] %vm321, %v441
    %459 = vst.msk [vmem:[%s443 + $0x111] sm:$0xff] %vm321, %v442
    %v460 = vld [vmem:[#allocation2] sm:$0xff]
    %v461 = vld [vmem:[#allocation2 + $0x10] sm:$0xff]
    %v462 = vld [vmem:[#allocation2 + $0x20] sm:$0xff]
    %v463 = vld [vmem:[#allocation2 + $0x30] sm:$0xff]
    %v464 = vld [vmem:[#allocation2 + $0x40] sm:$0xff]
    %v465 = vld [vmem:[#allocation2 + $0x50] sm:$0xff]
    %v466 = vld [vmem:[#allocation2 + $0x60] sm:$0xff]
    %v467 = vld [vmem:[#allocation2 + $0x70] sm:$0xff]
    %v468 = vld [vmem:[#allocation2 + $0xa0] sm:$0xff]
    %v469 = vld [vmem:[#allocation2 + $0xb0] sm:$0xff]
    %v470 = vld [vmem:[#allocation2 + $0xc0] sm:$0xff]
    %v471 = vld [vmem:[#allocation2 + $0xd0] sm:$0xff]
    %v472 = vld [vmem:[#allocation2 + $0xe0] sm:$0xff]
    %v473 = vld [vmem:[#allocation2 + $0xf0] sm:$0xff]
    %v474 = vld [vmem:[#allocation2 + $0x100] sm:$0xff]
    %v475 = vld [vmem:[#allocation2 + $0x110] sm:$0xff]
    %v476 = vld [vmem:[#allocation2 + $0x1] sm:$0xff]
    %v477 = vld [vmem:[#allocation2 + $0x11] sm:$0xff]
    %v478 = vld [vmem:[#allocation2 + $0x21] sm:$0xff]
    %v479 = vld [vmem:[#allocation2 + $0x31] sm:$0xff]
    %v480 = vld [vmem:[#allocation2 + $0x41] sm:$0xff]
    %v481 = vld [vmem:[#allocation2 + $0x51] sm:$0xff]
    %v482 = vld [vmem:[#allocation2 + $0x61] sm:$0xff]
    %v483 = vld [vmem:[#allocation2 + $0x71] sm:$0xff]
    %v484 = vld [vmem:[#allocation2 + $0xa1] sm:$0xff]
    %v485 = vld [vmem:[#allocation2 + $0xb1] sm:$0xff]
    %v486 = vld [vmem:[#allocation2 + $0xc1] sm:$0xff]
    %v487 = vld [vmem:[#allocation2 + $0xd1] sm:$0xff]
    %v488 = vld [vmem:[#allocation2 + $0xe1] sm:$0xff]
    %v489 = vld [vmem:[#allocation2 + $0xf1] sm:$0xff]
    %v490 = vld [vmem:[#allocation2 + $0x101] sm:$0xff]
    %v491 = vld [vmem:[#allocation2 + $0x111] sm:$0xff]
    %v492 = vld [vmem:[#allocation2 + $0x2] sm:$0xff]
    %v493 = vld [vmem:[#allocation2 + $0x12] sm:$0xff]
    %v494 = vld [vmem:[#allocation2 + $0x22] sm:$0xff]
    %v495 = vld [vmem:[#allocation2 + $0x32] sm:$0xff]
    %v496 = vld [vmem:[#allocation2 + $0x42] sm:$0xff]
    %v497 = vld [vmem:[#allocation2 + $0x52] sm:$0xff]
    %v498 = vld [vmem:[#allocation2 + $0x62] sm:$0xff]
    %v499 = vld [vmem:[#allocation2 + $0x72] sm:$0xff]
    %v500 = vld [vmem:[#allocation2 + $0xa2] sm:$0xff]
    %v501 = vld [vmem:[#allocation2 + $0xb2] sm:$0xff]
    %v502 = vld [vmem:[#allocation2 + $0xc2] sm:$0xff]
    %v503 = vld [vmem:[#allocation2 + $0xd2] sm:$0xff]
    %v504 = vld [vmem:[#allocation2 + $0xe2] sm:$0xff]
    %v505 = vld [vmem:[#allocation2 + $0xf2] sm:$0xff]
    %v506 = vld [vmem:[#allocation2 + $0x102] sm:$0xff]
    %v507 = vld [vmem:[#allocation2 + $0x112] sm:$0xff]
    %v508 = vld [vmem:[%s443] sm:$0xff]
    %v509 = vld [vmem:[%s443 + $0x10] sm:$0xff]
    %v510 = vld [vmem:[%s443 + $0x20] sm:$0xff]
    %v511 = vld [vmem:[%s443 + $0x30] sm:$0xff]
    %v512 = vld [vmem:[%s443 + $0x40] sm:$0xff]
    %v513 = vld [vmem:[%s443 + $0x50] sm:$0xff]
    %v514 = vld [vmem:[%s443 + $0x60] sm:$0xff]
    %v515 = vld [vmem:[%s443 + $0x70] sm:$0xff]
    %v516 = vld [vmem:[%s443 + $0xa0] sm:$0xff]
    %v517 = vld [vmem:[%s443 + $0xb0] sm:$0xff]
    %v518 = vld [vmem:[%s443 + $0xc0] sm:$0xff]
    %v519 = vld [vmem:[%s443 + $0xd0] sm:$0xff]
    %v520 = vld [vmem:[%s443 + $0xe0] sm:$0xff]
    %v521 = vld [vmem:[%s443 + $0xf0] sm:$0xff]
    %v522 = vld [vmem:[%s443 + $0x100] sm:$0xff]
    %v523 = vld [vmem:[%s443 + $0x110] sm:$0xff]
    %v524 = vld [vmem:[%s443 + $0x1] sm:$0xff]
    %v525 = vld [vmem:[%s443 + $0x11] sm:$0xff]
    %v526 = vld [vmem:[%s443 + $0x21] sm:$0xff]
    %v527 = vld [vmem:[%s443 + $0x31] sm:$0xff]
    %v528 = vld [vmem:[%s443 + $0x41] sm:$0xff]
    %v529 = vld [vmem:[%s443 + $0x51] sm:$0xff]
    %v530 = vld [vmem:[%s443 + $0x61] sm:$0xff]
    %v531 = vld [vmem:[%s443 + $0x71] sm:$0xff]
    %v532 = vld [vmem:[%s443 + $0xa1] sm:$0xff]
    %v533 = vld [vmem:[%s443 + $0xb1] sm:$0xff]
    %v534 = vld [vmem:[%s443 + $0xc1] sm:$0xff]
    %v535 = vld [vmem:[%s443 + $0xd1] sm:$0xff]
    %v536 = vld [vmem:[%s443 + $0xe1] sm:$0xff]
    %v537 = vld [vmem:[%s443 + $0xf1] sm:$0xff]
    %v538 = vld [vmem:[%s443 + $0x101] sm:$0xff]
    %v539 = vld [vmem:[%s443 + $0x111] sm:$0xff]
    %v540 = vld [vmem:[%s443 + $0x2] sm:$0xff]
    %v541 = vld [vmem:[%s443 + $0x12] sm:$0xff]
    %v542 = vld [vmem:[%s443 + $0x22] sm:$0xff]
    %v543 = vld [vmem:[%s443 + $0x32] sm:$0xff]
    %v544 = vld [vmem:[%s443 + $0x42] sm:$0xff]
    %v545 = vld [vmem:[%s443 + $0x52] sm:$0xff]
    %v546 = vld [vmem:[%s443 + $0x62] sm:$0xff]
    %v547 = vld [vmem:[%s443 + $0x72] sm:$0xff]
    %v548 = vld [vmem:[%s443 + $0xa2] sm:$0xff]
    %v549 = vld [vmem:[%s443 + $0xb2] sm:$0xff]
    %v550 = vld [vmem:[%s443 + $0xc2] sm:$0xff]
    %v551 = vld [vmem:[%s443 + $0xd2] sm:$0xff]
    %v552 = vld [vmem:[%s443 + $0xe2] sm:$0xff]
    %v553 = vld [vmem:[%s443 + $0xf2] sm:$0xff]
    %v554 = vld [vmem:[%s443 + $0x102] sm:$0xff]
    %v555 = vld [vmem:[%s443 + $0x112] sm:$0xff]
    %s556 = scalar_lea.vmem [#allocation2], 32
    %v557 = vld [vmem:[%s556] sm:$0xff]
    %v558 = vld [vmem:[%s556 + $0x10] sm:$0xff]
    %v559 = vld [vmem:[%s556 + $0x20] sm:$0xff]
    %v560 = vld [vmem:[%s556 + $0x30] sm:$0xff]
    %v561 = vld [vmem:[%s556 + $0x40] sm:$0xff]
    %v562 = vld [vmem:[%s556 + $0x50] sm:$0xff]
    %v563 = vld [vmem:[%s556 + $0x60] sm:$0xff]
    %v564 = vld [vmem:[%s556 + $0x70] sm:$0xff]
    %v565 = vld [vmem:[%s556 + $0xa0] sm:$0xff]
    %v566 = vld [vmem:[%s556 + $0xb0] sm:$0xff]
    %v567 = vld [vmem:[%s556 + $0xc0] sm:$0xff]
    %v568 = vld [vmem:[%s556 + $0xd0] sm:$0xff]
    %v569 = vld [vmem:[%s556 + $0xe0] sm:$0xff]
    %v570 = vld [vmem:[%s556 + $0xf0] sm:$0xff]
    %v571 = vld [vmem:[%s556 + $0x100] sm:$0xff]
    %v572 = vld [vmem:[%s556 + $0x110] sm:$0xff]
    %v573 = vld [vmem:[%s556 + $0x1] sm:$0xff]
    %v574 = vld [vmem:[%s556 + $0x11] sm:$0xff]
    %v575 = vld [vmem:[%s556 + $0x21] sm:$0xff]
    %v576 = vld [vmem:[%s556 + $0x31] sm:$0xff]
    %v577 = vld [vmem:[%s556 + $0x41] sm:$0xff]
    %v578 = vld [vmem:[%s556 + $0x51] sm:$0xff]
    %v579 = vld [vmem:[%s556 + $0x61] sm:$0xff]
    %v580 = vld [vmem:[%s556 + $0x71] sm:$0xff]
    %v581 = vld [vmem:[%s556 + $0xa1] sm:$0xff]
    %v582 = vld [vmem:[%s556 + $0xb1] sm:$0xff]
    %v583 = vld [vmem:[%s556 + $0xc1] sm:$0xff]
    %v584 = vld [vmem:[%s556 + $0xd1] sm:$0xff]
    %v585 = vld [vmem:[%s556 + $0xe1] sm:$0xff]
    %v586 = vld [vmem:[%s556 + $0xf1] sm:$0xff]
    %v587 = vld [vmem:[%s556 + $0x101] sm:$0xff]
    %v588 = vld [vmem:[%s556 + $0x111] sm:$0xff]
    %v589 = vld [vmem:[%s556 + $0x2] sm:$0xff]
    %v590 = vld [vmem:[%s556 + $0x12] sm:$0xff]
    %v591 = vld [vmem:[%s556 + $0x22] sm:$0xff]
    %v592 = vld [vmem:[%s556 + $0x32] sm:$0xff]
    %v593 = vld [vmem:[%s556 + $0x42] sm:$0xff]
    %v594 = vld [vmem:[%s556 + $0x52] sm:$0xff]
    %v595 = vld [vmem:[%s556 + $0x62] sm:$0xff]
    %v596 = vld [vmem:[%s556 + $0x72] sm:$0xff]
    %v597 = vld [vmem:[%s556 + $0xa2] sm:$0xff]
    %v598 = vld [vmem:[%s556 + $0xb2] sm:$0xff]
    %v599 = vld [vmem:[%s556 + $0xc2] sm:$0xff]
    %v600 = vld [vmem:[%s556 + $0xd2] sm:$0xff]
    %v601 = vld [vmem:[%s556 + $0xe2] sm:$0xff]
    %v602 = vld [vmem:[%s556 + $0xf2] sm:$0xff]
    %v603 = vld [vmem:[%s556 + $0x102] sm:$0xff]
    %v604 = vld [vmem:[%s556 + $0x112] sm:$0xff]
    %621 = vrot.lane.b32.xlu0 %v476, 88
    %v622 = vpop.permute.xlu0 %621
    %623 = vrot.lane.b32.xlu0 %v477, 88
    %v624 = vpop.permute.xlu0 %623
    %625 = vrot.lane.b32.xlu0 %v478, 88
    %v626 = vpop.permute.xlu0 %625
    %627 = vrot.lane.b32.xlu0 %v479, 88
    %v628 = vpop.permute.xlu0 %627
    %629 = vrot.lane.b32.xlu0 %v480, 88
    %v630 = vpop.permute.xlu0 %629
    %631 = vrot.lane.b32.xlu0 %v481, 88
    %v632 = vpop.permute.xlu0 %631
    %633 = vrot.lane.b32.xlu0 %v482, 88
    %v634 = vpop.permute.xlu0 %633
    %635 = vrot.lane.b32.xlu0 %v483, 88
    %v636 = vpop.permute.xlu0 %635
    %637 = vrot.lane.b32.xlu0 %v484, 88
    %v638 = vpop.permute.xlu0 %637
    %639 = vrot.lane.b32.xlu0 %v485, 88
    %v640 = vpop.permute.xlu0 %639
    %641 = vrot.lane.b32.xlu0 %v486, 88
    %v642 = vpop.permute.xlu0 %641
    %643 = vrot.lane.b32.xlu0 %v487, 88
    %v644 = vpop.permute.xlu0 %643
    %645 = vrot.lane.b32.xlu0 %v488, 88
    %v646 = vpop.permute.xlu0 %645
    %647 = vrot.lane.b32.xlu0 %v489, 88
    %v648 = vpop.permute.xlu0 %647
    %649 = vrot.lane.b32.xlu0 %v490, 88
    %v650 = vpop.permute.xlu0 %649
    %651 = vrot.lane.b32.xlu0 %v491, 88
    %v652 = vpop.permute.xlu0 %651
    %685 = vrot.lane.b32.xlu0 %v492, 48
    %v686 = vpop.permute.xlu0 %685
    %687 = vrot.lane.b32.xlu0 %v493, 48
    %v688 = vpop.permute.xlu0 %687
    %689 = vrot.lane.b32.xlu0 %v494, 48
    %v690 = vpop.permute.xlu0 %689
    %691 = vrot.lane.b32.xlu0 %v495, 48
    %v692 = vpop.permute.xlu0 %691
    %693 = vrot.lane.b32.xlu0 %v496, 48
    %v694 = vpop.permute.xlu0 %693
    %695 = vrot.lane.b32.xlu0 %v497, 48
    %v696 = vpop.permute.xlu0 %695
    %697 = vrot.lane.b32.xlu0 %v498, 48
    %v698 = vpop.permute.xlu0 %697
    %699 = vrot.lane.b32.xlu0 %v499, 48
    %v700 = vpop.permute.xlu0 %699
    %701 = vrot.lane.b32.xlu0 %v500, 48
    %v702 = vpop.permute.xlu0 %701
    %703 = vrot.lane.b32.xlu0 %v501, 48
    %v704 = vpop.permute.xlu0 %703
    %705 = vrot.lane.b32.xlu0 %v502, 48
    %v706 = vpop.permute.xlu0 %705
    %707 = vrot.lane.b32.xlu0 %v503, 48
    %v708 = vpop.permute.xlu0 %707
    %709 = vrot.lane.b32.xlu0 %v504, 48
    %v710 = vpop.permute.xlu0 %709
    %711 = vrot.lane.b32.xlu0 %v505, 48
    %v712 = vpop.permute.xlu0 %711
    %713 = vrot.lane.b32.xlu0 %v506, 48
    %v714 = vpop.permute.xlu0 %713
    %715 = vrot.lane.b32.xlu0 %v507, 48
    %v716 = vpop.permute.xlu0 %715
    %749 = vrot.lane.b32.xlu0 %v508, 8
    %v750 = vpop.permute.xlu0 %749
    %751 = vrot.lane.b32.xlu0 %v509, 8
    %v752 = vpop.permute.xlu0 %751
    %753 = vrot.lane.b32.xlu0 %v510, 8
    %v754 = vpop.permute.xlu0 %753
    %755 = vrot.lane.b32.xlu0 %v511, 8
    %v756 = vpop.permute.xlu0 %755
    %757 = vrot.lane.b32.xlu0 %v512, 8
    %v758 = vpop.permute.xlu0 %757
    %759 = vrot.lane.b32.xlu0 %v513, 8
    %v760 = vpop.permute.xlu0 %759
    %761 = vrot.lane.b32.xlu0 %v514, 8
    %v762 = vpop.permute.xlu0 %761
    %763 = vrot.lane.b32.xlu0 %v515, 8
    %v764 = vpop.permute.xlu0 %763
    %765 = vrot.lane.b32.xlu0 %v516, 8
    %v766 = vpop.permute.xlu0 %765
    %767 = vrot.lane.b32.xlu0 %v517, 8
    %v768 = vpop.permute.xlu0 %767
    %769 = vrot.lane.b32.xlu0 %v518, 8
    %v770 = vpop.permute.xlu0 %769
    %771 = vrot.lane.b32.xlu0 %v519, 8
    %v772 = vpop.permute.xlu0 %771
    %773 = vrot.lane.b32.xlu0 %v520, 8
    %v774 = vpop.permute.xlu0 %773
    %775 = vrot.lane.b32.xlu0 %v521, 8
    %v776 = vpop.permute.xlu0 %775
    %777 = vrot.lane.b32.xlu0 %v522, 8
    %v778 = vpop.permute.xlu0 %777
    %779 = vrot.lane.b32.xlu0 %v523, 8
    %v780 = vpop.permute.xlu0 %779
    %813 = vrot.lane.b32.xlu0 %v524, 96
    %v814 = vpop.permute.xlu0 %813
    %815 = vrot.lane.b32.xlu0 %v525, 96
    %v816 = vpop.permute.xlu0 %815
    %817 = vrot.lane.b32.xlu0 %v526, 96
    %v818 = vpop.permute.xlu0 %817
    %819 = vrot.lane.b32.xlu0 %v527, 96
    %v820 = vpop.permute.xlu0 %819
    %821 = vrot.lane.b32.xlu0 %v528, 96
    %v822 = vpop.permute.xlu0 %821
    %823 = vrot.lane.b32.xlu0 %v529, 96
    %v824 = vpop.permute.xlu0 %823
    %825 = vrot.lane.b32.xlu0 %v530, 96
    %v826 = vpop.permute.xlu0 %825
    %827 = vrot.lane.b32.xlu0 %v531, 96
    %v828 = vpop.permute.xlu0 %827
    %829 = vrot.lane.b32.xlu0 %v532, 96
    %v830 = vpop.permute.xlu0 %829
    %831 = vrot.lane.b32.xlu0 %v533, 96
    %v832 = vpop.permute.xlu0 %831
    %833 = vrot.lane.b32.xlu0 %v534, 96
    %v834 = vpop.permute.xlu0 %833
    %835 = vrot.lane.b32.xlu0 %v535, 96
    %v836 = vpop.permute.xlu0 %835
    %837 = vrot.lane.b32.xlu0 %v536, 96
    %v838 = vpop.permute.xlu0 %837
    %839 = vrot.lane.b32.xlu0 %v537, 96
    %v840 = vpop.permute.xlu0 %839
    %841 = vrot.lane.b32.xlu0 %v538, 96
    %v842 = vpop.permute.xlu0 %841
    %843 = vrot.lane.b32.xlu0 %v539, 96
    %v844 = vpop.permute.xlu0 %843
    %877 = vrot.lane.b32.xlu0 %v540, 56
    %v878 = vpop.permute.xlu0 %877
    %879 = vrot.lane.b32.xlu0 %v541, 56
    %v880 = vpop.permute.xlu0 %879
    %881 = vrot.lane.b32.xlu0 %v542, 56
    %v882 = vpop.permute.xlu0 %881
    %883 = vrot.lane.b32.xlu0 %v543, 56
    %v884 = vpop.permute.xlu0 %883
    %885 = vrot.lane.b32.xlu0 %v544, 56
    %v886 = vpop.permute.xlu0 %885
    %887 = vrot.lane.b32.xlu0 %v545, 56
    %v888 = vpop.permute.xlu0 %887
    %889 = vrot.lane.b32.xlu0 %v546, 56
    %v890 = vpop.permute.xlu0 %889
    %891 = vrot.lane.b32.xlu0 %v547, 56
    %v892 = vpop.permute.xlu0 %891
    %893 = vrot.lane.b32.xlu0 %v548, 56
    %v894 = vpop.permute.xlu0 %893
    %895 = vrot.lane.b32.xlu0 %v549, 56
    %v896 = vpop.permute.xlu0 %895
    %897 = vrot.lane.b32.xlu0 %v550, 56
    %v898 = vpop.permute.xlu0 %897
    %899 = vrot.lane.b32.xlu0 %v551, 56
    %v900 = vpop.permute.xlu0 %899
    %901 = vrot.lane.b32.xlu0 %v552, 56
    %v902 = vpop.permute.xlu0 %901
    %903 = vrot.lane.b32.xlu0 %v553, 56
    %v904 = vpop.permute.xlu0 %903
    %905 = vrot.lane.b32.xlu0 %v554, 56
    %v906 = vpop.permute.xlu0 %905
    %907 = vrot.lane.b32.xlu0 %v555, 56
    %v908 = vpop.permute.xlu0 %907
    %941 = vrot.lane.b32.xlu0 %v557, 16
    %v942 = vpop.permute.xlu0 %941
    %943 = vrot.lane.b32.xlu0 %v558, 16
    %v944 = vpop.permute.xlu0 %943
    %945 = vrot.lane.b32.xlu0 %v559, 16
    %v946 = vpop.permute.xlu0 %945
    %947 = vrot.lane.b32.xlu0 %v560, 16
    %v948 = vpop.permute.xlu0 %947
    %949 = vrot.lane.b32.xlu0 %v561, 16
    %v950 = vpop.permute.xlu0 %949
    %951 = vrot.lane.b32.xlu0 %v562, 16
    %v952 = vpop.permute.xlu0 %951
    %953 = vrot.lane.b32.xlu0 %v563, 16
    %v954 = vpop.permute.xlu0 %953
    %955 = vrot.lane.b32.xlu0 %v564, 16
    %v956 = vpop.permute.xlu0 %955
    %957 = vrot.lane.b32.xlu0 %v565, 16
    %v958 = vpop.permute.xlu0 %957
    %959 = vrot.lane.b32.xlu0 %v566, 16
    %v960 = vpop.permute.xlu0 %959
    %961 = vrot.lane.b32.xlu0 %v567, 16
    %v962 = vpop.permute.xlu0 %961
    %963 = vrot.lane.b32.xlu0 %v568, 16
    %v964 = vpop.permute.xlu0 %963
    %965 = vrot.lane.b32.xlu0 %v569, 16
    %v966 = vpop.permute.xlu0 %965
    %967 = vrot.lane.b32.xlu0 %v570, 16
    %v968 = vpop.permute.xlu0 %967
    %969 = vrot.lane.b32.xlu0 %v571, 16
    %v970 = vpop.permute.xlu0 %969
    %971 = vrot.lane.b32.xlu0 %v572, 16
    %v972 = vpop.permute.xlu0 %971
    %1005 = vrot.lane.b32.xlu0 %v573, 104
    %v1006 = vpop.permute.xlu0 %1005
    %1007 = vrot.lane.b32.xlu0 %v574, 104
    %v1008 = vpop.permute.xlu0 %1007
    %1009 = vrot.lane.b32.xlu0 %v575, 104
    %v1010 = vpop.permute.xlu0 %1009
    %1011 = vrot.lane.b32.xlu0 %v576, 104
    %v1012 = vpop.permute.xlu0 %1011
    %1013 = vrot.lane.b32.xlu0 %v577, 104
    %v1014 = vpop.permute.xlu0 %1013
    %1015 = vrot.lane.b32.xlu0 %v578, 104
    %v1016 = vpop.permute.xlu0 %1015
    %1017 = vrot.lane.b32.xlu0 %v579, 104
    %v1018 = vpop.permute.xlu0 %1017
    %1019 = vrot.lane.b32.xlu0 %v580, 104
    %v1020 = vpop.permute.xlu0 %1019
    %1021 = vrot.lane.b32.xlu0 %v581, 104
    %v1022 = vpop.permute.xlu0 %1021
    %1023 = vrot.lane.b32.xlu0 %v582, 104
    %v1024 = vpop.permute.xlu0 %1023
    %1025 = vrot.lane.b32.xlu0 %v583, 104
    %v1026 = vpop.permute.xlu0 %1025
    %1027 = vrot.lane.b32.xlu0 %v584, 104
    %v1028 = vpop.permute.xlu0 %1027
    %1029 = vrot.lane.b32.xlu0 %v585, 104
    %v1030 = vpop.permute.xlu0 %1029
    %1031 = vrot.lane.b32.xlu0 %v586, 104
    %v1032 = vpop.permute.xlu0 %1031
    %1033 = vrot.lane.b32.xlu0 %v587, 104
    %v1034 = vpop.permute.xlu0 %1033
    %1035 = vrot.lane.b32.xlu0 %v588, 104
    %v1036 = vpop.permute.xlu0 %1035
    %1069 = vrot.lane.b32.xlu0 %v589, 64
    %v1070 = vpop.permute.xlu0 %1069
    %1071 = vrot.lane.b32.xlu0 %v590, 64
    %v1072 = vpop.permute.xlu0 %1071
    %1073 = vrot.lane.b32.xlu0 %v591, 64
    %v1074 = vpop.permute.xlu0 %1073
    %1075 = vrot.lane.b32.xlu0 %v592, 64
    %v1076 = vpop.permute.xlu0 %1075
    %1077 = vrot.lane.b32.xlu0 %v593, 64
    %v1078 = vpop.permute.xlu0 %1077
    %1079 = vrot.lane.b32.xlu0 %v594, 64
    %v1080 = vpop.permute.xlu0 %1079
    %1081 = vrot.lane.b32.xlu0 %v595, 64
    %v1082 = vpop.permute.xlu0 %1081
    %1083 = vrot.lane.b32.xlu0 %v596, 64
    %v1084 = vpop.permute.xlu0 %1083
    %1085 = vrot.lane.b32.xlu0 %v597, 64
    %v1086 = vpop.permute.xlu0 %1085
    %1087 = vrot.lane.b32.xlu0 %v598, 64
    %v1088 = vpop.permute.xlu0 %1087
    %1089 = vrot.lane.b32.xlu0 %v599, 64
    %v1090 = vpop.permute.xlu0 %1089
    %1091 = vrot.lane.b32.xlu0 %v600, 64
    %v1092 = vpop.permute.xlu0 %1091
    %1093 = vrot.lane.b32.xlu0 %v601, 64
    %v1094 = vpop.permute.xlu0 %1093
    %1095 = vrot.lane.b32.xlu0 %v602, 64
    %v1096 = vpop.permute.xlu0 %1095
    %1097 = vrot.lane.b32.xlu0 %v603, 64
    %v1098 = vpop.permute.xlu0 %1097
    %1099 = vrot.lane.b32.xlu0 %v604, 64
    %v1100 = vpop.permute.xlu0 %1099
    %v1117 = vsel %vm321, %v460, %v622
    %v1118 = vsel %vm321, %v461, %v624
    %v1119 = vsel %vm321, %v462, %v626
    %v1120 = vsel %vm321, %v463, %v628
    %v1121 = vsel %vm321, %v464, %v630
    %v1122 = vsel %vm321, %v465, %v632
    %v1123 = vsel %vm321, %v466, %v634
    %v1124 = vsel %vm321, %v467, %v636
    %v1125 = vsel %vm321, %v468, %v638
    %v1126 = vsel %vm321, %v469, %v640
    %v1127 = vsel %vm321, %v470, %v642
    %v1128 = vsel %vm321, %v471, %v644
    %v1129 = vsel %vm321, %v472, %v646
    %v1130 = vsel %vm321, %v473, %v648
    %v1131 = vsel %vm321, %v474, %v650
    %v1132 = vsel %vm321, %v475, %v652
    %vm1133 = vcmask 392192
    %v1134 = vsel %vm1133, %v622, %v686
    %v1135 = vsel %vm1133, %v624, %v688
    %v1136 = vsel %vm1133, %v626, %v690
    %v1137 = vsel %vm1133, %v628, %v692
    %v1138 = vsel %vm1133, %v630, %v694
    %v1139 = vsel %vm1133, %v632, %v696
    %v1140 = vsel %vm1133, %v634, %v698
    %v1141 = vsel %vm1133, %v636, %v700
    %v1142 = vsel %vm1133, %v638, %v702
    %v1143 = vsel %vm1133, %v640, %v704
    %v1144 = vsel %vm1133, %v642, %v706
    %v1145 = vsel %vm1133, %v644, %v708
    %v1146 = vsel %vm1133, %v646, %v710
    %v1147 = vsel %vm1133, %v648, %v712
    %v1148 = vsel %vm1133, %v650, %v714
    %v1149 = vsel %vm1133, %v652, %v716
    %vm1150 = vcmask 64512
    %v1151 = vsel %vm1150, %v686, %v750
    %v1152 = vsel %vm1150, %v688, %v752
    %v1153 = vsel %vm1150, %v690, %v754
    %v1154 = vsel %vm1150, %v692, %v756
    %v1155 = vsel %vm1150, %v694, %v758
    %v1156 = vsel %vm1150, %v696, %v760
    %v1157 = vsel %vm1150, %v698, %v762
    %v1158 = vsel %vm1150, %v700, %v764
    %v1159 = vsel %vm1150, %v702, %v766
    %v1160 = vsel %vm1150, %v704, %v768
    %v1161 = vsel %vm1150, %v706, %v770
    %v1162 = vsel %vm1150, %v708, %v772
    %v1163 = vsel %vm1150, %v710, %v774
    %v1164 = vsel %vm1150, %v712, %v776
    %v1165 = vsel %vm1150, %v714, %v778
    %v1166 = vsel %vm1150, %v716, %v780
    %vm1167 = vcmask 785408
    %v1168 = vsel %vm1167, %v1151, %v814
    %v1169 = vsel %vm1167, %v1152, %v816
    %v1170 = vsel %vm1167, %v1153, %v818
    %v1171 = vsel %vm1167, %v1154, %v820
    %v1172 = vsel %vm1167, %v1155, %v822
    %v1173 = vsel %vm1167, %v1156, %v824
    %v1174 = vsel %vm1167, %v1157, %v826
    %v1175 = vsel %vm1167, %v1158, %v828
    %v1176 = vsel %vm1167, %v1159, %v830
    %v1177 = vsel %vm1167, %v1160, %v832
    %v1178 = vsel %vm1167, %v1161, %v834
    %v1179 = vsel %vm1167, %v1162, %v836
    %v1180 = vsel %vm1167, %v1163, %v838
    %v1181 = vsel %vm1167, %v1164, %v840
    %v1182 = vsel %vm1167, %v1165, %v842
    %v1183 = vsel %vm1167, %v1166, %v844
    %v1184 = vsel %vm276, %v814, %v878
    %v1185 = vsel %vm276, %v816, %v880
    %v1186 = vsel %vm276, %v818, %v882
    %v1187 = vsel %vm276, %v820, %v884
    %v1188 = vsel %vm276, %v822, %v886
    %v1189 = vsel %vm276, %v824, %v888
    %v1190 = vsel %vm276, %v826, %v890
    %v1191 = vsel %vm276, %v828, %v892
    %v1192 = vsel %vm276, %v830, %v894
    %v1193 = vsel %vm276, %v832, %v896
    %v1194 = vsel %vm276, %v834, %v898
    %v1195 = vsel %vm276, %v836, %v900
    %v1196 = vsel %vm276, %v838, %v902
    %v1197 = vsel %vm276, %v840, %v904
    %v1198 = vsel %vm276, %v842, %v906
    %v1199 = vsel %vm276, %v844, %v908
    %vm1200 = vcmask 130048
    %v1201 = vsel %vm1200, %v878, %v942
    %v1202 = vsel %vm1200, %v880, %v944
    %v1203 = vsel %vm1200, %v882, %v946
    %v1204 = vsel %vm1200, %v884, %v948
    %v1205 = vsel %vm1200, %v886, %v950
    %v1206 = vsel %vm1200, %v888, %v952
    %v1207 = vsel %vm1200, %v890, %v954
    %v1208 = vsel %vm1200, %v892, %v956
    %v1209 = vsel %vm1200, %v894, %v958
    %v1210 = vsel %vm1200, %v896, %v960
    %v1211 = vsel %vm1200, %v898, %v962
    %v1212 = vsel %vm1200, %v900, %v964
    %v1213 = vsel %vm1200, %v902, %v966
    %v1214 = vsel %vm1200, %v904, %v968
    %v1215 = vsel %vm1200, %v906, %v970
    %v1216 = vsel %vm1200, %v908, %v972
    %vm1217 = vcmask 850944
    %v1218 = vsel %vm1217, %v1201, %v1006
    %v1219 = vsel %vm1217, %v1202, %v1008
    %v1220 = vsel %vm1217, %v1203, %v1010
    %v1221 = vsel %vm1217, %v1204, %v1012
    %v1222 = vsel %vm1217, %v1205, %v1014
    %v1223 = vsel %vm1217, %v1206, %v1016
    %v1224 = vsel %vm1217, %v1207, %v1018
    %v1225 = vsel %vm1217, %v1208, %v1020
    %v1226 = vsel %vm1217, %v1209, %v1022
    %v1227 = vsel %vm1217, %v1210, %v1024
    %v1228 = vsel %vm1217, %v1211, %v1026
    %v1229 = vsel %vm1217, %v1212, %v1028
    %v1230 = vsel %vm1217, %v1213, %v1030
    %v1231 = vsel %vm1217, %v1214, %v1032
    %v1232 = vsel %vm1217, %v1215, %v1034
    %v1233 = vsel %vm1217, %v1216, %v1036
    %vm1234 = vcmask 523264
    %v1235 = vsel %vm1234, %v1006, %v1070
    %v1236 = vsel %vm1234, %v1008, %v1072
    %v1237 = vsel %vm1234, %v1010, %v1074
    %v1238 = vsel %vm1234, %v1012, %v1076
    %v1239 = vsel %vm1234, %v1014, %v1078
    %v1240 = vsel %vm1234, %v1016, %v1080
    %v1241 = vsel %vm1234, %v1018, %v1082
    %v1242 = vsel %vm1234, %v1020, %v1084
    %v1243 = vsel %vm1234, %v1022, %v1086
    %v1244 = vsel %vm1234, %v1024, %v1088
    %v1245 = vsel %vm1234, %v1026, %v1090
    %v1246 = vsel %vm1234, %v1028, %v1092
    %v1247 = vsel %vm1234, %v1030, %v1094
    %v1248 = vsel %vm1234, %v1032, %v1096
    %v1249 = vsel %vm1234, %v1034, %v1098
    %v1250 = vsel %vm1234, %v1036, %v1100
    %v1251 = vld [vmem:[%s3] sm:$0xff]
    %v1252 = vld [vmem:[%s3 + $0x8] sm:$0xff]
    %v1253 = vld [vmem:[%s3 + $0x10] sm:$0xff]
    %v1254 = vld [vmem:[%s3 + $0x18] sm:$0xff]
    %v1255 = vld [vmem:[%s3 + $0x20] sm:$0xff]
    %v1256 = vld [vmem:[%s3 + $0x28] sm:$0xff]
    %v1257 = vld [vmem:[%s3 + $0x30] sm:$0xff]
    %v1258 = vld [vmem:[%s3 + $0x38] sm:$0xff]
    %v1259 = vld [vmem:[%s3 + $0x40] sm:$0xff]
    %v1260 = vld [vmem:[%s3 + $0x48] sm:$0xff]
    %v1261 = vld [vmem:[%s3 + $0x50] sm:$0xff]
    %v1262 = vld [vmem:[%s3 + $0x58] sm:$0xff]
    %v1263 = vld [vmem:[%s3 + $0x60] sm:$0xff]
    %v1264 = vld [vmem:[%s3 + $0x68] sm:$0xff]
    %v1265 = vld [vmem:[%s3 + $0x70] sm:$0xff]
    %v1266 = vld [vmem:[%s3 + $0x78] sm:$0xff]
    %v1267 = vld [vmem:[%s3 + $0x80] sm:$0xff]
    %v1268 = vld [vmem:[%s3 + $0x88] sm:$0xff]
    %v1269 = vld [vmem:[%s3 + $0x90] sm:$0xff]
    %v1270 = vld [vmem:[%s3 + $0x98] sm:$0xff]
    %v1271 = vld [vmem:[%s3 + $0xa0] sm:$0xff]
    %v1272 = vld [vmem:[%s3 + $0xa8] sm:$0xff]
    %v1273 = vld [vmem:[%s3 + $0xb0] sm:$0xff]
    %v1274 = vld [vmem:[%s3 + $0xb8] sm:$0xff]
    %v1275 = vld [vmem:[%s3 + $0xc0] sm:$0xff]
    %v1276 = vld [vmem:[%s3 + $0xc8] sm:$0xff]
    %v1277 = vld [vmem:[%s3 + $0xd0] sm:$0xff]
    %v1278 = vld [vmem:[%s3 + $0xd8] sm:$0xff]
    %v1279 = vld [vmem:[%s3 + $0xe0] sm:$0xff]
    %v1280 = vld [vmem:[%s3 + $0xe8] sm:$0xff]
    %v1281 = vld [vmem:[%s3 + $0xf0] sm:$0xff]
    %v1282 = vld [vmem:[%s3 + $0xf8] sm:$0xff]
    %v1283 = vld [vmem:[%s3 + $0x100] sm:$0xff]
    %v1284 = vld [vmem:[%s3 + $0x108] sm:$0xff]
    %v1285 = vld [vmem:[%s3 + $0x110] sm:$0xff]
    %v1286 = vld [vmem:[%s3 + $0x118] sm:$0xff]
    %v1287 = vld [vmem:[%s3 + $0x120] sm:$0xff]
    %v1288 = vld [vmem:[%s3 + $0x128] sm:$0xff]
    %v1289 = vld [vmem:[%s3 + $0x130] sm:$0xff]
    %v1290 = vld [vmem:[%s3 + $0x138] sm:$0xff]
    %v1291 = vld [vmem:[%s3 + $0x140] sm:$0xff]
    %v1292 = vld [vmem:[%s3 + $0x148] sm:$0xff]
    %v1293 = vld [vmem:[%s3 + $0x150] sm:$0xff]
    %v1294 = vld [vmem:[%s3 + $0x158] sm:$0xff]
    %v1295 = vld [vmem:[%s3 + $0x160] sm:$0xff]
    %v1296 = vld [vmem:[%s3 + $0x168] sm:$0xff]
    %v1297 = vld [vmem:[%s3 + $0x170] sm:$0xff]
    %v1298 = vld [vmem:[%s3 + $0x178] sm:$0xff]
    %v1299 = vld [vmem:[%s3 + $0x180] sm:$0xff]
    %v1300 = vld [vmem:[%s3 + $0x188] sm:$0xff]
    %v1301 = vld [vmem:[%s3 + $0x190] sm:$0xff]
    %v1302 = vld [vmem:[%s3 + $0x198] sm:$0xff]
    %v1303 = vld [vmem:[%s3 + $0x1a0] sm:$0xff]
    %v1304 = vld [vmem:[%s3 + $0x1a8] sm:$0xff]
    %v1305 = vld [vmem:[%s3 + $0x1b0] sm:$0xff]
    %v1306 = vld [vmem:[%s3 + $0x1b8] sm:$0xff]
    %v1307 = vld [vmem:[%s3 + $0x1c0] sm:$0xff]
    %v1308 = vld [vmem:[%s3 + $0x1c8] sm:$0xff]
    %v1309 = vld [vmem:[%s3 + $0x1d0] sm:$0xff]
    %v1310 = vld [vmem:[%s3 + $0x1d8] sm:$0xff]
    %v1311 = vld [vmem:[%s3 + $0x1e0] sm:$0xff]
    %v1312 = vld [vmem:[%s3 + $0x1e8] sm:$0xff]
    %v1313 = vld [vmem:[%s3 + $0x1f0] sm:$0xff]
    %v1314 = vld [vmem:[%s3 + $0x1f8] sm:$0xff]
    %v1315 = vld [vmem:[%s3 + $0x200] sm:$0xff]
    %v1316 = vld [vmem:[%s3 + $0x208] sm:$0xff]
    %v1317 = vld [vmem:[%s3 + $0x210] sm:$0xff]
    %v1318 = vld [vmem:[%s3 + $0x218] sm:$0xff]
    %v1319 = vld [vmem:[%s3 + $0x220] sm:$0xff]
    %v1320 = vld [vmem:[%s3 + $0x228] sm:$0xff]
    %v1321 = vld [vmem:[%s3 + $0x230] sm:$0xff]
    %v1322 = vld [vmem:[%s3 + $0x238] sm:$0xff]
    %v1323 = vld [vmem:[%s3 + $0x240] sm:$0xff]
    %v1324 = vld [vmem:[%s3 + $0x248] sm:$0xff]
    %v1325 = vld [vmem:[%s3 + $0x250] sm:$0xff]
    %v1326 = vld [vmem:[%s3 + $0x258] sm:$0xff]
    %v1327 = vld [vmem:[%s3 + $0x260] sm:$0xff]
    %v1328 = vld [vmem:[%s3 + $0x268] sm:$0xff]
    %v1329 = vld [vmem:[%s3 + $0x270] sm:$0xff]
    %v1330 = vld [vmem:[%s3 + $0x278] sm:$0xff]
    %v1331 = vld [vmem:[%s3 + $0x280] sm:$0xff]
    %v1332 = vld [vmem:[%s3 + $0x288] sm:$0xff]
    %v1333 = vld [vmem:[%s3 + $0x290] sm:$0xff]
    %v1334 = vld [vmem:[%s3 + $0x298] sm:$0xff]
    %v1335 = vld [vmem:[%s3 + $0x2a0] sm:$0xff]
    %v1336 = vld [vmem:[%s3 + $0x2a8] sm:$0xff]
    %v1337 = vld [vmem:[%s3 + $0x2b0] sm:$0xff]
    %v1338 = vld [vmem:[%s3 + $0x2b8] sm:$0xff]
    %v1339 = vld [vmem:[%s3 + $0x2c0] sm:$0xff]
    %v1340 = vld [vmem:[%s3 + $0x2c8] sm:$0xff]
    %v1341 = vld [vmem:[%s3 + $0x2d0] sm:$0xff]
    %v1342 = vld [vmem:[%s3 + $0x2d8] sm:$0xff]
    %v1343 = vld [vmem:[%s3 + $0x2e0] sm:$0xff]
    %v1344 = vld [vmem:[%s3 + $0x2e8] sm:$0xff]
    %v1345 = vld [vmem:[%s3 + $0x2f0] sm:$0xff]
    %v1346 = vld [vmem:[%s3 + $0x2f8] sm:$0xff]
    %v1347 = vld [vmem:[%s3 + $0x300] sm:$0xff]
    %v1348 = vld [vmem:[%s3 + $0x308] sm:$0xff]
    %v1349 = vld [vmem:[%s3 + $0x310] sm:$0xff]
    %v1350 = vld [vmem:[%s4] sm:$0x1]
    %v1352 = vlaneseq
    %v1353 = vshrl.u32 %v1352, 7
    %v1354 = vsub.s32 0, %v1353
    %v1355 = vrot.slane %v1350, %v1354
    %vm1357 = vcmask 195584
    %v1358 = vsel %vm1357, %v1070, 0
    %v1360 = vsel %vm1357, %v1072, 0
    %v1362 = vsel %vm1357, %v1074, 0
    %v1364 = vsel %vm1357, %v1076, 0
    %v1366 = vsel %vm1357, %v1078, 0
    %v1368 = vsel %vm1357, %v1080, 0
    %v1370 = vsel %vm1357, %v1082, 0
    %v1372 = vsel %vm1357, %v1084, 0
    %v1374 = vsel %vm1357, %v1086, 0
    %v1376 = vsel %vm1357, %v1088, 0
    %v1378 = vsel %vm1357, %v1090, 0
    %v1380 = vsel %vm1357, %v1092, 0
    %v1382 = vsel %vm1357, %v1094, 0
    %v1384 = vsel %vm1357, %v1096, 0
    %v1386 = vsel %vm1357, %v1098, 0
    %v1388 = vsel %vm1357, %v1100, 0
    %1390 = vmatprep.subr.mxu0 0.0
    %1391 = vmatpush1.msra.mxu0 %v1251
    %1392 = vmatprep.subr.mxu0 0.0
    %1393 = vmatpush1.msra.mxu0 %v1252
    %1394 = vmatprep.subr.mxu0 0.0
    %1395 = vmatpush1.msra.mxu0 %v1253
    %1396 = vmatprep.subr.mxu0 0.0
    %1397 = vmatpush1.msra.mxu0 %v1254
    %1398 = vmatprep.subr.mxu0 0.0
    %1399 = vmatpush1.msra.mxu0 %v1255
    %1400 = vmatprep.subr.mxu0 0.0
    %1401 = vmatpush1.msra.mxu0 %v1256
    %1402 = vmatprep.subr.mxu0 0.0
    %1403 = vmatpush1.msra.mxu0 %v1257
    %1404 = vmatprep.subr.mxu0 0.0
    %1405 = vmatpush1.msra.mxu0 %v1258
    %1406 = vmatprep.subr.mxu0 0.0
    %1407 = vmatpush1.msra.mxu0 %v1259
    %1408 = vmatprep.subr.mxu0 0.0
    %1409 = vmatpush1.msra.mxu0 %v1260
    %1410 = vmatprep.subr.mxu0 0.0
    %1411 = vmatpush1.msra.mxu0 %v1261
    %1412 = vmatprep.subr.mxu0 0.0
    %1413 = vmatpush1.msra.mxu0 %v1262
    %1414 = vmatprep.subr.mxu0 0.0
    %1415 = vmatpush1.msra.mxu0 %v1263
    %1416 = vmatprep.subr.mxu0 0.0
    %1417 = vmatpush1.msra.mxu0 %v1264
    %1418 = vmatprep.subr.mxu0 0.0
    %1419 = vmatpush1.msra.mxu0 %v1265
    %1420 = vmatprep.subr.mxu0 0.0
    %1421 = vmatpush1.msra.mxu0 %v1266
    %1422 = vmatprep.subr.mxu0 0.0
    %1423 = vmatpush1.msra.mxu0 %v1267
    %1424 = vmatprep.subr.mxu0 0.0
    %1425 = vmatpush1.msra.mxu0 %v1268
    %1426 = vmatprep.subr.mxu0 0.0
    %1427 = vmatpush1.msra.mxu0 %v1269
    %1428 = vmatprep.subr.mxu0 0.0
    %1429 = vmatpush1.msra.mxu0 %v1270
    %1430 = vmatprep.subr.mxu0 0.0
    %1431 = vmatpush1.msra.mxu0 %v1271
    %1432 = vmatprep.subr.mxu0 0.0
    %1433 = vmatpush1.msra.mxu0 %v1272
    %1434 = vmatprep.subr.mxu0 0.0
    %1435 = vmatpush1.msra.mxu0 %v1273
    %1436 = vmatprep.subr.mxu0 0.0
    %1437 = vmatpush1.msra.mxu0 %v1274
    %1438 = vmatprep.subr.mxu0 0.0
    %1439 = vmatpush1.msra.mxu0 %v1275
    %1440 = vmatprep.subr.mxu0 0.0
    %1441 = vmatpush1.msra.mxu0 %v1276
    %1442 = vmatprep.subr.mxu0 0.0
    %1443 = vmatpush1.msra.mxu0 %v1277
    %1444 = vmatprep.subr.mxu0 0.0
    %1445 = vmatpush1.msra.mxu0 %v1278
    %1446 = vmatprep.subr.mxu0 0.0
    %1447 = vmatpush1.msra.mxu0 %v1279
    %1448 = vmatprep.subr.mxu0 0.0
    %1449 = vmatpush1.msra.mxu0 %v1280
    %1450 = vmatprep.subr.mxu0 0.0
    %1451 = vmatpush1.msra.mxu0 %v1281
    %1452 = vmatprep.subr.mxu0 0.0
    %1453 = vmatpush1.msra.mxu0 %v1282
    %1454 = vmatprep.mubr.f32.mxu0 %v1134
    %1455 = vmatmul.mubr.f32.gmra.mrb[0].mxu0 %v1117
    %v1456 = vpop.f32.mrb[0].mxu0
    %v1457 = vadd.f32 %v1355, %v1456
    %v1458 = vpop.f32.mrb[0].mxu0
    %1459 = vmatprep.mubr.f32.mxu0 %v1135
    %1460 = vmatmul.mubr.f32.gmra.mrb[0].mxu0 %v1118
    %v1461 = vpop.f32.mrb[0].mxu0
    %v1462 = vadd.f32 %v1355, %v1461
    %v1463 = vpop.f32.mrb[0].mxu0
    %1464 = vmatprep.mubr.f32.mxu0 %v1136
    %1465 = vmatmul.mubr.f32.gmra.mrb[0].mxu0 %v1119
    %v1466 = vpop.f32.mrb[0].mxu0
    %v1467 = vadd.f32 %v1355, %v1466
    %v1468 = vpop.f32.mrb[0].mxu0
    %1469 = vmatprep.mubr.f32.mxu0 %v1137
    %1470 = vmatmul.mubr.f32.gmra.mrb[0].mxu0 %v1120
    %v1471 = vpop.f32.mrb[0].mxu0
    %v1472 = vadd.f32 %v1355, %v1471
    %v1473 = vpop.f32.mrb[0].mxu0
    %1474 = vmatprep.mubr.f32.mxu0 %v1138
    %1475 = vmatmul.mubr.f32.gmra.mrb[0].mxu0 %v1121
    %v1476 = vpop.f32.mrb[0].mxu0
    %v1477 = vadd.f32 %v1355, %v1476
    %v1478 = vpop.f32.mrb[0].mxu0
    %1479 = vmatprep.mubr.f32.mxu0 %v1139
    %1480 = vmatmul.mubr.f32.gmra.mrb[0].mxu0 %v1122
    %v1481 = vpop.f32.mrb[0].mxu0
    %v1482 = vadd.f32 %v1355, %v1481
    %v1483 = vpop.f32.mrb[0].mxu0
    %1484 = vmatprep.mubr.f32.mxu0 %v1140
    %1485 = vmatmul.mubr.f32.gmra.mrb[0].mxu0 %v1123
    %v1486 = vpop.f32.mrb[0].mxu0
    %v1487 = vadd.f32 %v1355, %v1486
    %v1488 = vpop.f32.mrb[0].mxu0
    %1489 = vmatprep.mubr.f32.mxu0 %v1141
    %1490 = vmatmul.mubr.f32.gmra.mrb[0].mxu0 %v1124
    %v1491 = vpop.f32.mrb[0].mxu0
    %v1492 = vadd.f32 %v1355, %v1491
    %v1493 = vpop.f32.mrb[0].mxu0
    %1494 = vmatprep.mubr.f32.mxu0 %v1142
    %1495 = vmatmul.mubr.f32.gmra.mrb[0].mxu0 %v1125
    %v1496 = vpop.f32.mrb[0].mxu0
    %v1497 = vadd.f32 %v1355, %v1496
    %v1498 = vpop.f32.mrb[0].mxu0
    %1499 = vmatprep.mubr.f32.mxu0 %v1143
    %1500 = vmatmul.mubr.f32.gmra.mrb[0].mxu0 %v1126
    %v1501 = vpop.f32.mrb[0].mxu0
    %v1502 = vadd.f32 %v1355, %v1501
    %v1503 = vpop.f32.mrb[0].mxu0
    %1504 = vmatprep.mubr.f32.mxu0 %v1144
    %1505 = vmatmul.mubr.f32.gmra.mrb[0].mxu0 %v1127
    %v1506 = vpop.f32.mrb[0].mxu0
    %v1507 = vadd.f32 %v1355, %v1506
    %v1508 = vpop.f32.mrb[0].mxu0
    %1509 = vmatprep.mubr.f32.mxu0 %v1145
    %1510 = vmatmul.mubr.f32.gmra.mrb[0].mxu0 %v1128
    %v1511 = vpop.f32.mrb[0].mxu0
    %v1512 = vadd.f32 %v1355, %v1511
    %v1513 = vpop.f32.mrb[0].mxu0
    %1514 = vmatprep.mubr.f32.mxu0 %v1146
    %1515 = vmatmul.mubr.f32.gmra.mrb[0].mxu0 %v1129
    %v1516 = vpop.f32.mrb[0].mxu0
    %v1517 = vadd.f32 %v1355, %v1516
    %v1518 = vpop.f32.mrb[0].mxu0
    %1519 = vmatprep.mubr.f32.mxu0 %v1147
    %1520 = vmatmul.mubr.f32.gmra.mrb[0].mxu0 %v1130
    %v1521 = vpop.f32.mrb[0].mxu0
    %v1522 = vadd.f32 %v1355, %v1521
    %v1523 = vpop.f32.mrb[0].mxu0
    %1524 = vmatprep.mubr.f32.mxu0 %v1148
    %1525 = vmatmul.mubr.f32.gmra.mrb[0].mxu0 %v1131
    %v1526 = vpop.f32.mrb[0].mxu0
    %v1527 = vadd.f32 %v1355, %v1526
    %v1528 = vpop.f32.mrb[0].mxu0
    %1529 = vmatprep.mubr.f32.mxu0 %v1149
    %1530 = vmatmul.mubr.f32.gmra.mrb[0].mxu0 %v1132
    %v1531 = vpop.f32.mrb[0].mxu0
    %v1532 = vadd.f32 %v1355, %v1531
    %v1533 = vpop.f32.mrb[0].mxu0
    %1534 = vdwg.mxu0
    %1535 = vmatprep.subr.mxu0 0.0
    %1536 = vmatpush1.msra.mxu0 %v1283
    %1537 = vmatprep.subr.mxu0 0.0
    %1538 = vmatpush1.msra.mxu0 %v1284
    %1539 = vmatprep.subr.mxu0 0.0
    %1540 = vmatpush1.msra.mxu0 %v1285
    %1541 = vmatprep.subr.mxu0 0.0
    %1542 = vmatpush1.msra.mxu0 %v1286
    %1543 = vmatprep.subr.mxu0 0.0
    %1544 = vmatpush1.msra.mxu0 %v1287
    %1545 = vmatprep.subr.mxu0 0.0
    %1546 = vmatpush1.msra.mxu0 %v1288
    %1547 = vmatprep.subr.mxu0 0.0
    %1548 = vmatpush1.msra.mxu0 %v1289
    %1549 = vmatprep.subr.mxu0 0.0
    %1550 = vmatpush1.msra.mxu0 %v1290
    %1551 = vmatprep.subr.mxu0 0.0
    %1552 = vmatpush1.msra.mxu0 %v1291
    %1553 = vmatprep.subr.mxu0 0.0
    %1554 = vmatpush1.msra.mxu0 %v1292
    %1555 = vmatprep.subr.mxu0 0.0
    %1556 = vmatpush1.msra.mxu0 %v1293
    %1557 = vmatprep.subr.mxu0 0.0
    %1558 = vmatpush1.msra.mxu0 %v1294
    %1559 = vmatprep.subr.mxu0 0.0
    %1560 = vmatpush1.msra.mxu0 %v1295
    %1561 = vmatprep.subr.mxu0 0.0
    %1562 = vmatpush1.msra.mxu0 %v1296
    %1563 = vmatprep.subr.mxu0 0.0
    %1564 = vmatpush1.msra.mxu0 %v1297
    %1565 = vmatprep.subr.mxu0 0.0
    %1566 = vmatpush1.msra.mxu0 %v1298
    %1567 = vmatprep.subr.mxu0 0.0
    %1568 = vmatpush1.msra.mxu0 %v1299
    %1569 = vmatprep.subr.mxu0 0.0
    %1570 = vmatpush1.msra.mxu0 %v1300
    %1571 = vmatprep.subr.mxu0 0.0
    %1572 = vmatpush1.msra.mxu0 %v1301
    %1573 = vmatprep.subr.mxu0 0.0
    %1574 = vmatpush1.msra.mxu0 %v1302
    %1575 = vmatprep.subr.mxu0 0.0
    %1576 = vmatpush1.msra.mxu0 %v1303
    %1577 = vmatprep.subr.mxu0 0.0
    %1578 = vmatpush1.msra.mxu0 %v1304
    %1579 = vmatprep.subr.mxu0 0.0
    %1580 = vmatpush1.msra.mxu0 %v1305
    %1581 = vmatprep.subr.mxu0 0.0
    %1582 = vmatpush1.msra.mxu0 %v1306
    %1583 = vmatprep.subr.mxu0 0.0
    %1584 = vmatpush1.msra.mxu0 %v1307
    %1585 = vmatprep.subr.mxu0 0.0
    %1586 = vmatpush1.msra.mxu0 %v1308
    %1587 = vmatprep.subr.mxu0 0.0
    %1588 = vmatpush1.msra.mxu0 %v1309
    %1589 = vmatprep.subr.mxu0 0.0
    %1590 = vmatpush1.msra.mxu0 %v1310
    %1591 = vmatprep.subr.mxu0 0.0
    %1592 = vmatpush1.msra.mxu0 %v1311
    %1593 = vmatprep.subr.mxu0 0.0
    %1594 = vmatpush1.msra.mxu0 %v1312
    %1595 = vmatprep.subr.mxu0 0.0
    %1596 = vmatpush1.msra.mxu0 %v1313
    %1597 = vmatprep.subr.mxu0 0.0
    %1598 = vmatpush1.msra.mxu0 %v1314
    %1599 = vmatprep.mubr.f32.mxu0 %v1184
    %1600 = vmatmul.mubr.f32.gmra.mrb[0].mxu0 %v1168
    %v1601 = vpop.f32.mrb[0].mxu0
    %v1602 = vadd.f32 %v1457, %v1601
    %v1603 = vpop.f32.mrb[0].mxu0
    %1604 = vmatprep.mubr.f32.mxu0 %v1185
    %1605 = vmatmul.mubr.f32.gmra.mrb[0].mxu0 %v1169
    %v1606 = vpop.f32.mrb[0].mxu0
    %v1607 = vadd.f32 %v1462, %v1606
    %v1608 = vpop.f32.mrb[0].mxu0
    %1609 = vmatprep.mubr.f32.mxu0 %v1186
    %1610 = vmatmul.mubr.f32.gmra.mrb[0].mxu0 %v1170
    %v1611 = vpop.f32.mrb[0].mxu0
    %v1612 = vadd.f32 %v1467, %v1611
    %v1613 = vpop.f32.mrb[0].mxu0
    %1614 = vmatprep.mubr.f32.mxu0 %v1187
    %1615 = vmatmul.mubr.f32.gmra.mrb[0].mxu0 %v1171
    %v1616 = vpop.f32.mrb[0].mxu0
    %v1617 = vadd.f32 %v1472, %v1616
    %v1618 = vpop.f32.mrb[0].mxu0
    %1619 = vmatprep.mubr.f32.mxu0 %v1188
    %1620 = vmatmul.mubr.f32.gmra.mrb[0].mxu0 %v1172
    %v1621 = vpop.f32.mrb[0].mxu0
    %v1622 = vadd.f32 %v1477, %v1621
    %v1623 = vpop.f32.mrb[0].mxu0
    %1624 = vmatprep.mubr.f32.mxu0 %v1189
    %1625 = vmatmul.mubr.f32.gmra.mrb[0].mxu0 %v1173
    %v1626 = vpop.f32.mrb[0].mxu0
    %v1627 = vadd.f32 %v1482, %v1626
    %v1628 = vpop.f32.mrb[0].mxu0
    %1629 = vmatprep.mubr.f32.mxu0 %v1190
    %1630 = vmatmul.mubr.f32.gmra.mrb[0].mxu0 %v1174
    %v1631 = vpop.f32.mrb[0].mxu0
    %v1632 = vadd.f32 %v1487, %v1631
    %v1633 = vpop.f32.mrb[0].mxu0
    %1634 = vmatprep.mubr.f32.mxu0 %v1191
    %1635 = vmatmul.mubr.f32.gmra.mrb[0].mxu0 %v1175
    %v1636 = vpop.f32.mrb[0].mxu0
    %v1637 = vadd.f32 %v1492, %v1636
    %v1638 = vpop.f32.mrb[0].mxu0
    %1639 = vmatprep.mubr.f32.mxu0 %v1192
    %1640 = vmatmul.mubr.f32.gmra.mrb[0].mxu0 %v1176
    %v1641 = vpop.f32.mrb[0].mxu0
    %v1642 = vadd.f32 %v1497, %v1641
    %v1643 = vpop.f32.mrb[0].mxu0
    %1644 = vmatprep.mubr.f32.mxu0 %v1193
    %1645 = vmatmul.mubr.f32.gmra.mrb[0].mxu0 %v1177
    %v1646 = vpop.f32.mrb[0].mxu0
    %v1647 = vadd.f32 %v1502, %v1646
    %v1648 = vpop.f32.mrb[0].mxu0
    %1649 = vmatprep.mubr.f32.mxu0 %v1194
    %1650 = vmatmul.mubr.f32.gmra.mrb[0].mxu0 %v1178
    %v1651 = vpop.f32.mrb[0].mxu0
    %v1652 = vadd.f32 %v1507, %v1651
    %v1653 = vpop.f32.mrb[0].mxu0
    %1654 = vmatprep.mubr.f32.mxu0 %v1195
    %1655 = vmatmul.mubr.f32.gmra.mrb[0].mxu0 %v1179
    %v1656 = vpop.f32.mrb[0].mxu0
    %v1657 = vadd.f32 %v1512, %v1656
    %v1658 = vpop.f32.mrb[0].mxu0
    %1659 = vmatprep.mubr.f32.mxu0 %v1196
    %1660 = vmatmul.mubr.f32.gmra.mrb[0].mxu0 %v1180
    %v1661 = vpop.f32.mrb[0].mxu0
    %v1662 = vadd.f32 %v1517, %v1661
    %v1663 = vpop.f32.mrb[0].mxu0
    %1664 = vmatprep.mubr.f32.mxu0 %v1197
    %1665 = vmatmul.mubr.f32.gmra.mrb[0].mxu0 %v1181
    %v1666 = vpop.f32.mrb[0].mxu0
    %v1667 = vadd.f32 %v1522, %v1666
    %v1668 = vpop.f32.mrb[0].mxu0
    %1669 = vmatprep.mubr.f32.mxu0 %v1198
    %1670 = vmatmul.mubr.f32.gmra.mrb[0].mxu0 %v1182
    %v1671 = vpop.f32.mrb[0].mxu0
    %v1672 = vadd.f32 %v1527, %v1671
    %v1673 = vpop.f32.mrb[0].mxu0
    %1674 = vmatprep.mubr.f32.mxu0 %v1199
    %1675 = vmatmul.mubr.f32.gmra.mrb[0].mxu0 %v1183
    %v1676 = vpop.f32.mrb[0].mxu0
    %v1677 = vadd.f32 %v1532, %v1676
    %v1678 = vpop.f32.mrb[0].mxu0
    %1679 = vdwg.mxu0
    %1680 = vmatprep.subr.mxu0 0.0
    %1681 = vmatpush1.msra.mxu0 %v1315
    %1682 = vmatprep.subr.mxu0 0.0
    %1683 = vmatpush1.msra.mxu0 %v1316
    %1684 = vmatprep.subr.mxu0 0.0
    %1685 = vmatpush1.msra.mxu0 %v1317
    %1686 = vmatprep.subr.mxu0 0.0
    %1687 = vmatpush1.msra.mxu0 %v1318
    %1688 = vmatprep.subr.mxu0 0.0
    %1689 = vmatpush1.msra.mxu0 %v1319
    %1690 = vmatprep.subr.mxu0 0.0
    %1691 = vmatpush1.msra.mxu0 %v1320
    %1692 = vmatprep.subr.mxu0 0.0
    %1693 = vmatpush1.msra.mxu0 %v1321
    %1694 = vmatprep.subr.mxu0 0.0
    %1695 = vmatpush1.msra.mxu0 %v1322
    %1696 = vmatprep.subr.mxu0 0.0
    %1697 = vmatpush1.msra.mxu0 %v1323
    %1698 = vmatprep.subr.mxu0 0.0
    %1699 = vmatpush1.msra.mxu0 %v1324
    %1700 = vmatprep.subr.mxu0 0.0
    %1701 = vmatpush1.msra.mxu0 %v1325
    %1702 = vmatprep.subr.mxu0 0.0
    %1703 = vmatpush1.msra.mxu0 %v1326
    %1704 = vmatprep.subr.mxu0 0.0
    %1705 = vmatpush1.msra.mxu0 %v1327
    %1706 = vmatprep.subr.mxu0 0.0
    %1707 = vmatpush1.msra.mxu0 %v1328
    %1708 = vmatprep.subr.mxu0 0.0
    %1709 = vmatpush1.msra.mxu0 %v1329
    %1710 = vmatprep.subr.mxu0 0.0
    %1711 = vmatpush1.msra.mxu0 %v1330
    %1712 = vmatprep.subr.mxu0 0.0
    %1713 = vmatpush1.msra.mxu0 %v1331
    %1714 = vmatprep.subr.mxu0 0.0
    %1715 = vmatpush1.msra.mxu0 %v1332
    %1716 = vmatprep.subr.mxu0 0.0
    %1717 = vmatpush1.msra.mxu0 %v1333
    %1718 = vmatprep.subr.mxu0 0.0
    %1719 = vmatpush1.msra.mxu0 %v1334
    %1720 = vmatprep.subr.mxu0 0.0
    %1721 = vmatpush1.msra.mxu0 %v1335
    %1722 = vmatprep.subr.mxu0 0.0
    %1723 = vmatpush1.msra.mxu0 %v1336
    %1724 = vmatprep.subr.mxu0 0.0
    %1725 = vmatpush1.msra.mxu0 %v1337
    %1726 = vmatprep.subr.mxu0 0.0
    %1727 = vmatpush1.msra.mxu0 %v1338
    %1728 = vmatprep.subr.mxu0 0.0
    %1729 = vmatpush1.msra.mxu0 %v1339
    %1730 = vmatprep.subr.mxu0 0.0
    %1731 = vmatpush1.msra.mxu0 %v1340
    %1732 = vmatprep.subr.mxu0 0.0
    %1733 = vmatpush1.msra.mxu0 %v1341
    %1734 = vmatprep.subr.mxu0 0.0
    %1735 = vmatpush1.msra.mxu0 %v1342
    %1736 = vmatprep.subr.mxu0 0.0
    %1737 = vmatpush1.msra.mxu0 %v1343
    %1738 = vmatprep.subr.mxu0 0.0
    %1739 = vmatpush1.msra.mxu0 %v1344
    %1740 = vmatprep.subr.mxu0 0.0
    %1741 = vmatpush1.msra.mxu0 %v1345
    %1742 = vmatprep.subr.mxu0 0.0
    %1743 = vmatpush1.msra.mxu0 %v1346
    %1744 = vmatprep.mubr.f32.mxu0 %v1235
    %1745 = vmatmul.mubr.f32.gmra.mrb[0].mxu0 %v1218
    %v1746 = vpop.f32.mrb[0].mxu0
    %v1747 = vadd.f32 %v1602, %v1746
    %v1748 = vpop.f32.mrb[0].mxu0
    %1749 = vmatprep.mubr.f32.mxu0 %v1236
    %1750 = vmatmul.mubr.f32.gmra.mrb[0].mxu0 %v1219
    %v1751 = vpop.f32.mrb[0].mxu0
    %v1752 = vadd.f32 %v1607, %v1751
    %v1753 = vpop.f32.mrb[0].mxu0
    %1754 = vmatprep.mubr.f32.mxu0 %v1237
    %1755 = vmatmul.mubr.f32.gmra.mrb[0].mxu0 %v1220
    %v1756 = vpop.f32.mrb[0].mxu0
    %v1757 = vadd.f32 %v1612, %v1756
    %v1758 = vpop.f32.mrb[0].mxu0
    %1759 = vmatprep.mubr.f32.mxu0 %v1238
    %1760 = vmatmul.mubr.f32.gmra.mrb[0].mxu0 %v1221
    %v1761 = vpop.f32.mrb[0].mxu0
    %v1762 = vadd.f32 %v1617, %v1761
    %v1763 = vpop.f32.mrb[0].mxu0
    %1764 = vmatprep.mubr.f32.mxu0 %v1239
    %1765 = vmatmul.mubr.f32.gmra.mrb[0].mxu0 %v1222
    %v1766 = vpop.f32.mrb[0].mxu0
    %v1767 = vadd.f32 %v1622, %v1766
    %v1768 = vpop.f32.mrb[0].mxu0
    %1769 = vmatprep.mubr.f32.mxu0 %v1240
    %1770 = vmatmul.mubr.f32.gmra.mrb[0].mxu0 %v1223
    %v1771 = vpop.f32.mrb[0].mxu0
    %v1772 = vadd.f32 %v1627, %v1771
    %v1773 = vpop.f32.mrb[0].mxu0
    %1774 = vmatprep.mubr.f32.mxu0 %v1241
    %1775 = vmatmul.mubr.f32.gmra.mrb[0].mxu0 %v1224
    %v1776 = vpop.f32.mrb[0].mxu0
    %v1777 = vadd.f32 %v1632, %v1776
    %v1778 = vpop.f32.mrb[0].mxu0
    %1779 = vmatprep.mubr.f32.mxu0 %v1242
    %1780 = vmatmul.mubr.f32.gmra.mrb[0].mxu0 %v1225
    %v1781 = vpop.f32.mrb[0].mxu0
    %v1782 = vadd.f32 %v1637, %v1781
    %v1783 = vpop.f32.mrb[0].mxu0
    %1784 = vmatprep.mubr.f32.mxu0 %v1243
    %1785 = vmatmul.mubr.f32.gmra.mrb[0].mxu0 %v1226
    %v1786 = vpop.f32.mrb[0].mxu0
    %v1787 = vadd.f32 %v1642, %v1786
    %v1788 = vpop.f32.mrb[0].mxu0
    %1789 = vmatprep.mubr.f32.mxu0 %v1244
    %1790 = vmatmul.mubr.f32.gmra.mrb[0].mxu0 %v1227
    %v1791 = vpop.f32.mrb[0].mxu0
    %v1792 = vadd.f32 %v1647, %v1791
    %v1793 = vpop.f32.mrb[0].mxu0
    %1794 = vmatprep.mubr.f32.mxu0 %v1245
    %1795 = vmatmul.mubr.f32.gmra.mrb[0].mxu0 %v1228
    %v1796 = vpop.f32.mrb[0].mxu0
    %v1797 = vadd.f32 %v1652, %v1796
    %v1798 = vpop.f32.mrb[0].mxu0
    %1799 = vmatprep.mubr.f32.mxu0 %v1246
    %1800 = vmatmul.mubr.f32.gmra.mrb[0].mxu0 %v1229
    %v1801 = vpop.f32.mrb[0].mxu0
    %v1802 = vadd.f32 %v1657, %v1801
    %v1803 = vpop.f32.mrb[0].mxu0
    %1804 = vmatprep.mubr.f32.mxu0 %v1247
    %1805 = vmatmul.mubr.f32.gmra.mrb[0].mxu0 %v1230
    %v1806 = vpop.f32.mrb[0].mxu0
    %v1807 = vadd.f32 %v1662, %v1806
    %v1808 = vpop.f32.mrb[0].mxu0
    %1809 = vmatprep.mubr.f32.mxu0 %v1248
    %1810 = vmatmul.mubr.f32.gmra.mrb[0].mxu0 %v1231
    %v1811 = vpop.f32.mrb[0].mxu0
    %v1812 = vadd.f32 %v1667, %v1811
    %v1813 = vpop.f32.mrb[0].mxu0
    %1814 = vmatprep.mubr.f32.mxu0 %v1249
    %1815 = vmatmul.mubr.f32.gmra.mrb[0].mxu0 %v1232
    %v1816 = vpop.f32.mrb[0].mxu0
    %v1817 = vadd.f32 %v1672, %v1816
    %v1818 = vpop.f32.mrb[0].mxu0
    %1819 = vmatprep.mubr.f32.mxu0 %v1250
    %1820 = vmatmul.mubr.f32.gmra.mrb[0].mxu0 %v1233
    %v1821 = vpop.f32.mrb[0].mxu0
    %v1822 = vadd.f32 %v1677, %v1821
    %v1823 = vpop.f32.mrb[0].mxu0
    %1824 = vdwg.mxu0
    %1825 = vmatprep.subr.mxu0 0.0
    %1826 = vmatpush1.msra.mxu0 %v1347
    %1827 = vmatprep.subr.mxu0 0.0
    %1828 = vmatpush1.msra.mxu0 %v1348
    %1829 = vmatprep.subr.mxu0 0.0
    %1830 = vmatpush1.msra.mxu0 %v1349
    %1831 = vmatprep.subr.mxu0 0.0
    %1832 = vmatpush1.msra.mxu0 0.0
    %1833 = vmatprep.subr.mxu0 0.0
    %1834 = vmatpush1.msra.mxu0 0.0
    %1835 = vmatprep.subr.mxu0 0.0
    %1836 = vmatpush1.msra.mxu0 0.0
    %1837 = vmatprep.subr.mxu0 0.0
    %1838 = vmatpush1.msra.mxu0 0.0
    %1839 = vmatprep.subr.mxu0 0.0
    %1840 = vmatpush1.msra.mxu0 0.0
    %1841 = vmatprep.subr.mxu0 0.0
    %1842 = vmatpush1.msra.mxu0 0.0
    %1843 = vmatprep.subr.mxu0 0.0
    %1844 = vmatpush1.msra.mxu0 0.0
    %1845 = vmatprep.subr.mxu0 0.0
    %1846 = vmatpush1.msra.mxu0 0.0
    %1847 = vmatprep.subr.mxu0 0.0
    %1848 = vmatpush1.msra.mxu0 0.0
    %1849 = vmatprep.subr.mxu0 0.0
    %1850 = vmatpush1.msra.mxu0 0.0
    %1851 = vmatprep.subr.mxu0 0.0
    %1852 = vmatpush1.msra.mxu0 0.0
    %1853 = vmatprep.subr.mxu0 0.0
    %1854 = vmatpush1.msra.mxu0 0.0
    %1855 = vmatprep.subr.mxu0 0.0
    %1856 = vmatpush1.msra.mxu0 0.0
    %1857 = vmatprep.subr.mxu0 0.0
    %1858 = vmatpush1.msra.mxu0 0.0
    %1859 = vmatprep.subr.mxu0 0.0
    %1860 = vmatpush1.msra.mxu0 0.0
    %1861 = vmatprep.subr.mxu0 0.0
    %1862 = vmatpush1.msra.mxu0 0.0
    %1863 = vmatprep.subr.mxu0 0.0
    %1864 = vmatpush1.msra.mxu0 0.0
    %1865 = vmatprep.subr.mxu0 0.0
    %1866 = vmatpush1.msra.mxu0 0.0
    %1867 = vmatprep.subr.mxu0 0.0
    %1868 = vmatpush1.msra.mxu0 0.0
    %1869 = vmatprep.subr.mxu0 0.0
    %1870 = vmatpush1.msra.mxu0 0.0
    %1871 = vmatprep.subr.mxu0 0.0
    %1872 = vmatpush1.msra.mxu0 0.0
    %1873 = vmatprep.subr.mxu0 0.0
    %1874 = vmatpush1.msra.mxu0 0.0
    %1875 = vmatprep.subr.mxu0 0.0
    %1876 = vmatpush1.msra.mxu0 0.0
    %1877 = vmatprep.subr.mxu0 0.0
    %1878 = vmatpush1.msra.mxu0 0.0
    %1879 = vmatprep.subr.mxu0 0.0
    %1880 = vmatpush1.msra.mxu0 0.0
    %1881 = vmatprep.subr.mxu0 0.0
    %1882 = vmatpush1.msra.mxu0 0.0
    %1883 = vmatprep.subr.mxu0 0.0
    %1884 = vmatpush1.msra.mxu0 0.0
    %1885 = vmatprep.subr.mxu0 0.0
    %1886 = vmatpush1.msra.mxu0 0.0
    %1887 = vmatprep.subr.mxu0 0.0
    %1888 = vmatpush1.msra.mxu0 0.0
    %1889 = vmatprep.mubr.f32.mxu0 0.0
    %1890 = vmatmul.mubr.f32.gmra.mrb[0].mxu0 %v1358
    %v1891 = vpop.f32.mrb[0].mxu0
    %v1892 = vadd.f32 %v1747, %v1891
    %v1893 = vpop.f32.mrb[0].mxu0
    %1894 = vmatprep.mubr.f32.mxu0 0.0
    %1895 = vmatmul.mubr.f32.gmra.mrb[0].mxu0 %v1360
    %v1896 = vpop.f32.mrb[0].mxu0
    %v1897 = vadd.f32 %v1752, %v1896
    %v1898 = vpop.f32.mrb[0].mxu0
    %1899 = vmatprep.mubr.f32.mxu0 0.0
    %1900 = vmatmul.mubr.f32.gmra.mrb[0].mxu0 %v1362
    %v1901 = vpop.f32.mrb[0].mxu0
    %v1902 = vadd.f32 %v1757, %v1901
    %v1903 = vpop.f32.mrb[0].mxu0
    %1904 = vmatprep.mubr.f32.mxu0 0.0
    %1905 = vmatmul.mubr.f32.gmra.mrb[0].mxu0 %v1364
    %v1906 = vpop.f32.mrb[0].mxu0
    %v1907 = vadd.f32 %v1762, %v1906
    %v1908 = vpop.f32.mrb[0].mxu0
    %1909 = vmatprep.mubr.f32.mxu0 0.0
    %1910 = vmatmul.mubr.f32.gmra.mrb[0].mxu0 %v1366
    %v1911 = vpop.f32.mrb[0].mxu0
    %v1912 = vadd.f32 %v1767, %v1911
    %v1913 = vpop.f32.mrb[0].mxu0
    %1914 = vmatprep.mubr.f32.mxu0 0.0
    %1915 = vmatmul.mubr.f32.gmra.mrb[0].mxu0 %v1368
    %v1916 = vpop.f32.mrb[0].mxu0
    %v1917 = vadd.f32 %v1772, %v1916
    %v1918 = vpop.f32.mrb[0].mxu0
    %1919 = vmatprep.mubr.f32.mxu0 0.0
    %1920 = vmatmul.mubr.f32.gmra.mrb[0].mxu0 %v1370
    %v1921 = vpop.f32.mrb[0].mxu0
    %v1922 = vadd.f32 %v1777, %v1921
    %v1923 = vpop.f32.mrb[0].mxu0
    %1924 = vmatprep.mubr.f32.mxu0 0.0
    %1925 = vmatmul.mubr.f32.gmra.mrb[0].mxu0 %v1372
    %v1926 = vpop.f32.mrb[0].mxu0
    %v1927 = vadd.f32 %v1782, %v1926
    %v1928 = vpop.f32.mrb[0].mxu0
    %1929 = vmatprep.mubr.f32.mxu0 0.0
    %1930 = vmatmul.mubr.f32.gmra.mrb[0].mxu0 %v1374
    %v1931 = vpop.f32.mrb[0].mxu0
    %v1932 = vadd.f32 %v1787, %v1931
    %v1933 = vpop.f32.mrb[0].mxu0
    %1934 = vmatprep.mubr.f32.mxu0 0.0
    %1935 = vmatmul.mubr.f32.gmra.mrb[0].mxu0 %v1376
    %v1936 = vpop.f32.mrb[0].mxu0
    %v1937 = vadd.f32 %v1792, %v1936
    %v1938 = vpop.f32.mrb[0].mxu0
    %1939 = vmatprep.mubr.f32.mxu0 0.0
    %1940 = vmatmul.mubr.f32.gmra.mrb[0].mxu0 %v1378
    %v1941 = vpop.f32.mrb[0].mxu0
    %v1942 = vadd.f32 %v1797, %v1941
    %v1943 = vpop.f32.mrb[0].mxu0
    %1944 = vmatprep.mubr.f32.mxu0 0.0
    %1945 = vmatmul.mubr.f32.gmra.mrb[0].mxu0 %v1380
    %v1946 = vpop.f32.mrb[0].mxu0
    %v1947 = vadd.f32 %v1802, %v1946
    %v1948 = vpop.f32.mrb[0].mxu0
    %1949 = vmatprep.mubr.f32.mxu0 0.0
    %1950 = vmatmul.mubr.f32.gmra.mrb[0].mxu0 %v1382
    %v1951 = vpop.f32.mrb[0].mxu0
    %v1952 = vadd.f32 %v1807, %v1951
    %v1953 = vpop.f32.mrb[0].mxu0
    %1954 = vmatprep.mubr.f32.mxu0 0.0
    %1955 = vmatmul.mubr.f32.gmra.mrb[0].mxu0 %v1384
    %v1956 = vpop.f32.mrb[0].mxu0
    %v1957 = vadd.f32 %v1812, %v1956
    %v1958 = vpop.f32.mrb[0].mxu0
    %1959 = vmatprep.mubr.f32.mxu0 0.0
    %1960 = vmatmul.mubr.f32.gmra.mrb[0].mxu0 %v1386
    %v1961 = vpop.f32.mrb[0].mxu0
    %v1962 = vadd.f32 %v1817, %v1961
    %v1963 = vpop.f32.mrb[0].mxu0
    %1964 = vmatprep.mubr.f32.mxu0 0.0
    %1965 = vmatmul.mubr.f32.gmra.mrb[0].mxu0 %v1388
    %v1966 = vpop.f32.mrb[0].mxu0
    %v1967 = vadd.f32 %v1822, %v1966
    %v1968 = vpop.f32.mrb[0].mxu0
    %1969 = vdwg.mxu0
    %v1970 = vmax.f32 %v1892, 0.0
    %v1971 = vmax.f32 %v1897, 0.0
    %v1972 = vmax.f32 %v1902, 0.0
    %v1973 = vmax.f32 %v1907, 0.0
    %v1974 = vmax.f32 %v1912, 0.0
    %v1975 = vmax.f32 %v1917, 0.0
    %v1976 = vmax.f32 %v1922, 0.0
    %v1977 = vmax.f32 %v1927, 0.0
    %v1978 = vmax.f32 %v1932, 0.0
    %v1979 = vmax.f32 %v1937, 0.0
    %v1980 = vmax.f32 %v1942, 0.0
    %v1981 = vmax.f32 %v1947, 0.0
    %v1982 = vmax.f32 %v1952, 0.0
    %v1983 = vmax.f32 %v1957, 0.0
    %v1984 = vmax.f32 %v1962, 0.0
    %v1985 = vmax.f32 %v1967, 0.0
    %v1986 = vsel %vm276, %v1970, 0.0
    %v1987 = vsel %vm276, %v1971, 0.0
    %v1988 = vadd.f32 %v1986, %v1987
    %v1989 = vsel %vm276, %v1972, 0.0
    %v1990 = vadd.f32 %v1988, %v1989
    %v1991 = vsel %vm276, %v1973, 0.0
    %v1992 = vadd.f32 %v1990, %v1991
    %v1993 = vsel %vm276, %v1974, 0.0
    %v1994 = vadd.f32 %v1992, %v1993
    %v1995 = vsel %vm276, %v1975, 0.0
    %v1996 = vadd.f32 %v1994, %v1995
    %v1997 = vsel %vm276, %v1976, 0.0
    %v1998 = vadd.f32 %v1996, %v1997
    %v1999 = vsel %vm276, %v1977, 0.0
    %v2000 = vadd.f32 %v1998, %v1999
    %v2001 = vrot.slane %v2000, 4
    %v2002 = vadd.f32 %v2000, %v2001
    %v2003 = vrot.slane %v2002, 2
    %v2004 = vadd.f32 %v2002, %v2003
    %v2005 = vrot.slane %v2004, 1
    %v2006 = vadd.f32 %v2004, %v2005
    %v2007 = vsel %vm276, %v1978, 0.0
    %v2008 = vsel %vm276, %v1979, 0.0
    %v2009 = vadd.f32 %v2007, %v2008
    %v2010 = vsel %vm276, %v1980, 0.0
    %v2011 = vadd.f32 %v2009, %v2010
    %v2012 = vsel %vm276, %v1981, 0.0
    %v2013 = vadd.f32 %v2011, %v2012
    %v2014 = vsel %vm276, %v1982, 0.0
    %v2015 = vadd.f32 %v2013, %v2014
    %v2016 = vsel %vm276, %v1983, 0.0
    %v2017 = vadd.f32 %v2015, %v2016
    %v2018 = vsel %vm276, %v1984, 0.0
    %v2019 = vadd.f32 %v2017, %v2018
    %v2020 = vsel %vm276, %v1985, 0.0
    %v2021 = vadd.f32 %v2019, %v2020
    %v2022 = vrot.slane %v2021, 4
    %v2023 = vadd.f32 %v2021, %v2022
    %v2024 = vrot.slane %v2023, 2
    %v2025 = vadd.f32 %v2023, %v2024
    %v2026 = vrot.slane %v2025, 1
    %v2027 = vadd.f32 %v2025, %v2026
    %v2028 = vmul.f32 %v2006, 0.015625
    %v2029 = vmul.f32 %v2027, 0.015625
    %2030 = vst.msk [vmem:[#allocation3] sm:$0xff] %vm1200, 0.0
    %vm2031 = vcmask 123904
    %2032 = vst.msk [vmem:[#allocation3 + $0x8] sm:$0x3] %vm2031, 0.0
    %2033 = vst.msk [vmem:[#allocation3 + $0x10] sm:$0xff] %vm1200, 0.0
    %2034 = vst.msk [vmem:[#allocation3 + $0x18] sm:$0x3] %vm2031, 0.0
    %2035 = vst.msk [vmem:[#allocation3 + $0x20] sm:$0xff] %vm1200, 0.0
    %2036 = vst.msk [vmem:[#allocation3 + $0x28] sm:$0x3] %vm2031, 0.0
    %2037 = vst.msk [vmem:[#allocation3 + $0x30] sm:$0xff] %vm1200, 0.0
    %2038 = vst.msk [vmem:[#allocation3 + $0x38] sm:$0x3] %vm2031, 0.0
    %2039 = vst.msk [vmem:[#allocation3 + $0x40] sm:$0xff] %vm1200, 0.0
    %2040 = vst.msk [vmem:[#allocation3 + $0x48] sm:$0x3] %vm2031, 0.0
    %2041 = vst.msk [vmem:[#allocation3 + $0x50] sm:$0xff] %vm1200, 0.0
    %2042 = vst.msk [vmem:[#allocation3 + $0x58] sm:$0x3] %vm2031, 0.0
    %2043 = vst.msk [vmem:[#allocation3 + $0x60] sm:$0xff] %vm1200, 0.0
    %2044 = vst.msk [vmem:[#allocation3 + $0x68] sm:$0x3] %vm2031, 0.0
    %2045 = vst.msk [vmem:[#allocation3 + $0x70] sm:$0xff] %vm1200, 0.0
    %2046 = vst.msk [vmem:[#allocation3 + $0x78] sm:$0x3] %vm2031, 0.0
    %2047 = vst.msk [vmem:[#allocation3 + $0x80] sm:$0xff] %vm1200, 0.0
    %2048 = vst.msk [vmem:[#allocation3 + $0x88] sm:$0x3] %vm2031, 0.0
    %2049 = vst.msk [vmem:[#allocation3 + $0x90] sm:$0xff] %vm1200, 0.0
    %2050 = vst.msk [vmem:[#allocation3 + $0x98] sm:$0x3] %vm2031, 0.0
    %2051 = vst.msk [vmem:[#allocation3 + $0xa0] sm:$0xff] %vm1200, 0.0
    %2052 = vst.msk [vmem:[#allocation3 + $0xa8] sm:$0x3] %vm2031, 0.0
    %2053 = vst.msk [vmem:[#allocation3 + $0xb0] sm:$0xff] %vm1200, 0.0
    %2054 = vst.msk [vmem:[#allocation3 + $0xb8] sm:$0x3] %vm2031, 0.0
    %2055 = vst.msk [vmem:[#allocation3 + $0xc0] sm:$0xff] %vm1200, 0.0
    %2056 = vst.msk [vmem:[#allocation3 + $0xc8] sm:$0x3] %vm2031, 0.0
    %2057 = vst.msk [vmem:[#allocation3 + $0xd0] sm:$0xff] %vm1200, 0.0
    %2058 = vst.msk [vmem:[#allocation3 + $0xd8] sm:$0x3] %vm2031, 0.0
    %2059 = vst.msk [vmem:[#allocation3 + $0xe0] sm:$0xff] %vm1200, 0.0
    %2060 = vst.msk [vmem:[#allocation3 + $0xe8] sm:$0x3] %vm2031, 0.0
    %2061 = vst.msk [vmem:[#allocation3 + $0xf0] sm:$0xff] %vm1200, 0.0
    %2062 = vst.msk [vmem:[#allocation3 + $0xf8] sm:$0x3] %vm2031, 0.0
    %2063 = vst.msk [vmem:[#allocation3 + $0x100] sm:$0xff] %vm1200, 0.0
    %2064 = vst.msk [vmem:[#allocation3 + $0x108] sm:$0x3] %vm2031, 0.0
    %2065 = vst.msk [vmem:[#allocation3 + $0x110] sm:$0xff] %vm1200, 0.0
    %2066 = vst.msk [vmem:[#allocation3 + $0x118] sm:$0x3] %vm2031, 0.0
    %2067 = vst.msk [vmem:[#allocation3 + $0x120] sm:$0xff] %vm1200, 0.0
    %2068 = vst.msk [vmem:[#allocation3 + $0x128] sm:$0x3] %vm2031, 0.0
    %2069 = vst.msk [vmem:[#allocation3 + $0x130] sm:$0xff] %vm1200, 0.0
    %2070 = vst.msk [vmem:[#allocation3 + $0x138] sm:$0x3] %vm2031, 0.0
    %s2071 = scalar_lea.vmem [#allocation3], 16
    %2072 = vst.msk [vmem:[%s2071 + $0x1] sm:$0xff] %vm1200, %v1970
    %2073 = vst.msk [vmem:[%s2071 + $0x11] sm:$0xff] %vm1200, %v1971
    %2074 = vst.msk [vmem:[%s2071 + $0x21] sm:$0xff] %vm1200, %v1972
    %2075 = vst.msk [vmem:[%s2071 + $0x31] sm:$0xff] %vm1200, %v1973
    %2076 = vst.msk [vmem:[%s2071 + $0x41] sm:$0xff] %vm1200, %v1974
    %2077 = vst.msk [vmem:[%s2071 + $0x51] sm:$0xff] %vm1200, %v1975
    %2078 = vst.msk [vmem:[%s2071 + $0x61] sm:$0xff] %vm1200, %v1976
    %2079 = vst.msk [vmem:[%s2071 + $0x71] sm:$0xff] %vm1200, %v1977
    %2080 = vst.msk [vmem:[%s2071 + $0xa1] sm:$0xff] %vm1200, %v1978
    %2081 = vst.msk [vmem:[%s2071 + $0xb1] sm:$0xff] %vm1200, %v1979
    %2082 = vst.msk [vmem:[%s2071 + $0xc1] sm:$0xff] %vm1200, %v1980
    %2083 = vst.msk [vmem:[%s2071 + $0xd1] sm:$0xff] %vm1200, %v1981
    %2084 = vst.msk [vmem:[%s2071 + $0xe1] sm:$0xff] %vm1200, %v1982
    %2085 = vst.msk [vmem:[%s2071 + $0xf1] sm:$0xff] %vm1200, %v1983
    %2086 = vst.msk [vmem:[%s2071 + $0x101] sm:$0xff] %vm1200, %v1984
    %2087 = vst.msk [vmem:[%s2071 + $0x111] sm:$0xff] %vm1200, %v1985
    %v2088 = vld [vmem:[#allocation3] sm:$0xff]
    %v2089 = vld [vmem:[#allocation3 + $0x10] sm:$0xff]
    %v2090 = vld [vmem:[#allocation3 + $0x20] sm:$0xff]
    %v2091 = vld [vmem:[#allocation3 + $0x30] sm:$0xff]
    %v2092 = vld [vmem:[#allocation3 + $0x40] sm:$0xff]
    %v2093 = vld [vmem:[#allocation3 + $0x50] sm:$0xff]
    %v2094 = vld [vmem:[#allocation3 + $0x60] sm:$0xff]
    %v2095 = vld [vmem:[#allocation3 + $0x70] sm:$0xff]
    %v2096 = vld [vmem:[#allocation3 + $0xa0] sm:$0xff]
    %v2097 = vld [vmem:[#allocation3 + $0xb0] sm:$0xff]
    %v2098 = vld [vmem:[#allocation3 + $0xc0] sm:$0xff]
    %v2099 = vld [vmem:[#allocation3 + $0xd0] sm:$0xff]
    %v2100 = vld [vmem:[#allocation3 + $0xe0] sm:$0xff]
    %v2101 = vld [vmem:[#allocation3 + $0xf0] sm:$0xff]
    %v2102 = vld [vmem:[#allocation3 + $0x100] sm:$0xff]
    %v2103 = vld [vmem:[#allocation3 + $0x110] sm:$0xff]
    %v2104 = vld [vmem:[#allocation3 + $0x1] sm:$0xff]
    %v2105 = vld [vmem:[#allocation3 + $0x11] sm:$0xff]
    %v2106 = vld [vmem:[#allocation3 + $0x21] sm:$0xff]
    %v2107 = vld [vmem:[#allocation3 + $0x31] sm:$0xff]
    %v2108 = vld [vmem:[#allocation3 + $0x41] sm:$0xff]
    %v2109 = vld [vmem:[#allocation3 + $0x51] sm:$0xff]
    %v2110 = vld [vmem:[#allocation3 + $0x61] sm:$0xff]
    %v2111 = vld [vmem:[#allocation3 + $0x71] sm:$0xff]
    %v2112 = vld [vmem:[#allocation3 + $0xa1] sm:$0xff]
    %v2113 = vld [vmem:[#allocation3 + $0xb1] sm:$0xff]
    %v2114 = vld [vmem:[#allocation3 + $0xc1] sm:$0xff]
    %v2115 = vld [vmem:[#allocation3 + $0xd1] sm:$0xff]
    %v2116 = vld [vmem:[#allocation3 + $0xe1] sm:$0xff]
    %v2117 = vld [vmem:[#allocation3 + $0xf1] sm:$0xff]
    %v2118 = vld [vmem:[#allocation3 + $0x101] sm:$0xff]
    %v2119 = vld [vmem:[#allocation3 + $0x111] sm:$0xff]
    %v2120 = vld [vmem:[#allocation3 + $0x2] sm:$0xff]
    %v2121 = vld [vmem:[#allocation3 + $0x12] sm:$0xff]
    %v2122 = vld [vmem:[#allocation3 + $0x22] sm:$0xff]
    %v2123 = vld [vmem:[#allocation3 + $0x32] sm:$0xff]
    %v2124 = vld [vmem:[#allocation3 + $0x42] sm:$0xff]
    %v2125 = vld [vmem:[#allocation3 + $0x52] sm:$0xff]
    %v2126 = vld [vmem:[#allocation3 + $0x62] sm:$0xff]
    %v2127 = vld [vmem:[#allocation3 + $0x72] sm:$0xff]
    %v2128 = vld [vmem:[#allocation3 + $0xa2] sm:$0xff]
    %v2129 = vld [vmem:[#allocation3 + $0xb2] sm:$0xff]
    %v2130 = vld [vmem:[#allocation3 + $0xc2] sm:$0xff]
    %v2131 = vld [vmem:[#allocation3 + $0xd2] sm:$0xff]
    %v2132 = vld [vmem:[#allocation3 + $0xe2] sm:$0xff]
    %v2133 = vld [vmem:[#allocation3 + $0xf2] sm:$0xff]
    %v2134 = vld [vmem:[#allocation3 + $0x102] sm:$0xff]
    %v2135 = vld [vmem:[#allocation3 + $0x112] sm:$0xff]
    %v2136 = vld [vmem:[%s2071] sm:$0xff]
    %v2137 = vld [vmem:[%s2071 + $0x10] sm:$0xff]
    %v2138 = vld [vmem:[%s2071 + $0x20] sm:$0xff]
    %v2139 = vld [vmem:[%s2071 + $0x30] sm:$0xff]
    %v2140 = vld [vmem:[%s2071 + $0x40] sm:$0xff]
    %v2141 = vld [vmem:[%s2071 + $0x50] sm:$0xff]
    %v2142 = vld [vmem:[%s2071 + $0x60] sm:$0xff]
    %v2143 = vld [vmem:[%s2071 + $0x70] sm:$0xff]
    %v2144 = vld [vmem:[%s2071 + $0xa0] sm:$0xff]
    %v2145 = vld [vmem:[%s2071 + $0xb0] sm:$0xff]
    %v2146 = vld [vmem:[%s2071 + $0xc0] sm:$0xff]
    %v2147 = vld [vmem:[%s2071 + $0xd0] sm:$0xff]
    %v2148 = vld [vmem:[%s2071 + $0xe0] sm:$0xff]
    %v2149 = vld [vmem:[%s2071 + $0xf0] sm:$0xff]
    %v2150 = vld [vmem:[%s2071 + $0x100] sm:$0xff]
    %v2151 = vld [vmem:[%s2071 + $0x110] sm:$0xff]
    %v2152 = vld [vmem:[%s2071 + $0x1] sm:$0xff]
    %v2153 = vld [vmem:[%s2071 + $0x11] sm:$0xff]
    %v2154 = vld [vmem:[%s2071 + $0x21] sm:$0xff]
    %v2155 = vld [vmem:[%s2071 + $0x31] sm:$0xff]
    %v2156 = vld [vmem:[%s2071 + $0x41] sm:$0xff]
    %v2157 = vld [vmem:[%s2071 + $0x51] sm:$0xff]
    %v2158 = vld [vmem:[%s2071 + $0x61] sm:$0xff]
    %v2159 = vld [vmem:[%s2071 + $0x71] sm:$0xff]
    %v2160 = vld [vmem:[%s2071 + $0xa1] sm:$0xff]
    %v2161 = vld [vmem:[%s2071 + $0xb1] sm:$0xff]
    %v2162 = vld [vmem:[%s2071 + $0xc1] sm:$0xff]
    %v2163 = vld [vmem:[%s2071 + $0xd1] sm:$0xff]
    %v2164 = vld [vmem:[%s2071 + $0xe1] sm:$0xff]
    %v2165 = vld [vmem:[%s2071 + $0xf1] sm:$0xff]
    %v2166 = vld [vmem:[%s2071 + $0x101] sm:$0xff]
    %v2167 = vld [vmem:[%s2071 + $0x111] sm:$0xff]
    %v2168 = vld [vmem:[%s2071 + $0x2] sm:$0xff]
    %v2169 = vld [vmem:[%s2071 + $0x12] sm:$0xff]
    %v2170 = vld [vmem:[%s2071 + $0x22] sm:$0xff]
    %v2171 = vld [vmem:[%s2071 + $0x32] sm:$0xff]
    %v2172 = vld [vmem:[%s2071 + $0x42] sm:$0xff]
    %v2173 = vld [vmem:[%s2071 + $0x52] sm:$0xff]
    %v2174 = vld [vmem:[%s2071 + $0x62] sm:$0xff]
    %v2175 = vld [vmem:[%s2071 + $0x72] sm:$0xff]
    %v2176 = vld [vmem:[%s2071 + $0xa2] sm:$0xff]
    %v2177 = vld [vmem:[%s2071 + $0xb2] sm:$0xff]
    %v2178 = vld [vmem:[%s2071 + $0xc2] sm:$0xff]
    %v2179 = vld [vmem:[%s2071 + $0xd2] sm:$0xff]
    %v2180 = vld [vmem:[%s2071 + $0xe2] sm:$0xff]
    %v2181 = vld [vmem:[%s2071 + $0xf2] sm:$0xff]
    %v2182 = vld [vmem:[%s2071 + $0x102] sm:$0xff]
    %v2183 = vld [vmem:[%s2071 + $0x112] sm:$0xff]
    %s2184 = scalar_lea.vmem [#allocation3], 32
    %v2185 = vld [vmem:[%s2184] sm:$0xff]
    %v2186 = vld [vmem:[%s2184 + $0x10] sm:$0xff]
    %v2187 = vld [vmem:[%s2184 + $0x20] sm:$0xff]
    %v2188 = vld [vmem:[%s2184 + $0x30] sm:$0xff]
    %v2189 = vld [vmem:[%s2184 + $0x40] sm:$0xff]
    %v2190 = vld [vmem:[%s2184 + $0x50] sm:$0xff]
    %v2191 = vld [vmem:[%s2184 + $0x60] sm:$0xff]
    %v2192 = vld [vmem:[%s2184 + $0x70] sm:$0xff]
    %v2193 = vld [vmem:[%s2184 + $0xa0] sm:$0xff]
    %v2194 = vld [vmem:[%s2184 + $0xb0] sm:$0xff]
    %v2195 = vld [vmem:[%s2184 + $0xc0] sm:$0xff]
    %v2196 = vld [vmem:[%s2184 + $0xd0] sm:$0xff]
    %v2197 = vld [vmem:[%s2184 + $0xe0] sm:$0xff]
    %v2198 = vld [vmem:[%s2184 + $0xf0] sm:$0xff]
    %v2199 = vld [vmem:[%s2184 + $0x100] sm:$0xff]
    %v2200 = vld [vmem:[%s2184 + $0x110] sm:$0xff]
    %v2201 = vld [vmem:[%s2184 + $0x1] sm:$0xff]
    %v2202 = vld [vmem:[%s2184 + $0x11] sm:$0xff]
    %v2203 = vld [vmem:[%s2184 + $0x21] sm:$0xff]
    %v2204 = vld [vmem:[%s2184 + $0x31] sm:$0xff]
    %v2205 = vld [vmem:[%s2184 + $0x41] sm:$0xff]
    %v2206 = vld [vmem:[%s2184 + $0x51] sm:$0xff]
    %v2207 = vld [vmem:[%s2184 + $0x61] sm:$0xff]
    %v2208 = vld [vmem:[%s2184 + $0x71] sm:$0xff]
    %v2209 = vld [vmem:[%s2184 + $0xa1] sm:$0xff]
    %v2210 = vld [vmem:[%s2184 + $0xb1] sm:$0xff]
    %v2211 = vld [vmem:[%s2184 + $0xc1] sm:$0xff]
    %v2212 = vld [vmem:[%s2184 + $0xd1] sm:$0xff]
    %v2213 = vld [vmem:[%s2184 + $0xe1] sm:$0xff]
    %v2214 = vld [vmem:[%s2184 + $0xf1] sm:$0xff]
    %v2215 = vld [vmem:[%s2184 + $0x101] sm:$0xff]
    %v2216 = vld [vmem:[%s2184 + $0x111] sm:$0xff]
    %v2217 = vld [vmem:[%s2184 + $0x2] sm:$0xff]
    %v2218 = vld [vmem:[%s2184 + $0x12] sm:$0xff]
    %v2219 = vld [vmem:[%s2184 + $0x22] sm:$0xff]
    %v2220 = vld [vmem:[%s2184 + $0x32] sm:$0xff]
    %v2221 = vld [vmem:[%s2184 + $0x42] sm:$0xff]
    %v2222 = vld [vmem:[%s2184 + $0x52] sm:$0xff]
    %v2223 = vld [vmem:[%s2184 + $0x62] sm:$0xff]
    %v2224 = vld [vmem:[%s2184 + $0x72] sm:$0xff]
    %v2225 = vld [vmem:[%s2184 + $0xa2] sm:$0xff]
    %v2226 = vld [vmem:[%s2184 + $0xb2] sm:$0xff]
    %v2227 = vld [vmem:[%s2184 + $0xc2] sm:$0xff]
    %v2228 = vld [vmem:[%s2184 + $0xd2] sm:$0xff]
    %v2229 = vld [vmem:[%s2184 + $0xe2] sm:$0xff]
    %v2230 = vld [vmem:[%s2184 + $0xf2] sm:$0xff]
    %v2231 = vld [vmem:[%s2184 + $0x102] sm:$0xff]
    %v2232 = vld [vmem:[%s2184 + $0x112] sm:$0xff]
    %2249 = vrot.lane.b32.xlu0 %v2104, 16
    %v2250 = vpop.permute.xlu0 %2249
    %2251 = vrot.lane.b32.xlu0 %v2105, 16
    %v2252 = vpop.permute.xlu0 %2251
    %2253 = vrot.lane.b32.xlu0 %v2106, 16
    %v2254 = vpop.permute.xlu0 %2253
    %2255 = vrot.lane.b32.xlu0 %v2107, 16
    %v2256 = vpop.permute.xlu0 %2255
    %2257 = vrot.lane.b32.xlu0 %v2108, 16
    %v2258 = vpop.permute.xlu0 %2257
    %2259 = vrot.lane.b32.xlu0 %v2109, 16
    %v2260 = vpop.permute.xlu0 %2259
    %2261 = vrot.lane.b32.xlu0 %v2110, 16
    %v2262 = vpop.permute.xlu0 %2261
    %2263 = vrot.lane.b32.xlu0 %v2111, 16
    %v2264 = vpop.permute.xlu0 %2263
    %2265 = vrot.lane.b32.xlu0 %v2112, 16
    %v2266 = vpop.permute.xlu0 %2265
    %2267 = vrot.lane.b32.xlu0 %v2113, 16
    %v2268 = vpop.permute.xlu0 %2267
    %2269 = vrot.lane.b32.xlu0 %v2114, 16
    %v2270 = vpop.permute.xlu0 %2269
    %2271 = vrot.lane.b32.xlu0 %v2115, 16
    %v2272 = vpop.permute.xlu0 %2271
    %2273 = vrot.lane.b32.xlu0 %v2116, 16
    %v2274 = vpop.permute.xlu0 %2273
    %2275 = vrot.lane.b32.xlu0 %v2117, 16
    %v2276 = vpop.permute.xlu0 %2275
    %2277 = vrot.lane.b32.xlu0 %v2118, 16
    %v2278 = vpop.permute.xlu0 %2277
    %2279 = vrot.lane.b32.xlu0 %v2119, 16
    %v2280 = vpop.permute.xlu0 %2279
    %2313 = vrot.lane.b32.xlu0 %v2120, 32
    %v2314 = vpop.permute.xlu0 %2313
    %2315 = vrot.lane.b32.xlu0 %v2121, 32
    %v2316 = vpop.permute.xlu0 %2315
    %2317 = vrot.lane.b32.xlu0 %v2122, 32
    %v2318 = vpop.permute.xlu0 %2317
    %2319 = vrot.lane.b32.xlu0 %v2123, 32
    %v2320 = vpop.permute.xlu0 %2319
    %2321 = vrot.lane.b32.xlu0 %v2124, 32
    %v2322 = vpop.permute.xlu0 %2321
    %2323 = vrot.lane.b32.xlu0 %v2125, 32
    %v2324 = vpop.permute.xlu0 %2323
    %2325 = vrot.lane.b32.xlu0 %v2126, 32
    %v2326 = vpop.permute.xlu0 %2325
    %2327 = vrot.lane.b32.xlu0 %v2127, 32
    %v2328 = vpop.permute.xlu0 %2327
    %2329 = vrot.lane.b32.xlu0 %v2128, 32
    %v2330 = vpop.permute.xlu0 %2329
    %2331 = vrot.lane.b32.xlu0 %v2129, 32
    %v2332 = vpop.permute.xlu0 %2331
    %2333 = vrot.lane.b32.xlu0 %v2130, 32
    %v2334 = vpop.permute.xlu0 %2333
    %2335 = vrot.lane.b32.xlu0 %v2131, 32
    %v2336 = vpop.permute.xlu0 %2335
    %2337 = vrot.lane.b32.xlu0 %v2132, 32
    %v2338 = vpop.permute.xlu0 %2337
    %2339 = vrot.lane.b32.xlu0 %v2133, 32
    %v2340 = vpop.permute.xlu0 %2339
    %2341 = vrot.lane.b32.xlu0 %v2134, 32
    %v2342 = vpop.permute.xlu0 %2341
    %2343 = vrot.lane.b32.xlu0 %v2135, 32
    %v2344 = vpop.permute.xlu0 %2343
    %2377 = vrot.lane.b32.xlu0 %v2136, 48
    %v2378 = vpop.permute.xlu0 %2377
    %2379 = vrot.lane.b32.xlu0 %v2137, 48
    %v2380 = vpop.permute.xlu0 %2379
    %2381 = vrot.lane.b32.xlu0 %v2138, 48
    %v2382 = vpop.permute.xlu0 %2381
    %2383 = vrot.lane.b32.xlu0 %v2139, 48
    %v2384 = vpop.permute.xlu0 %2383
    %2385 = vrot.lane.b32.xlu0 %v2140, 48
    %v2386 = vpop.permute.xlu0 %2385
    %2387 = vrot.lane.b32.xlu0 %v2141, 48
    %v2388 = vpop.permute.xlu0 %2387
    %2389 = vrot.lane.b32.xlu0 %v2142, 48
    %v2390 = vpop.permute.xlu0 %2389
    %2391 = vrot.lane.b32.xlu0 %v2143, 48
    %v2392 = vpop.permute.xlu0 %2391
    %2393 = vrot.lane.b32.xlu0 %v2144, 48
    %v2394 = vpop.permute.xlu0 %2393
    %2395 = vrot.lane.b32.xlu0 %v2145, 48
    %v2396 = vpop.permute.xlu0 %2395
    %2397 = vrot.lane.b32.xlu0 %v2146, 48
    %v2398 = vpop.permute.xlu0 %2397
    %2399 = vrot.lane.b32.xlu0 %v2147, 48
    %v2400 = vpop.permute.xlu0 %2399
    %2401 = vrot.lane.b32.xlu0 %v2148, 48
    %v2402 = vpop.permute.xlu0 %2401
    %2403 = vrot.lane.b32.xlu0 %v2149, 48
    %v2404 = vpop.permute.xlu0 %2403
    %2405 = vrot.lane.b32.xlu0 %v2150, 48
    %v2406 = vpop.permute.xlu0 %2405
    %2407 = vrot.lane.b32.xlu0 %v2151, 48
    %v2408 = vpop.permute.xlu0 %2407
    %2441 = vrot.lane.b32.xlu0 %v2152, 64
    %v2442 = vpop.permute.xlu0 %2441
    %2443 = vrot.lane.b32.xlu0 %v2153, 64
    %v2444 = vpop.permute.xlu0 %2443
    %2445 = vrot.lane.b32.xlu0 %v2154, 64
    %v2446 = vpop.permute.xlu0 %2445
    %2447 = vrot.lane.b32.xlu0 %v2155, 64
    %v2448 = vpop.permute.xlu0 %2447
    %2449 = vrot.lane.b32.xlu0 %v2156, 64
    %v2450 = vpop.permute.xlu0 %2449
    %2451 = vrot.lane.b32.xlu0 %v2157, 64
    %v2452 = vpop.permute.xlu0 %2451
    %2453 = vrot.lane.b32.xlu0 %v2158, 64
    %v2454 = vpop.permute.xlu0 %2453
    %2455 = vrot.lane.b32.xlu0 %v2159, 64
    %v2456 = vpop.permute.xlu0 %2455
    %2457 = vrot.lane.b32.xlu0 %v2160, 64
    %v2458 = vpop.permute.xlu0 %2457
    %2459 = vrot.lane.b32.xlu0 %v2161, 64
    %v2460 = vpop.permute.xlu0 %2459
    %2461 = vrot.lane.b32.xlu0 %v2162, 64
    %v2462 = vpop.permute.xlu0 %2461
    %2463 = vrot.lane.b32.xlu0 %v2163, 64
    %v2464 = vpop.permute.xlu0 %2463
    %2465 = vrot.lane.b32.xlu0 %v2164, 64
    %v2466 = vpop.permute.xlu0 %2465
    %2467 = vrot.lane.b32.xlu0 %v2165, 64
    %v2468 = vpop.permute.xlu0 %2467
    %2469 = vrot.lane.b32.xlu0 %v2166, 64
    %v2470 = vpop.permute.xlu0 %2469
    %2471 = vrot.lane.b32.xlu0 %v2167, 64
    %v2472 = vpop.permute.xlu0 %2471
    %2505 = vrot.lane.b32.xlu0 %v2168, 80
    %v2506 = vpop.permute.xlu0 %2505
    %2507 = vrot.lane.b32.xlu0 %v2169, 80
    %v2508 = vpop.permute.xlu0 %2507
    %2509 = vrot.lane.b32.xlu0 %v2170, 80
    %v2510 = vpop.permute.xlu0 %2509
    %2511 = vrot.lane.b32.xlu0 %v2171, 80
    %v2512 = vpop.permute.xlu0 %2511
    %2513 = vrot.lane.b32.xlu0 %v2172, 80
    %v2514 = vpop.permute.xlu0 %2513
    %2515 = vrot.lane.b32.xlu0 %v2173, 80
    %v2516 = vpop.permute.xlu0 %2515
    %2517 = vrot.lane.b32.xlu0 %v2174, 80
    %v2518 = vpop.permute.xlu0 %2517
    %2519 = vrot.lane.b32.xlu0 %v2175, 80
    %v2520 = vpop.permute.xlu0 %2519
    %2521 = vrot.lane.b32.xlu0 %v2176, 80
    %v2522 = vpop.permute.xlu0 %2521
    %2523 = vrot.lane.b32.xlu0 %v2177, 80
    %v2524 = vpop.permute.xlu0 %2523
    %2525 = vrot.lane.b32.xlu0 %v2178, 80
    %v2526 = vpop.permute.xlu0 %2525
    %2527 = vrot.lane.b32.xlu0 %v2179, 80
    %v2528 = vpop.permute.xlu0 %2527
    %2529 = vrot.lane.b32.xlu0 %v2180, 80
    %v2530 = vpop.permute.xlu0 %2529
    %2531 = vrot.lane.b32.xlu0 %v2181, 80
    %v2532 = vpop.permute.xlu0 %2531
    %2533 = vrot.lane.b32.xlu0 %v2182, 80
    %v2534 = vpop.permute.xlu0 %2533
    %2535 = vrot.lane.b32.xlu0 %v2183, 80
    %v2536 = vpop.permute.xlu0 %2535
    %2569 = vrot.lane.b32.xlu0 %v2185, 96
    %v2570 = vpop.permute.xlu0 %2569
    %2571 = vrot.lane.b32.xlu0 %v2186, 96
    %v2572 = vpop.permute.xlu0 %2571
    %2573 = vrot.lane.b32.xlu0 %v2187, 96
    %v2574 = vpop.permute.xlu0 %2573
    %2575 = vrot.lane.b32.xlu0 %v2188, 96
    %v2576 = vpop.permute.xlu0 %2575
    %2577 = vrot.lane.b32.xlu0 %v2189, 96
    %v2578 = vpop.permute.xlu0 %2577
    %2579 = vrot.lane.b32.xlu0 %v2190, 96
    %v2580 = vpop.permute.xlu0 %2579
    %2581 = vrot.lane.b32.xlu0 %v2191, 96
    %v2582 = vpop.permute.xlu0 %2581
    %2583 = vrot.lane.b32.xlu0 %v2192, 96
    %v2584 = vpop.permute.xlu0 %2583
    %2585 = vrot.lane.b32.xlu0 %v2193, 96
    %v2586 = vpop.permute.xlu0 %2585
    %2587 = vrot.lane.b32.xlu0 %v2194, 96
    %v2588 = vpop.permute.xlu0 %2587
    %2589 = vrot.lane.b32.xlu0 %v2195, 96
    %v2590 = vpop.permute.xlu0 %2589
    %2591 = vrot.lane.b32.xlu0 %v2196, 96
    %v2592 = vpop.permute.xlu0 %2591
    %2593 = vrot.lane.b32.xlu0 %v2197, 96
    %v2594 = vpop.permute.xlu0 %2593
    %2595 = vrot.lane.b32.xlu0 %v2198, 96
    %v2596 = vpop.permute.xlu0 %2595
    %2597 = vrot.lane.b32.xlu0 %v2199, 96
    %v2598 = vpop.permute.xlu0 %2597
    %2599 = vrot.lane.b32.xlu0 %v2200, 96
    %v2600 = vpop.permute.xlu0 %2599
    %2633 = vrot.lane.b32.xlu0 %v2201, 112
    %v2634 = vpop.permute.xlu0 %2633
    %2635 = vrot.lane.b32.xlu0 %v2202, 112
    %v2636 = vpop.permute.xlu0 %2635
    %2637 = vrot.lane.b32.xlu0 %v2203, 112
    %v2638 = vpop.permute.xlu0 %2637
    %2639 = vrot.lane.b32.xlu0 %v2204, 112
    %v2640 = vpop.permute.xlu0 %2639
    %2641 = vrot.lane.b32.xlu0 %v2205, 112
    %v2642 = vpop.permute.xlu0 %2641
    %2643 = vrot.lane.b32.xlu0 %v2206, 112
    %v2644 = vpop.permute.xlu0 %2643
    %2645 = vrot.lane.b32.xlu0 %v2207, 112
    %v2646 = vpop.permute.xlu0 %2645
    %2647 = vrot.lane.b32.xlu0 %v2208, 112
    %v2648 = vpop.permute.xlu0 %2647
    %2649 = vrot.lane.b32.xlu0 %v2209, 112
    %v2650 = vpop.permute.xlu0 %2649
    %2651 = vrot.lane.b32.xlu0 %v2210, 112
    %v2652 = vpop.permute.xlu0 %2651
    %2653 = vrot.lane.b32.xlu0 %v2211, 112
    %v2654 = vpop.permute.xlu0 %2653
    %2655 = vrot.lane.b32.xlu0 %v2212, 112
    %v2656 = vpop.permute.xlu0 %2655
    %2657 = vrot.lane.b32.xlu0 %v2213, 112
    %v2658 = vpop.permute.xlu0 %2657
    %2659 = vrot.lane.b32.xlu0 %v2214, 112
    %v2660 = vpop.permute.xlu0 %2659
    %2661 = vrot.lane.b32.xlu0 %v2215, 112
    %v2662 = vpop.permute.xlu0 %2661
    %2663 = vrot.lane.b32.xlu0 %v2216, 112
    %v2664 = vpop.permute.xlu0 %2663
    %v2681 = vsel %vm1200, %v2088, %v2250
    %v2682 = vsel %vm1200, %v2089, %v2252
    %v2683 = vsel %vm1200, %v2090, %v2254
    %v2684 = vsel %vm1200, %v2091, %v2256
    %v2685 = vsel %vm1200, %v2092, %v2258
    %v2686 = vsel %vm1200, %v2093, %v2260
    %v2687 = vsel %vm1200, %v2094, %v2262
    %v2688 = vsel %vm1200, %v2095, %v2264
    %v2689 = vsel %vm1200, %v2096, %v2266
    %v2690 = vsel %vm1200, %v2097, %v2268
    %v2691 = vsel %vm1200, %v2098, %v2270
    %v2692 = vsel %vm1200, %v2099, %v2272
    %v2693 = vsel %vm1200, %v2100, %v2274
    %v2694 = vsel %vm1200, %v2101, %v2276
    %v2695 = vsel %vm1200, %v2102, %v2278
    %v2696 = vsel %vm1200, %v2103, %v2280
    %v2697 = vsel %vm66, %v2681, %v2314
    %v2698 = vsel %vm66, %v2682, %v2316
    %v2699 = vsel %vm66, %v2683, %v2318
    %v2700 = vsel %vm66, %v2684, %v2320
    %v2701 = vsel %vm66, %v2685, %v2322
    %v2702 = vsel %vm66, %v2686, %v2324
    %v2703 = vsel %vm66, %v2687, %v2326
    %v2704 = vsel %vm66, %v2688, %v2328
    %v2705 = vsel %vm66, %v2689, %v2330
    %v2706 = vsel %vm66, %v2690, %v2332
    %v2707 = vsel %vm66, %v2691, %v2334
    %v2708 = vsel %vm66, %v2692, %v2336
    %v2709 = vsel %vm66, %v2693, %v2338
    %v2710 = vsel %vm66, %v2694, %v2340
    %v2711 = vsel %vm66, %v2695, %v2342
    %v2712 = vsel %vm66, %v2696, %v2344
    %v2713 = vsel %vm1133, %v2697, %v2378
    %v2714 = vsel %vm1133, %v2698, %v2380
    %v2715 = vsel %vm1133, %v2699, %v2382
    %v2716 = vsel %vm1133, %v2700, %v2384
    %v2717 = vsel %vm1133, %v2701, %v2386
    %v2718 = vsel %vm1133, %v2702, %v2388
    %v2719 = vsel %vm1133, %v2703, %v2390
    %v2720 = vsel %vm1133, %v2704, %v2392
    %v2721 = vsel %vm1133, %v2705, %v2394
    %v2722 = vsel %vm1133, %v2706, %v2396
    %v2723 = vsel %vm1133, %v2707, %v2398
    %v2724 = vsel %vm1133, %v2708, %v2400
    %v2725 = vsel %vm1133, %v2709, %v2402
    %v2726 = vsel %vm1133, %v2710, %v2404
    %v2727 = vsel %vm1133, %v2711, %v2406
    %v2728 = vsel %vm1133, %v2712, %v2408
    %v2729 = vsel %vm1234, %v2713, %v2442
    %v2730 = vsel %vm1234, %v2714, %v2444
    %v2731 = vsel %vm1234, %v2715, %v2446
    %v2732 = vsel %vm1234, %v2716, %v2448
    %v2733 = vsel %vm1234, %v2717, %v2450
    %v2734 = vsel %vm1234, %v2718, %v2452
    %v2735 = vsel %vm1234, %v2719, %v2454
    %v2736 = vsel %vm1234, %v2720, %v2456
    %v2737 = vsel %vm1234, %v2721, %v2458
    %v2738 = vsel %vm1234, %v2722, %v2460
    %v2739 = vsel %vm1234, %v2723, %v2462
    %v2740 = vsel %vm1234, %v2724, %v2464
    %v2741 = vsel %vm1234, %v2725, %v2466
    %v2742 = vsel %vm1234, %v2726, %v2468
    %v2743 = vsel %vm1234, %v2727, %v2470
    %v2744 = vsel %vm1234, %v2728, %v2472
    %vm2745 = vcmask 654336
    %v2746 = vsel %vm2745, %v2729, %v2506
    %v2747 = vsel %vm2745, %v2730, %v2508
    %v2748 = vsel %vm2745, %v2731, %v2510
    %v2749 = vsel %vm2745, %v2732, %v2512
    %v2750 = vsel %vm2745, %v2733, %v2514
    %v2751 = vsel %vm2745, %v2734, %v2516
    %v2752 = vsel %vm2745, %v2735, %v2518
    %v2753 = vsel %vm2745, %v2736, %v2520
    %v2754 = vsel %vm2745, %v2737, %v2522
    %v2755 = vsel %vm2745, %v2738, %v2524
    %v2756 = vsel %vm2745, %v2739, %v2526
    %v2757 = vsel %vm2745, %v2740, %v2528
    %v2758 = vsel %vm2745, %v2741, %v2530
    %v2759 = vsel %vm2745, %v2742, %v2532
    %v2760 = vsel %vm2745, %v2743, %v2534
    %v2761 = vsel %vm2745, %v2744, %v2536
    %v2762 = vsel %vm1167, %v2746, %v2570
    %v2763 = vsel %vm1167, %v2747, %v2572
    %v2764 = vsel %vm1167, %v2748, %v2574
    %v2765 = vsel %vm1167, %v2749, %v2576
    %v2766 = vsel %vm1167, %v2750, %v2578
    %v2767 = vsel %vm1167, %v2751, %v2580
    %v2768 = vsel %vm1167, %v2752, %v2582
    %v2769 = vsel %vm1167, %v2753, %v2584
    %v2770 = vsel %vm1167, %v2754, %v2586
    %v2771 = vsel %vm1167, %v2755, %v2588
    %v2772 = vsel %vm1167, %v2756, %v2590
    %v2773 = vsel %vm1167, %v2757, %v2592
    %v2774 = vsel %vm1167, %v2758, %v2594
    %v2775 = vsel %vm1167, %v2759, %v2596
    %v2776 = vsel %vm1167, %v2760, %v2598
    %v2777 = vsel %vm1167, %v2761, %v2600
    %vm2778 = vcmask 916480
    %v2779 = vsel %vm2778, %v2762, %v2634
    %v2780 = vsel %vm2778, %v2763, %v2636
    %v2781 = vsel %vm2778, %v2764, %v2638
    %v2782 = vsel %vm2778, %v2765, %v2640
    %v2783 = vsel %vm2778, %v2766, %v2642
    %v2784 = vsel %vm2778, %v2767, %v2644
    %v2785 = vsel %vm2778, %v2768, %v2646
    %v2786 = vsel %vm2778, %v2769, %v2648
    %v2787 = vsel %vm2778, %v2770, %v2650
    %v2788 = vsel %vm2778, %v2771, %v2652
    %v2789 = vsel %vm2778, %v2772, %v2654
    %v2790 = vsel %vm2778, %v2773, %v2656
    %v2791 = vsel %vm2778, %v2774, %v2658
    %v2792 = vsel %vm2778, %v2775, %v2660
    %v2793 = vsel %vm2778, %v2776, %v2662
    %v2794 = vsel %vm2778, %v2777, %v2664
    %v2795 = vld [vmem:[%s5] sm:$0xff]
    %v2796 = vld [vmem:[%s5 + $0x8] sm:$0xff]
    %v2797 = vld [vmem:[%s5 + $0x10] sm:$0xff]
    %v2798 = vld [vmem:[%s5 + $0x18] sm:$0xff]
    %v2799 = vld [vmem:[%s5 + $0x20] sm:$0xff]
    %v2800 = vld [vmem:[%s5 + $0x28] sm:$0xff]
    %v2801 = vld [vmem:[%s5 + $0x30] sm:$0xff]
    %v2802 = vld [vmem:[%s5 + $0x38] sm:$0xff]
    %v2803 = vld [vmem:[%s5 + $0x40] sm:$0xff]
    %v2804 = vld [vmem:[%s5 + $0x48] sm:$0xff]
    %v2805 = vld [vmem:[%s5 + $0x50] sm:$0xff]
    %v2806 = vld [vmem:[%s5 + $0x58] sm:$0xff]
    %v2807 = vld [vmem:[%s5 + $0x60] sm:$0xff]
    %v2808 = vld [vmem:[%s5 + $0x68] sm:$0xff]
    %v2809 = vld [vmem:[%s5 + $0x70] sm:$0xff]
    %v2810 = vld [vmem:[%s5 + $0x78] sm:$0xff]
    %v2811 = vld [vmem:[%s5 + $0x80] sm:$0xff]
    %v2812 = vld [vmem:[%s5 + $0x88] sm:$0xff]
    %v2813 = vld [vmem:[%s6] sm:$0x1]
    %v2815 = vlaneseq
    %v2816 = vshrl.u32 %v2815, 7
    %v2817 = vsub.s32 0, %v2816
    %v2818 = vrot.slane %v2813, %v2817
    %v2821 = vsel %vm1200, %v2217, 0
    %v2824 = vsel %vm1200, %v2218, 0
    %v2827 = vsel %vm1200, %v2219, 0
    %v2830 = vsel %vm1200, %v2220, 0
    %v2833 = vsel %vm1200, %v2221, 0
    %v2836 = vsel %vm1200, %v2222, 0
    %v2839 = vsel %vm1200, %v2223, 0
    %v2842 = vsel %vm1200, %v2224, 0
    %v2845 = vsel %vm1200, %v2225, 0
    %v2848 = vsel %vm1200, %v2226, 0
    %v2851 = vsel %vm1200, %v2227, 0
    %v2854 = vsel %vm1200, %v2228, 0
    %v2857 = vsel %vm1200, %v2229, 0
    %v2860 = vsel %vm1200, %v2230, 0
    %v2863 = vsel %vm1200, %v2231, 0
    %v2866 = vsel %vm1200, %v2232, 0
    %2868 = vmatprep.subr.mxu0 0.0
    %2869 = vmatpush1.msra.mxu0 %v2795
    %2870 = vmatprep.subr.mxu0 0.0
    %2871 = vmatpush1.msra.mxu0 %v2796
    %2872 = vmatprep.subr.mxu0 0.0
    %2873 = vmatpush1.msra.mxu0 %v2797
    %2874 = vmatprep.subr.mxu0 0.0
    %2875 = vmatpush1.msra.mxu0 %v2798
    %2876 = vmatprep.subr.mxu0 0.0
    %2877 = vmatpush1.msra.mxu0 %v2799
    %2878 = vmatprep.subr.mxu0 0.0
    %2879 = vmatpush1.msra.mxu0 %v2800
    %2880 = vmatprep.subr.mxu0 0.0
    %2881 = vmatpush1.msra.mxu0 %v2801
    %2882 = vmatprep.subr.mxu0 0.0
    %2883 = vmatpush1.msra.mxu0 %v2802
    %2884 = vmatprep.subr.mxu0 0.0
    %2885 = vmatpush1.msra.mxu0 %v2803
    %2886 = vmatprep.subr.mxu0 0.0
    %2887 = vmatpush1.msra.mxu0 %v2804
    %2888 = vmatprep.subr.mxu0 0.0
    %2889 = vmatpush1.msra.mxu0 %v2805
    %2890 = vmatprep.subr.mxu0 0.0
    %2891 = vmatpush1.msra.mxu0 %v2806
    %2892 = vmatprep.subr.mxu0 0.0
    %2893 = vmatpush1.msra.mxu0 %v2807
    %2894 = vmatprep.subr.mxu0 0.0
    %2895 = vmatpush1.msra.mxu0 %v2808
    %2896 = vmatprep.subr.mxu0 0.0
    %2897 = vmatpush1.msra.mxu0 %v2809
    %2898 = vmatprep.subr.mxu0 0.0
    %2899 = vmatpush1.msra.mxu0 %v2810
    %2900 = vmatprep.subr.mxu0 0.0
    %2901 = vmatpush1.msra.mxu0 %v2811
    %2902 = vmatprep.subr.mxu0 0.0
    %2903 = vmatpush1.msra.mxu0 %v2812
    %2904 = vmatprep.subr.mxu0 0.0
    %2905 = vmatpush1.msra.mxu0 0.0
    %2906 = vmatprep.subr.mxu0 0.0
    %2907 = vmatpush1.msra.mxu0 0.0
    %2908 = vmatprep.subr.mxu0 0.0
    %2909 = vmatpush1.msra.mxu0 0.0
    %2910 = vmatprep.subr.mxu0 0.0
    %2911 = vmatpush1.msra.mxu0 0.0
    %2912 = vmatprep.subr.mxu0 0.0
    %2913 = vmatpush1.msra.mxu0 0.0
    %2914 = vmatprep.subr.mxu0 0.0
    %2915 = vmatpush1.msra.mxu0 0.0
    %2916 = vmatprep.subr.mxu0 0.0
    %2917 = vmatpush1.msra.mxu0 0.0
    %2918 = vmatprep.subr.mxu0 0.0
    %2919 = vmatpush1.msra.mxu0 0.0
    %2920 = vmatprep.subr.mxu0 0.0
    %2921 = vmatpush1.msra.mxu0 0.0
    %2922 = vmatprep.subr.mxu0 0.0
    %2923 = vmatpush1.msra.mxu0 0.0
    %2924 = vmatprep.subr.mxu0 0.0
    %2925 = vmatpush1.msra.mxu0 0.0
    %2926 = vmatprep.subr.mxu0 0.0
    %2927 = vmatpush1.msra.mxu0 0.0
    %2928 = vmatprep.subr.mxu0 0.0
    %2929 = vmatpush1.msra.mxu0 0.0
    %2930 = vmatprep.subr.mxu0 0.0
    %2931 = vmatpush1.msra.mxu0 0.0
    %2932 = vmatprep.mubr.f32.mxu0 %v2821
    %2933 = vmatmul.mubr.f32.gmra.mrb[0].mxu0 %v2779
    %v2934 = vpop.f32.mrb[0].mxu0
    %v2935 = vadd.f32 %v2818, %v2934
    %v2936 = vpop.f32.mrb[0].mxu0
    %2937 = vmatprep.mubr.f32.mxu0 %v2824
    %2938 = vmatmul.mubr.f32.gmra.mrb[0].mxu0 %v2780
    %v2939 = vpop.f32.mrb[0].mxu0
    %v2940 = vadd.f32 %v2818, %v2939
    %v2941 = vpop.f32.mrb[0].mxu0
    %2942 = vmatprep.mubr.f32.mxu0 %v2827
    %2943 = vmatmul.mubr.f32.gmra.mrb[0].mxu0 %v2781
    %v2944 = vpop.f32.mrb[0].mxu0
    %v2945 = vadd.f32 %v2818, %v2944
    %v2946 = vpop.f32.mrb[0].mxu0
    %2947 = vmatprep.mubr.f32.mxu0 %v2830
    %2948 = vmatmul.mubr.f32.gmra.mrb[0].mxu0 %v2782
    %v2949 = vpop.f32.mrb[0].mxu0
    %v2950 = vadd.f32 %v2818, %v2949
    %v2951 = vpop.f32.mrb[0].mxu0
    %2952 = vmatprep.mubr.f32.mxu0 %v2833
    %2953 = vmatmul.mubr.f32.gmra.mrb[0].mxu0 %v2783
    %v2954 = vpop.f32.mrb[0].mxu0
    %v2955 = vadd.f32 %v2818, %v2954
    %v2956 = vpop.f32.mrb[0].mxu0
    %2957 = vmatprep.mubr.f32.mxu0 %v2836
    %2958 = vmatmul.mubr.f32.gmra.mrb[0].mxu0 %v2784
    %v2959 = vpop.f32.mrb[0].mxu0
    %v2960 = vadd.f32 %v2818, %v2959
    %v2961 = vpop.f32.mrb[0].mxu0
    %2962 = vmatprep.mubr.f32.mxu0 %v2839
    %2963 = vmatmul.mubr.f32.gmra.mrb[0].mxu0 %v2785
    %v2964 = vpop.f32.mrb[0].mxu0
    %v2965 = vadd.f32 %v2818, %v2964
    %v2966 = vpop.f32.mrb[0].mxu0
    %2967 = vmatprep.mubr.f32.mxu0 %v2842
    %2968 = vmatmul.mubr.f32.gmra.mrb[0].mxu0 %v2786
    %v2969 = vpop.f32.mrb[0].mxu0
    %v2970 = vadd.f32 %v2818, %v2969
    %v2971 = vpop.f32.mrb[0].mxu0
    %2972 = vmatprep.mubr.f32.mxu0 %v2845
    %2973 = vmatmul.mubr.f32.gmra.mrb[0].mxu0 %v2787
    %v2974 = vpop.f32.mrb[0].mxu0
    %v2975 = vadd.f32 %v2818, %v2974
    %v2976 = vpop.f32.mrb[0].mxu0
    %2977 = vmatprep.mubr.f32.mxu0 %v2848
    %2978 = vmatmul.mubr.f32.gmra.mrb[0].mxu0 %v2788
    %v2979 = vpop.f32.mrb[0].mxu0
    %v2980 = vadd.f32 %v2818, %v2979
    %v2981 = vpop.f32.mrb[0].mxu0
    %2982 = vmatprep.mubr.f32.mxu0 %v2851
    %2983 = vmatmul.mubr.f32.gmra.mrb[0].mxu0 %v2789
    %v2984 = vpop.f32.mrb[0].mxu0
    %v2985 = vadd.f32 %v2818, %v2984
    %v2986 = vpop.f32.mrb[0].mxu0
    %2987 = vmatprep.mubr.f32.mxu0 %v2854
    %2988 = vmatmul.mubr.f32.gmra.mrb[0].mxu0 %v2790
    %v2989 = vpop.f32.mrb[0].mxu0
    %v2990 = vadd.f32 %v2818, %v2989
    %v2991 = vpop.f32.mrb[0].mxu0
    %2992 = vmatprep.mubr.f32.mxu0 %v2857
    %2993 = vmatmul.mubr.f32.gmra.mrb[0].mxu0 %v2791
    %v2994 = vpop.f32.mrb[0].mxu0
    %v2995 = vadd.f32 %v2818, %v2994
    %v2996 = vpop.f32.mrb[0].mxu0
    %2997 = vmatprep.mubr.f32.mxu0 %v2860
    %2998 = vmatmul.mubr.f32.gmra.mrb[0].mxu0 %v2792
    %v2999 = vpop.f32.mrb[0].mxu0
    %v3000 = vadd.f32 %v2818, %v2999
    %v3001 = vpop.f32.mrb[0].mxu0
    %3002 = vmatprep.mubr.f32.mxu0 %v2863
    %3003 = vmatmul.mubr.f32.gmra.mrb[0].mxu0 %v2793
    %v3004 = vpop.f32.mrb[0].mxu0
    %v3005 = vadd.f32 %v2818, %v3004
    %v3006 = vpop.f32.mrb[0].mxu0
    %3007 = vmatprep.mubr.f32.mxu0 %v2866
    %3008 = vmatmul.mubr.f32.gmra.mrb[0].mxu0 %v2794
    %v3009 = vpop.f32.mrb[0].mxu0
    %v3010 = vadd.f32 %v2818, %v3009
    %v3011 = vpop.f32.mrb[0].mxu0
    %3012 = vdwg.mxu0
    %v3013 = vmax.f32 %v2935, 0.0
    %v3014 = vmax.f32 %v2940, 0.0
    %v3015 = vmax.f32 %v2945, 0.0
    %v3016 = vmax.f32 %v2950, 0.0
    %v3017 = vmax.f32 %v2955, 0.0
    %v3018 = vmax.f32 %v2960, 0.0
    %v3019 = vmax.f32 %v2965, 0.0
    %v3020 = vmax.f32 %v2970, 0.0
    %v3021 = vmax.f32 %v2975, 0.0
    %v3022 = vmax.f32 %v2980, 0.0
    %v3023 = vmax.f32 %v2985, 0.0
    %v3024 = vmax.f32 %v2990, 0.0
    %v3025 = vmax.f32 %v2995, 0.0
    %v3026 = vmax.f32 %v3000, 0.0
    %v3027 = vmax.f32 %v3005, 0.0
    %v3028 = vmax.f32 %v3010, 0.0
    %v3029 = vsel %vm66, %v3013, 0.0
    %v3030 = vsel %vm66, %v3014, 0.0
    %v3031 = vadd.f32 %v3029, %v3030
    %v3032 = vsel %vm66, %v3015, 0.0
    %v3033 = vadd.f32 %v3031, %v3032
    %v3034 = vsel %vm66, %v3016, 0.0
    %v3035 = vadd.f32 %v3033, %v3034
    %v3036 = vsel %vm66, %v3017, 0.0
    %v3037 = vadd.f32 %v3035, %v3036
    %v3038 = vsel %vm66, %v3018, 0.0
    %v3039 = vadd.f32 %v3037, %v3038
    %v3040 = vsel %vm66, %v3019, 0.0
    %v3041 = vadd.f32 %v3039, %v3040
    %v3042 = vsel %vm66, %v3020, 0.0
    %v3043 = vadd.f32 %v3041, %v3042
    %v3044 = vrot.slane %v3043, 4
    %v3045 = vadd.f32 %v3043, %v3044
    %v3046 = vrot.slane %v3045, 2
    %v3047 = vadd.f32 %v3045, %v3046
    %v3048 = vrot.slane %v3047, 1
    %v3049 = vadd.f32 %v3047, %v3048
    %v3050 = vsel %vm66, %v3021, 0.0
    %v3051 = vsel %vm66, %v3022, 0.0
    %v3052 = vadd.f32 %v3050, %v3051
    %v3053 = vsel %vm66, %v3023, 0.0
    %v3054 = vadd.f32 %v3052, %v3053
    %v3055 = vsel %vm66, %v3024, 0.0
    %v3056 = vadd.f32 %v3054, %v3055
    %v3057 = vsel %vm66, %v3025, 0.0
    %v3058 = vadd.f32 %v3056, %v3057
    %v3059 = vsel %vm66, %v3026, 0.0
    %v3060 = vadd.f32 %v3058, %v3059
    %v3061 = vsel %vm66, %v3027, 0.0
    %v3062 = vadd.f32 %v3060, %v3061
    %v3063 = vsel %vm66, %v3028, 0.0
    %v3064 = vadd.f32 %v3062, %v3063
    %v3065 = vrot.slane %v3064, 4
    %v3066 = vadd.f32 %v3064, %v3065
    %v3067 = vrot.slane %v3066, 2
    %v3068 = vadd.f32 %v3066, %v3067
    %v3069 = vrot.slane %v3068, 1
    %v3070 = vadd.f32 %v3068, %v3069
    %v3071 = vmul.f32 %v3049, 0.015625
    %v3072 = vmul.f32 %v3070, 0.015625
    %v3073 = vld [vmem:[%s7] sm:$0xff]
    %v3074 = vld [vmem:[%s7 + $0x8] sm:$0xff]
    %v3075 = vld [vmem:[%s7 + $0x10] sm:$0xff]
    %v3076 = vld [vmem:[%s7 + $0x18] sm:$0xff]
    %v3077 = vld [vmem:[%s7 + $0x20] sm:$0xff]
    %v3078 = vld [vmem:[%s7 + $0x28] sm:$0xff]
    %v3079 = vld [vmem:[%s7 + $0x30] sm:$0xff]
    %v3080 = vld [vmem:[%s8] sm:$0xff]
    %v3081 = vld [vmem:[%s8 + $0x8] sm:$0xff]
    %v3082 = vld [vmem:[%s8 + $0x10] sm:$0xff]
    %v3083 = vld [vmem:[%s8 + $0x18] sm:$0xff]
    %v3084 = vld [vmem:[%s8 + $0x20] sm:$0xff]
    %v3085 = vld [vmem:[%s8 + $0x28] sm:$0xff]
    %v3086 = vld [vmem:[%s8 + $0x30] sm:$0xff]
    %vm3089 = vcmask 1041409
    %v3090 = vsel %vm3089, %v2029, %v2028
    %v3091 = vsel %vm276, %v3090, 0
    %3093 = vmatprep.subr.mxu0 0.0
    %3094 = vmatpush1.msra.mxu0 %v3080
    %3095 = vmatprep.subr.mxu0 0.0
    %3096 = vmatpush1.msra.mxu0 %v3081
    %3097 = vmatprep.subr.mxu0 0.0
    %3098 = vmatpush1.msra.mxu0 %v3082
    %3099 = vmatprep.subr.mxu0 0.0
    %3100 = vmatpush1.msra.mxu0 %v3083
    %3101 = vmatprep.subr.mxu0 0.0
    %3102 = vmatpush1.msra.mxu0 %v3084
    %3103 = vmatprep.subr.mxu0 0.0
    %3104 = vmatpush1.msra.mxu0 %v3085
    %3105 = vmatprep.subr.mxu0 0.0
    %3106 = vmatpush1.msra.mxu0 %v3086
    %3107 = vmatprep.subr.mxu0 0.0
    %3108 = vmatpush1.msra.mxu0 0.0
    %3109 = vmatprep.subr.mxu0 0.0
    %3110 = vmatpush1.msra.mxu0 0.0
    %3111 = vmatprep.subr.mxu0 0.0
    %3112 = vmatpush1.msra.mxu0 0.0
    %3113 = vmatprep.subr.mxu0 0.0
    %3114 = vmatpush1.msra.mxu0 0.0
    %3115 = vmatprep.subr.mxu0 0.0
    %3116 = vmatpush1.msra.mxu0 0.0
    %3117 = vmatprep.subr.mxu0 0.0
    %3118 = vmatpush1.msra.mxu0 0.0
    %3119 = vmatprep.subr.mxu0 0.0
    %3120 = vmatpush1.msra.mxu0 0.0
    %3121 = vmatprep.subr.mxu0 0.0
    %3122 = vmatpush1.msra.mxu0 0.0
    %3123 = vmatprep.subr.mxu0 0.0
    %3124 = vmatpush1.msra.mxu0 0.0
    %3125 = vmatprep.subr.mxu0 0.0
    %3126 = vmatpush1.msra.mxu0 0.0
    %3127 = vmatprep.subr.mxu0 0.0
    %3128 = vmatpush1.msra.mxu0 0.0
    %3129 = vmatprep.subr.mxu0 0.0
    %3130 = vmatpush1.msra.mxu0 0.0
    %3131 = vmatprep.subr.mxu0 0.0
    %3132 = vmatpush1.msra.mxu0 0.0
    %3133 = vmatprep.subr.mxu0 0.0
    %3134 = vmatpush1.msra.mxu0 0.0
    %3135 = vmatprep.subr.mxu0 0.0
    %3136 = vmatpush1.msra.mxu0 0.0
    %3137 = vmatprep.subr.mxu0 0.0
    %3138 = vmatpush1.msra.mxu0 0.0
    %3139 = vmatprep.subr.mxu0 0.0
    %3140 = vmatpush1.msra.mxu0 0.0
    %3141 = vmatprep.subr.mxu0 0.0
    %3142 = vmatpush1.msra.mxu0 0.0
    %3143 = vmatprep.subr.mxu0 0.0
    %3144 = vmatpush1.msra.mxu0 0.0
    %3145 = vmatprep.subr.mxu0 0.0
    %3146 = vmatpush1.msra.mxu0 0.0
    %3147 = vmatprep.subr.mxu0 0.0
    %3148 = vmatpush1.msra.mxu0 0.0
    %3149 = vmatprep.subr.mxu0 0.0
    %3150 = vmatpush1.msra.mxu0 0.0
    %3151 = vmatprep.subr.mxu0 0.0
    %3152 = vmatpush1.msra.mxu0 0.0
    %3153 = vmatprep.subr.mxu0 0.0
    %3154 = vmatpush1.msra.mxu0 0.0
    %3155 = vmatprep.subr.mxu0 0.0
    %3156 = vmatpush1.msra.mxu0 0.0
    %3157 = vmatprep.mubr.f32.mxu0 0.0
    %3158 = vmatmul.mubr.f32.gmra.mrb[0].mxu0 %v3091
    %v3159 = vpop.f32.mrb[0].mxu0
    %v3160 = vadd.f32 0.0, %v3159
    %v3161 = vpop.f32.mrb[0].mxu0
    %3162 = vdwg.mxu0
    %v3165 = vsel %vm3089, %v320, %v319
    %v3166 = vsel %vm276, %v3165, 0
    %3168 = vmatprep.subr.mxu0 0.0
    %3169 = vmatpush1.msra.mxu0 %v3073
    %3170 = vmatprep.subr.mxu0 0.0
    %3171 = vmatpush1.msra.mxu0 %v3074
    %3172 = vmatprep.subr.mxu0 0.0
    %3173 = vmatpush1.msra.mxu0 %v3075
    %3174 = vmatprep.subr.mxu0 0.0
    %3175 = vmatpush1.msra.mxu0 %v3076
    %3176 = vmatprep.subr.mxu0 0.0
    %3177 = vmatpush1.msra.mxu0 %v3077
    %3178 = vmatprep.subr.mxu0 0.0
    %3179 = vmatpush1.msra.mxu0 %v3078
    %3180 = vmatprep.subr.mxu0 0.0
    %3181 = vmatpush1.msra.mxu0 %v3079
    %3182 = vmatprep.subr.mxu0 0.0
    %3183 = vmatpush1.msra.mxu0 0.0
    %3184 = vmatprep.subr.mxu0 0.0
    %3185 = vmatpush1.msra.mxu0 0.0
    %3186 = vmatprep.subr.mxu0 0.0
    %3187 = vmatpush1.msra.mxu0 0.0
    %3188 = vmatprep.subr.mxu0 0.0
    %3189 = vmatpush1.msra.mxu0 0.0
    %3190 = vmatprep.subr.mxu0 0.0
    %3191 = vmatpush1.msra.mxu0 0.0
    %3192 = vmatprep.subr.mxu0 0.0
    %3193 = vmatpush1.msra.mxu0 0.0
    %3194 = vmatprep.subr.mxu0 0.0
    %3195 = vmatpush1.msra.mxu0 0.0
    %3196 = vmatprep.subr.mxu0 0.0
    %3197 = vmatpush1.msra.mxu0 0.0
    %3198 = vmatprep.subr.mxu0 0.0
    %3199 = vmatpush1.msra.mxu0 0.0
    %3200 = vmatprep.subr.mxu0 0.0
    %3201 = vmatpush1.msra.mxu0 0.0
    %3202 = vmatprep.subr.mxu0 0.0
    %3203 = vmatpush1.msra.mxu0 0.0
    %3204 = vmatprep.subr.mxu0 0.0
    %3205 = vmatpush1.msra.mxu0 0.0
    %3206 = vmatprep.subr.mxu0 0.0
    %3207 = vmatpush1.msra.mxu0 0.0
    %3208 = vmatprep.subr.mxu0 0.0
    %3209 = vmatpush1.msra.mxu0 0.0
    %3210 = vmatprep.subr.mxu0 0.0
    %3211 = vmatpush1.msra.mxu0 0.0
    %3212 = vmatprep.subr.mxu0 0.0
    %3213 = vmatpush1.msra.mxu0 0.0
    %3214 = vmatprep.subr.mxu0 0.0
    %3215 = vmatpush1.msra.mxu0 0.0
    %3216 = vmatprep.subr.mxu0 0.0
    %3217 = vmatpush1.msra.mxu0 0.0
    %3218 = vmatprep.subr.mxu0 0.0
    %3219 = vmatpush1.msra.mxu0 0.0
    %3220 = vmatprep.subr.mxu0 0.0
    %3221 = vmatpush1.msra.mxu0 0.0
    %3222 = vmatprep.subr.mxu0 0.0
    %3223 = vmatpush1.msra.mxu0 0.0
    %3224 = vmatprep.subr.mxu0 0.0
    %3225 = vmatpush1.msra.mxu0 0.0
    %3226 = vmatprep.subr.mxu0 0.0
    %3227 = vmatpush1.msra.mxu0 0.0
    %3228 = vmatprep.subr.mxu0 0.0
    %3229 = vmatpush1.msra.mxu0 0.0
    %3230 = vmatprep.subr.mxu0 0.0
    %3231 = vmatpush1.msra.mxu0 0.0
    %3232 = vmatprep.mubr.f32.mxu0 0.0
    %3233 = vmatmul.mubr.f32.gmra.mrb[0].mxu0 %v3166
    %v3234 = vpop.f32.mrb[0].mxu0
    %v3235 = vadd.f32 %v3160, %v3234
    %v3236 = vpop.f32.mrb[0].mxu0
    %3237 = vdwg.mxu0
    %v3238 = vld [vmem:[%s9] sm:$0xff]
    %v3239 = vld [vmem:[%s9 + $0x8] sm:$0xff]
    %v3240 = vld [vmem:[%s9 + $0x10] sm:$0xff]
    %v3241 = vld [vmem:[%s9 + $0x18] sm:$0xff]
    %v3244 = vsel %vm3089, %v3072, %v3071
    %v3245 = vsel %vm66, %v3244, 0
    %3247 = vmatprep.subr.mxu0 0.0
    %3248 = vmatpush1.msra.mxu0 %v3238
    %3249 = vmatprep.subr.mxu0 0.0
    %3250 = vmatpush1.msra.mxu0 %v3239
    %3251 = vmatprep.subr.mxu0 0.0
    %3252 = vmatpush1.msra.mxu0 %v3240
    %3253 = vmatprep.subr.mxu0 0.0
    %3254 = vmatpush1.msra.mxu0 %v3241
    %3255 = vmatprep.subr.mxu0 0.0
    %3256 = vmatpush1.msra.mxu0 0.0
    %3257 = vmatprep.subr.mxu0 0.0
    %3258 = vmatpush1.msra.mxu0 0.0
    %3259 = vmatprep.subr.mxu0 0.0
    %3260 = vmatpush1.msra.mxu0 0.0
    %3261 = vmatprep.subr.mxu0 0.0
    %3262 = vmatpush1.msra.mxu0 0.0
    %3263 = vmatprep.subr.mxu0 0.0
    %3264 = vmatpush1.msra.mxu0 0.0
    %3265 = vmatprep.subr.mxu0 0.0
    %3266 = vmatpush1.msra.mxu0 0.0
    %3267 = vmatprep.subr.mxu0 0.0
    %3268 = vmatpush1.msra.mxu0 0.0
    %3269 = vmatprep.subr.mxu0 0.0
    %3270 = vmatpush1.msra.mxu0 0.0
    %3271 = vmatprep.subr.mxu0 0.0
    %3272 = vmatpush1.msra.mxu0 0.0
    %3273 = vmatprep.subr.mxu0 0.0
    %3274 = vmatpush1.msra.mxu0 0.0
    %3275 = vmatprep.subr.mxu0 0.0
    %3276 = vmatpush1.msra.mxu0 0.0
    %3277 = vmatprep.subr.mxu0 0.0
    %3278 = vmatpush1.msra.mxu0 0.0
    %3279 = vmatprep.subr.mxu0 0.0
    %3280 = vmatpush1.msra.mxu0 0.0
    %3281 = vmatprep.subr.mxu0 0.0
    %3282 = vmatpush1.msra.mxu0 0.0
    %3283 = vmatprep.subr.mxu0 0.0
    %3284 = vmatpush1.msra.mxu0 0.0
    %3285 = vmatprep.subr.mxu0 0.0
    %3286 = vmatpush1.msra.mxu0 0.0
    %3287 = vmatprep.subr.mxu0 0.0
    %3288 = vmatpush1.msra.mxu0 0.0
    %3289 = vmatprep.subr.mxu0 0.0
    %3290 = vmatpush1.msra.mxu0 0.0
    %3291 = vmatprep.subr.mxu0 0.0
    %3292 = vmatpush1.msra.mxu0 0.0
    %3293 = vmatprep.subr.mxu0 0.0
    %3294 = vmatpush1.msra.mxu0 0.0
    %3295 = vmatprep.subr.mxu0 0.0
    %3296 = vmatpush1.msra.mxu0 0.0
    %3297 = vmatprep.subr.mxu0 0.0
    %3298 = vmatpush1.msra.mxu0 0.0
    %3299 = vmatprep.subr.mxu0 0.0
    %3300 = vmatpush1.msra.mxu0 0.0
    %3301 = vmatprep.subr.mxu0 0.0
    %3302 = vmatpush1.msra.mxu0 0.0
    %3303 = vmatprep.subr.mxu0 0.0
    %3304 = vmatpush1.msra.mxu0 0.0
    %3305 = vmatprep.subr.mxu0 0.0
    %3306 = vmatpush1.msra.mxu0 0.0
    %3307 = vmatprep.subr.mxu0 0.0
    %3308 = vmatpush1.msra.mxu0 0.0
    %3309 = vmatprep.subr.mxu0 0.0
    %3310 = vmatpush1.msra.mxu0 0.0
    %3311 = vmatprep.mubr.f32.mxu0 0.0
    %3312 = vmatmul.mubr.f32.gmra.mrb[0].mxu0 %v3245
    %v3313 = vpop.f32.mrb[0].mxu0
    %v3314 = vadd.f32 0.0, %v3313
    %v3315 = vpop.f32.mrb[0].mxu0
    %3316 = vdwg.mxu0
    %v3317 = vadd.f32 %v3235, %v3314
    %v3318 = vld [vmem:[%s10] sm:$0x1]
    %v3320 = vlaneseq
    %v3321 = vshrl.u32 %v3320, 7
    %v3322 = vsub.s32 0, %v3321
    %v3323 = vrot.slane %v3318, %v3322
    %v3325 = vadd.f32 %v3317, %v3323
    %vm3326 = vcmask 74752
    %3327 = vst.msk [vmem:[#allocation4] sm:$0x3] %vm3326, %v3325
    // Predicated region
    $region46: #{tpu_custom_call.1} parent=1 // pred_check
      _
    $region47: #{tpu_custom_call.1} parent=1 // pred_check_branch
      %3329 = sbr.rel (0) target = $region49
    $region48: #{tpu_custom_call.1} parent=1 // pred_region
      %s3331 = ssub.s32 32, 32
      %3332 = vsyncadd [#allocation5], %s3331
      %s3334 = sshll.u32 [#allocation4], 4
      %s3335 = int_to_ptr.vmem [resolvable:$true] %s3334
      %3337 = dma.vmem_to_hbm [thread:$0]  %s3335, 32, %s11, [#allocation5]
    $region49: #{tpu_custom_call.1} parent=1 // pred_fallthru
      _
    // Predicated region
    $region50: #{tpu_custom_call.1} parent=1 // pred_check
      _
    $region51: #{tpu_custom_call.1} parent=1 // pred_check_branch
      %3339 = sbr.rel (0) target = $region53
    $region52: #{tpu_custom_call.1} parent=1 // pred_region
      %3340 = dma.done [#allocation5], 32
    $region53: #{tpu_custom_call.1} parent=1 // pred_fallthru
      _
    %3341 = vsyncpa [#allocation5], 1

</llo_original>
